<compile_context>
chip_gen: v6e
topology: v6e:2x2x1
jax: 0.10.0
libtpu: 0.0.40
codegen_flags: <defaults>
</compile_context>

<pallas_src>
import functools

import jax
import jax.numpy as jnp
from jax.experimental import pallas as pl
from jax.experimental.pallas import tpu as pltpu

EPS = 1e-5


# ---------------------------------------------------------------------------
# Pallas kernel: one batch element per grid step.
#   reflect-pad(x) -> conv3x3 -> IN -> ReLU -> reflect-pad(h1) -> conv3x3 -> IN
#   -> residual add -> StyleMod
# ---------------------------------------------------------------------------
def _resnet_block_kernel(x_ref, w1_ref, w2_ref, scale_ref, shift_ref,
                         o_ref, pad_ref, *, H, W):
    """Shapes (per grid step):
      x_ref     : (1, H, W, C)   f32   unpadded NHWC image
      w1_ref    : (3, 3*C, C)    bf16  conv1 taps grouped by dy (dx-major rows)
      w2_ref    : (3, 3*C, C)    bf16  conv2 taps
      scale_ref : (1, 1, C)      f32   precomputed StyleMod scale (style0 + 1)
      shift_ref : (1, 1, C)      f32   precomputed StyleMod shift (style1)
      o_ref     : (1, H, W, C)   f32
      pad_ref   : (H+2, W+2, C)  bf16  VMEM scratch, reused for pad(x) / pad(h1)
    """
    C = o_ref.shape[-1]
    HW = H * W
    inv_hw = 1.0 / float(HW)

    def reflect_pad_into_scratch(img):
        # img: (H, W, C) bf16 -> pad_ref holds the 1-px reflect-padded image.
        pad_ref[1:H + 1, 1:W + 1, :] = img                        # interior
        pad_ref[0:1, 1:W + 1, :] = img[1:2]                       # top row
        pad_ref[H + 1:H + 2, 1:W + 1, :] = img[H - 2:H - 1]       # bottom row
        pad_ref[:, 0:1, :] = pad_ref[:, 2:3, :]                   # left  (+corners)
        pad_ref[:, W + 1:W + 2, :] = pad_ref[:, W - 1:W, :]       # right (+corners)

    def conv3x3(w_ref):
        # 3 dy-grouped MXU matmuls, contraction K = 3*C over (dx, c_in).
        # No bias: it is exactly cancelled by the affine-free InstanceNorm.
        acc = None
        for dy in range(3):
            rows = pad_ref[dy:dy + H, :, :]                       # (H, W+2, C) bf16
            patch = jnp.concatenate(
                [rows[:, dx:dx + W, :] for dx in range(3)], axis=-1)  # (H, W, 3C)
            part = jnp.dot(patch.reshape(HW, 3 * C), w_ref[dy],
                           preferred_element_type=jnp.float32)
            acc = part if acc is None else acc + part
        return acc                                                # (HW, C) f32

    def instance_norm(h):
        # Two-pass (numerically stable) biased variance; affine=False, eps=1e-5.
        mean = jnp.sum(h, axis=0, keepdims=True) * inv_hw
        centered = h - mean
        var = jnp.sum(centered * centered, axis=0, keepdims=True) * inv_hw
        return centered * jax.lax.rsqrt(var + EPS)

    x = x_ref[0]                                                  # (H, W, C) f32

    # ---- conv1 -> InstanceNorm -> ReLU -------------------------------------
    reflect_pad_into_scratch(x.astype(jnp.bfloat16))
    h1 = jnp.maximum(instance_norm(conv3x3(w1_ref)), 0.0)         # (HW, C) f32

    # ---- conv2 -> InstanceNorm (intermediate never leaves VMEM) ------------
    reflect_pad_into_scratch(h1.astype(jnp.bfloat16).reshape(H, W, C))
    h2 = instance_norm(conv3x3(w2_ref))                           # (HW, C) f32

    # ---- residual + StyleMod in a single elementwise pass ------------------
    out = (x.reshape(HW, C) + h2) * scale_ref[0] + shift_ref[0]
    o_ref[0] = out.reshape(H, W, C).astype(o_ref.dtype)


# ---------------------------------------------------------------------------
# Wrapper: parameter reshaping, hoisted StyleMod linear, pallas_call plumbing.
# ---------------------------------------------------------------------------
def _w_to_dy_taps(Wc):
    # (O, Cin, 3, 3) -> (3, 3*Cin, O), rows ordered dx-major / cin-minor,
    # matching the in-kernel concat([dx=0, dx=1, dx=2], axis=-1) patch layout.
    out_ch, in_ch = Wc.shape[0], Wc.shape[1]
    taps = jnp.transpose(Wc, (2, 3, 1, 0)).reshape(3, 3 * in_ch, out_ch)
    return taps.astype(jnp.bfloat16)


def resnet_block_forward(x_nchw, latent, params):
    """out = x + conv_block(x); out = StyleMod(out, latent).  x is NCHW f32."""
    N, C, H, W = x_nchw.shape
    assert min(H, W) >= 2, "reflect pad of 1 needs spatial dims >= 2"
    assert W % 8 == 0, "in-kernel (H,W,C)<->(HW,C) merges require W % 8 == 0"

    x_nhwc = jnp.transpose(x_nchw, (0, 2, 3, 1)).astype(jnp.float32)

    w1 = _w_to_dy_taps(params["W1"].astype(jnp.float32))
    w2 = _w_to_dy_taps(params["W2"].astype(jnp.float32))
    # Conv biases intentionally dropped (cancelled by affine-free InstanceNorm).

    # StyleMod's EqualizedLinear hoisted out of the kernel (tiny M=1 matmul):
    #   style = latent @ (Ws * w_mul)^T + bs * b_mul
    #   scale = style[:, :C] + 1 ; shift = style[:, C:]
    style = (latent.astype(jnp.float32)
             @ (params["Ws"] * params["style_w_mul"]).T.astype(jnp.float32)
             + params["bs"].astype(jnp.float32) * params["style_b_mul"])
    scale = (style[:, :C] + 1.0)[:, None, :]      # (N, 1, C)
    shift = style[:, C:][:, None, :]              # (N, 1, C)

    Hp, Wp = H + 2, W + 2
    HW = H * W

    # Explicit VMEM budget from actual block / scratch / temporary sizes.
    f32b, bf16b = 4, 2
    block_bytes = (
        2 * HW * C * f32b            # x block   (double-buffered)
        + 2 * HW * C * f32b          # out block (double-buffered)
        + 2 * (3 * 3 * C * C) * bf16b  # w1 + w2  (single-buffered)
        + 4 * C * f32b               # scale/shift (double-buffered)
        + Hp * Wp * C * bf16b        # reused pad scratch
        + HW * 3 * C * bf16b         # dy patch temporary
        + 3 * HW * C * f32b          # h1/h2/acc temporaries
    )
    vmem_limit = int(min(64 * 1024 * 1024,
                         max(16 * 1024 * 1024, 2 * block_bytes + (4 << 20))))

    kernel = functools.partial(_resnet_block_kernel, H=H, W=W)

    out_nhwc = pl.pallas_call(
        kernel,
        out_shape=jax.ShapeDtypeStruct((N, H, W, C), jnp.float32),
        grid=(N,),
        in_specs=[
            pl.BlockSpec((1, H, W, C), lambda n: (n, 0, 0, 0)),          # x
            pl.BlockSpec((3, 3 * C, C), lambda n: (0, 0, 0),
                         pipeline_mode=pl.Buffered(1)),                  # W1 taps
            pl.BlockSpec((3, 3 * C, C), lambda n: (0, 0, 0),
                         pipeline_mode=pl.Buffered(1)),                  # W2 taps
            pl.BlockSpec((1, 1, C), lambda n: (n, 0, 0)),                # scale
            pl.BlockSpec((1, 1, C), lambda n: (n, 0, 0)),                # shift
        ],
        out_specs=pl.BlockSpec((1, H, W, C), lambda n: (n, 0, 0, 0)),
        scratch_shapes=[pltpu.VMEM((Hp, Wp, C), jnp.bfloat16)],
        compiler_params=pltpu.CompilerParams(
            dimension_semantics=("parallel",),
            vmem_limit_bytes=vmem_limit),
    )(x_nhwc, w1, w2, scale, shift)

    return jnp.transpose(out_nhwc, (0, 3, 1, 2))


# ---------------------------------------------------------------------------
# Pure-JAX reference (correctness check only).
# Mirrors the PyTorch module exactly; conv inputs/weights are cast to bf16 to
# match the kernel's bf16 MXU staging (f32 accumulation everywhere).
# ---------------------------------------------------------------------------
def _reference(x, latent, params):
    def conv(h, Wc, b):
        hp = jnp.pad(h, ((0, 0), (0, 0), (1, 1), (1, 1)), mode="reflect")
        y = jax.lax.conv_general_dilated(
            hp.astype(jnp.bfloat16), Wc.astype(jnp.bfloat16), (1, 1), "VALID",
            dimension_numbers=("NCHW", "OIHW", "NCHW"),
            preferred_element_type=jnp.float32)
        return y + b[None, :, None, None]

    def inorm(h):
        m = h.mean(axis=(2, 3), keepdims=True)
        v = ((h - m) ** 2).mean(axis=(2, 3), keepdims=True)
        return (h - m) * jax.lax.rsqrt(v + EPS)

    h = jax.nn.relu(inorm(conv(x, params["W1"], params["b1"])))
    h = inorm(conv(h, params["W2"], params["b2"]))
    out = x + h

    style = (latent @ (params["Ws"] * params["style_w_mul"]).T
             + params["bs"] * params["style_b_mul"])
    C = x.shape[1]
    style = style.reshape(-1, 2, C, 1, 1)
    return out * (style[:, 0] + 1.0) + style[:, 1]


# ---------------------------------------------------------------------------
if __name__ == "__main__":
    key = jax.random.PRNGKey(0)
    N, C, H, W = 2, 4, 16, 16
    DLATENT = 512

    k = jax.random.split(key, 7)
    x = jax.random.normal(k[0], (N, C, H, W), jnp.float32)
    latent = jax.random.normal(k[1], (N, DLATENT), jnp.float32)

    conv_std = 1.0 / (C * 9) ** 0.5
    params = {
        # Conv2d(dim, dim, 3) x 2  (biases kept in the reference; the kernel
        # drops them because affine-free InstanceNorm cancels them exactly)
        "W1": jax.random.normal(k[2], (C, C, 3, 3), jnp.float32) * conv_std,
        "b1": jax.random.normal(k[3], (C,), jnp.float32) * 0.1,
        "W2": jax.random.normal(k[4], (C, C, 3, 3), jnp.float32) * conv_std,
        "b2": jax.random.normal(k[5], (C,), jnp.float32) * 0.1,
        # EqualizedLinear(dlatent, 2*dim, gain=1.0, use_wscale=True, lrmul=1):
        #   weight ~ randn * (1/lrmul), w_mul = gain * dlatent^-0.5, bias = 0
        "Ws": jax.random.normal(k[6], (2 * C, DLATENT), jnp.float32),
        "bs": jnp.zeros((2 * C,), jnp.float32),
        "style_w_mul": 1.0 * DLATENT ** (-0.5),
        "style_b_mul": 1.0,
    }

    out = jax.block_until_ready(resnet_block_forward(x, latent, params))
    ref = jax.block_until_ready(_reference(x, latent, params))

    assert out.shape == (N, C, H, W)
    err = float(jnp.max(jnp.abs(out - ref)))
    assert err < 5e-3, f"mismatch vs reference: max |err| = {err}"

    print("KERNEL_OK")
</pallas_src>

<mosaic_0001>
module attributes {stable_mosaic.version = 11 : i64} {
  func.func @_resnet_block_kernel(%arg0: i32, %arg1: memref<1x16x16x4xf32, #tpu.memory_space<vmem>>, %arg2: memref<3x12x4xbf16, #tpu.memory_space<vmem>>, %arg3: memref<3x12x4xbf16, #tpu.memory_space<vmem>>, %arg4: memref<1x1x4xf32, #tpu.memory_space<vmem>>, %arg5: memref<1x1x4xf32, #tpu.memory_space<vmem>>, %arg6: memref<1x16x16x4xf32, #tpu.memory_space<vmem>>, %arg7: memref<18x18x4xbf16, #tpu.memory_space<vmem>>) attributes {dimension_semantics = [#tpu.dimension_semantics<parallel>], iteration_bounds = array<i64: 2>, scalar_prefetch = 0 : i64, scratch_operands = 1 : i64, tpu.core_type = #tpu.core_type<tc>, window_params = [{transform_indices = @transform_0, window_bounds = array<i64: 1, 16, 16, 4>}, {pipeline_mode = #tpu.pipeline_mode<synchronous>, transform_indices = @transform_1, window_bounds = array<i64: 3, 12, 4>}, {pipeline_mode = #tpu.pipeline_mode<synchronous>, transform_indices = @transform_2, window_bounds = array<i64: 3, 12, 4>}, {transform_indices = @transform_3, window_bounds = array<i64: 1, 1, 4>}, {transform_indices = @transform_4, window_bounds = array<i64: 1, 1, 4>}, {transform_indices = @transform_5, window_bounds = array<i64: 1, 16, 16, 4>}]} {
    %c0 = arith.constant 0 : index
    %c0_0 = arith.constant 0 : index
    %c0_1 = arith.constant 0 : index
    %c0_2 = arith.constant 0 : index
    %0 = vector.load %arg1[%c0, %c0_0, %c0_1, %c0_2] : memref<1x16x16x4xf32, #tpu.memory_space<vmem>>, vector<1x16x16x4xf32>
    %1 = vector.shape_cast %0 : vector<1x16x16x4xf32> to vector<16x16x4xf32>
    %2 = arith.truncf %1 : vector<16x16x4xf32> to vector<16x16x4xbf16>
    %c1 = arith.constant 1 : index
    %c1_3 = arith.constant 1 : index
    %c0_4 = arith.constant 0 : index
    %3 = vector.load %arg7[%c1, %c1_3, %c0_4] : memref<18x18x4xbf16, #tpu.memory_space<vmem>>, vector<16x16x4xbf16>
    tpu.vector_store %arg7[%c1, %c1_3, %c0_4], %2 {strides = array<i32>} : memref<18x18x4xbf16, #tpu.memory_space<vmem>>, vector<16x16x4xbf16>,
    %4 = vector.extract_strided_slice %2 {offsets = [1, 0, 0], sizes = [1, 16, 4], strides = [1, 1, 1]} : vector<16x16x4xbf16> to vector<1x16x4xbf16>
    %c0_5 = arith.constant 0 : index
    %c1_6 = arith.constant 1 : index
    %c0_7 = arith.constant 0 : index
    %5 = vector.load %arg7[%c0_5, %c1_6, %c0_7] : memref<18x18x4xbf16, #tpu.memory_space<vmem>>, vector<1x16x4xbf16>
    tpu.vector_store %arg7[%c0_5, %c1_6, %c0_7], %4 {strides = array<i32>} : memref<18x18x4xbf16, #tpu.memory_space<vmem>>, vector<1x16x4xbf16>,
    %6 = vector.extract_strided_slice %2 {offsets = [14, 0, 0], sizes = [1, 16, 4], strides = [1, 1, 1]} : vector<16x16x4xbf16> to vector<1x16x4xbf16>
    %c17 = arith.constant 17 : index
    %c1_8 = arith.constant 1 : index
    %c0_9 = arith.constant 0 : index
    %7 = vector.load %arg7[%c17, %c1_8, %c0_9] : memref<18x18x4xbf16, #tpu.memory_space<vmem>>, vector<1x16x4xbf16>
    tpu.vector_store %arg7[%c17, %c1_8, %c0_9], %6 {strides = array<i32>} : memref<18x18x4xbf16, #tpu.memory_space<vmem>>, vector<1x16x4xbf16>,
    %c0_10 = arith.constant 0 : index
    %c2 = arith.constant 2 : index
    %c0_11 = arith.constant 0 : index
    %8 = vector.load %arg7[%c0_10, %c2, %c0_11] : memref<18x18x4xbf16, #tpu.memory_space<vmem>>, vector<18x1x4xbf16>
    %c0_12 = arith.constant 0 : index
    %c0_13 = arith.constant 0 : index
    %c0_14 = arith.constant 0 : index
    %9 = vector.load %arg7[%c0_12, %c0_13, %c0_14] : memref<18x18x4xbf16, #tpu.memory_space<vmem>>, vector<18x1x4xbf16>
    tpu.vector_store %arg7[%c0_12, %c0_13, %c0_14], %8 {strides = array<i32>} : memref<18x18x4xbf16, #tpu.memory_space<vmem>>, vector<18x1x4xbf16>,
    %c0_15 = arith.constant 0 : index
    %c15 = arith.constant 15 : index
    %c0_16 = arith.constant 0 : index
    %10 = vector.load %arg7[%c0_15, %c15, %c0_16] : memref<18x18x4xbf16, #tpu.memory_space<vmem>>, vector<18x1x4xbf16>
    %c0_17 = arith.constant 0 : index
    %c17_18 = arith.constant 17 : index
    %c0_19 = arith.constant 0 : index
    %11 = vector.load %arg7[%c0_17, %c17_18, %c0_19] : memref<18x18x4xbf16, #tpu.memory_space<vmem>>, vector<18x1x4xbf16>
    tpu.vector_store %arg7[%c0_17, %c17_18, %c0_19], %10 {strides = array<i32>} : memref<18x18x4xbf16, #tpu.memory_space<vmem>>, vector<18x1x4xbf16>,
    %c0_20 = arith.constant 0 : index
    %c0_21 = arith.constant 0 : index
    %c0_22 = arith.constant 0 : index
    %12 = vector.load %arg7[%c0_20, %c0_21, %c0_22] : memref<18x18x4xbf16, #tpu.memory_space<vmem>>, vector<16x18x4xbf16>
    %13 = vector.extract_strided_slice %12 {offsets = [0, 0, 0], sizes = [16, 16, 4], strides = [1, 1, 1]} : vector<16x18x4xbf16> to vector<16x16x4xbf16>
    %14 = vector.extract_strided_slice %12 {offsets = [0, 1, 0], sizes = [16, 16, 4], strides = [1, 1, 1]} : vector<16x18x4xbf16> to vector<16x16x4xbf16>
    %15 = vector.extract_strided_slice %12 {offsets = [0, 2, 0], sizes = [16, 16, 4], strides = [1, 1, 1]} : vector<16x18x4xbf16> to vector<16x16x4xbf16>
    %16 = tpu.concatenate %13, %14, %15 in 2 : vector<16x16x4xbf16>, vector<16x16x4xbf16>, vector<16x16x4xbf16> -> vector<16x16x12xbf16>
    %17 = vector.shape_cast %16 : vector<16x16x12xbf16> to vector<256x12xbf16>
    %c0_23 = arith.constant 0 : index
    %c0_24 = arith.constant 0 : index
    %c0_25 = arith.constant 0 : index
    %18 = vector.load %arg2[%c0_23, %c0_24, %c0_25] : memref<3x12x4xbf16, #tpu.memory_space<vmem>>, vector<1x12x4xbf16>
    %19 = vector.shape_cast %18 : vector<1x12x4xbf16> to vector<12x4xbf16>
    %cst = arith.constant dense<0.000000e+00> : vector<256x4xf32>
    %20 = tpu.matmul %17, %19, %cst {dimension_numbers = #tpu.dot_dimension_numbers<[1], [0], [0], [1], [0, 0, 1, 1], [], []>} : vector<256x12xbf16>, vector<12x4xbf16>, vector<256x4xf32> -> vector<256x4xf32>
    %c1_26 = arith.constant 1 : index
    %c0_27 = arith.constant 0 : index
    %c0_28 = arith.constant 0 : index
    %21 = vector.load %arg7[%c1_26, %c0_27, %c0_28] : memref<18x18x4xbf16, #tpu.memory_space<vmem>>, vector<16x18x4xbf16>
    %22 = vector.extract_strided_slice %21 {offsets = [0, 0, 0], sizes = [16, 16, 4], strides = [1, 1, 1]} : vector<16x18x4xbf16> to vector<16x16x4xbf16>
    %23 = vector.extract_strided_slice %21 {offsets = [0, 1, 0], sizes = [16, 16, 4], strides = [1, 1, 1]} : vector<16x18x4xbf16> to vector<16x16x4xbf16>
    %24 = vector.extract_strided_slice %21 {offsets = [0, 2, 0], sizes = [16, 16, 4], strides = [1, 1, 1]} : vector<16x18x4xbf16> to vector<16x16x4xbf16>
    %25 = tpu.concatenate %22, %23, %24 in 2 : vector<16x16x4xbf16>, vector<16x16x4xbf16>, vector<16x16x4xbf16> -> vector<16x16x12xbf16>
    %26 = vector.shape_cast %25 : vector<16x16x12xbf16> to vector<256x12xbf16>
    %c1_29 = arith.constant 1 : index
    %c0_30 = arith.constant 0 : index
    %c0_31 = arith.constant 0 : index
    %27 = vector.load %arg2[%c1_29, %c0_30, %c0_31] : memref<3x12x4xbf16, #tpu.memory_space<vmem>>, vector<1x12x4xbf16>
    %28 = vector.shape_cast %27 : vector<1x12x4xbf16> to vector<12x4xbf16>
    %cst_32 = arith.constant dense<0.000000e+00> : vector<256x4xf32>
    %29 = tpu.matmul %26, %28, %cst_32 {dimension_numbers = #tpu.dot_dimension_numbers<[1], [0], [0], [1], [0, 0, 1, 1], [], []>} : vector<256x12xbf16>, vector<12x4xbf16>, vector<256x4xf32> -> vector<256x4xf32>
    %30 = arith.addf %20, %29 : vector<256x4xf32>
    %c2_33 = arith.constant 2 : index
    %c0_34 = arith.constant 0 : index
    %c0_35 = arith.constant 0 : index
    %31 = vector.load %arg7[%c2_33, %c0_34, %c0_35] : memref<18x18x4xbf16, #tpu.memory_space<vmem>>, vector<16x18x4xbf16>
    %32 = vector.extract_strided_slice %31 {offsets = [0, 0, 0], sizes = [16, 16, 4], strides = [1, 1, 1]} : vector<16x18x4xbf16> to vector<16x16x4xbf16>
    %33 = vector.extract_strided_slice %31 {offsets = [0, 1, 0], sizes = [16, 16, 4], strides = [1, 1, 1]} : vector<16x18x4xbf16> to vector<16x16x4xbf16>
    %34 = vector.extract_strided_slice %31 {offsets = [0, 2, 0], sizes = [16, 16, 4], strides = [1, 1, 1]} : vector<16x18x4xbf16> to vector<16x16x4xbf16>
    %35 = tpu.concatenate %32, %33, %34 in 2 : vector<16x16x4xbf16>, vector<16x16x4xbf16>, vector<16x16x4xbf16> -> vector<16x16x12xbf16>
    %36 = vector.shape_cast %35 : vector<16x16x12xbf16> to vector<256x12xbf16>
    %c2_36 = arith.constant 2 : index
    %c0_37 = arith.constant 0 : index
    %c0_38 = arith.constant 0 : index
    %37 = vector.load %arg2[%c2_36, %c0_37, %c0_38] : memref<3x12x4xbf16, #tpu.memory_space<vmem>>, vector<1x12x4xbf16>
    %38 = vector.shape_cast %37 : vector<1x12x4xbf16> to vector<12x4xbf16>
    %cst_39 = arith.constant dense<0.000000e+00> : vector<256x4xf32>
    %39 = tpu.matmul %36, %38, %cst_39 {dimension_numbers = #tpu.dot_dimension_numbers<[1], [0], [0], [1], [0, 0, 1, 1], [], []>} : vector<256x12xbf16>, vector<12x4xbf16>, vector<256x4xf32> -> vector<256x4xf32>
    %40 = arith.addf %30, %39 : vector<256x4xf32>
    %cst_40 = arith.constant dense<0.000000e+00> : vector<4xf32>
    %41 = vector.multi_reduction <add>, %40, %cst_40 [0] : vector<256x4xf32> to vector<4xf32>
    %42 = vector.shape_cast %41 : vector<4xf32> to vector<1x4xf32>
    %cst_41 = arith.constant 3.906250e-03 : f32
    %43 = vector.broadcast %cst_41 : f32 to vector<1x4xf32>
    %44 = arith.mulf %42, %43 : vector<1x4xf32>
    %45 = vector.broadcast %44 : vector<1x4xf32> to vector<256x4xf32>
    %46 = arith.subf %40, %45 : vector<256x4xf32>
    %47 = arith.mulf %46, %46 : vector<256x4xf32>
    %cst_42 = arith.constant dense<0.000000e+00> : vector<4xf32>
    %48 = vector.multi_reduction <add>, %47, %cst_42 [0] : vector<256x4xf32> to vector<4xf32>
    %49 = vector.shape_cast %48 : vector<4xf32> to vector<1x4xf32>
    %cst_43 = arith.constant 3.906250e-03 : f32
    %50 = vector.broadcast %cst_43 : f32 to vector<1x4xf32>
    %51 = arith.mulf %49, %50 : vector<1x4xf32>
    %cst_44 = arith.constant 9.99999974E-6 : f32
    %52 = vector.broadcast %cst_44 : f32 to vector<1x4xf32>
    %53 = arith.addf %51, %52 : vector<1x4xf32>
    %54 = math.rsqrt %53 : vector<1x4xf32>
    %55 = vector.broadcast %54 : vector<1x4xf32> to vector<256x4xf32>
    %56 = arith.mulf %46, %55 : vector<256x4xf32>
    %cst_45 = arith.constant 0.000000e+00 : f32
    %57 = vector.broadcast %cst_45 : f32 to vector<256x4xf32>
    %58 = arith.maximumf %56, %57 : vector<256x4xf32>
    %59 = arith.truncf %58 : vector<256x4xf32> to vector<256x4xbf16>
    %60 = vector.shape_cast %59 : vector<256x4xbf16> to vector<16x16x4xbf16>
    %c1_46 = arith.constant 1 : index
    %c1_47 = arith.constant 1 : index
    %c0_48 = arith.constant 0 : index
    %61 = vector.load %arg7[%c1_46, %c1_47, %c0_48] : memref<18x18x4xbf16, #tpu.memory_space<vmem>>, vector<16x16x4xbf16>
    tpu.vector_store %arg7[%c1_46, %c1_47, %c0_48], %60 {strides = array<i32>} : memref<18x18x4xbf16, #tpu.memory_space<vmem>>, vector<16x16x4xbf16>,
    %62 = vector.extract_strided_slice %60 {offsets = [1, 0, 0], sizes = [1, 16, 4], strides = [1, 1, 1]} : vector<16x16x4xbf16> to vector<1x16x4xbf16>
    %c0_49 = arith.constant 0 : index
    %c1_50 = arith.constant 1 : index
    %c0_51 = arith.constant 0 : index
    %63 = vector.load %arg7[%c0_49, %c1_50, %c0_51] : memref<18x18x4xbf16, #tpu.memory_space<vmem>>, vector<1x16x4xbf16>
    tpu.vector_store %arg7[%c0_49, %c1_50, %c0_51], %62 {strides = array<i32>} : memref<18x18x4xbf16, #tpu.memory_space<vmem>>, vector<1x16x4xbf16>,
    %64 = vector.extract_strided_slice %60 {offsets = [14, 0, 0], sizes = [1, 16, 4], strides = [1, 1, 1]} : vector<16x16x4xbf16> to vector<1x16x4xbf16>
    %c17_52 = arith.constant 17 : index
    %c1_53 = arith.constant 1 : index
    %c0_54 = arith.constant 0 : index
    %65 = vector.load %arg7[%c17_52, %c1_53, %c0_54] : memref<18x18x4xbf16, #tpu.memory_space<vmem>>, vector<1x16x4xbf16>
    tpu.vector_store %arg7[%c17_52, %c1_53, %c0_54], %64 {strides = array<i32>} : memref<18x18x4xbf16, #tpu.memory_space<vmem>>, vector<1x16x4xbf16>,
    %c0_55 = arith.constant 0 : index
    %c2_56 = arith.constant 2 : index
    %c0_57 = arith.constant 0 : index
    %66 = vector.load %arg7[%c0_55, %c2_56, %c0_57] : memref<18x18x4xbf16, #tpu.memory_space<vmem>>, vector<18x1x4xbf16>
    %c0_58 = arith.constant 0 : index
    %c0_59 = arith.constant 0 : index
    %c0_60 = arith.constant 0 : index
    %67 = vector.load %arg7[%c0_58, %c0_59, %c0_60] : memref<18x18x4xbf16, #tpu.memory_space<vmem>>, vector<18x1x4xbf16>
    tpu.vector_store %arg7[%c0_58, %c0_59, %c0_60], %66 {strides = array<i32>} : memref<18x18x4xbf16, #tpu.memory_space<vmem>>, vector<18x1x4xbf16>,
    %c0_61 = arith.constant 0 : index
    %c15_62 = arith.constant 15 : index
    %c0_63 = arith.constant 0 : index
    %68 = vector.load %arg7[%c0_61, %c15_62, %c0_63] : memref<18x18x4xbf16, #tpu.memory_space<vmem>>, vector<18x1x4xbf16>
    %c0_64 = arith.constant 0 : index
    %c17_65 = arith.constant 17 : index
    %c0_66 = arith.constant 0 : index
    %69 = vector.load %arg7[%c0_64, %c17_65, %c0_66] : memref<18x18x4xbf16, #tpu.memory_space<vmem>>, vector<18x1x4xbf16>
    tpu.vector_store %arg7[%c0_64, %c17_65, %c0_66], %68 {strides = array<i32>} : memref<18x18x4xbf16, #tpu.memory_space<vmem>>, vector<18x1x4xbf16>,
    %c0_67 = arith.constant 0 : index
    %c0_68 = arith.constant 0 : index
    %c0_69 = arith.constant 0 : index
    %70 = vector.load %arg7[%c0_67, %c0_68, %c0_69] : memref<18x18x4xbf16, #tpu.memory_space<vmem>>, vector<16x18x4xbf16>
    %71 = vector.extract_strided_slice %70 {offsets = [0, 0, 0], sizes = [16, 16, 4], strides = [1, 1, 1]} : vector<16x18x4xbf16> to vector<16x16x4xbf16>
    %72 = vector.extract_strided_slice %70 {offsets = [0, 1, 0], sizes = [16, 16, 4], strides = [1, 1, 1]} : vector<16x18x4xbf16> to vector<16x16x4xbf16>
    %73 = vector.extract_strided_slice %70 {offsets = [0, 2, 0], sizes = [16, 16, 4], strides = [1, 1, 1]} : vector<16x18x4xbf16> to vector<16x16x4xbf16>
    %74 = tpu.concatenate %71, %72, %73 in 2 : vector<16x16x4xbf16>, vector<16x16x4xbf16>, vector<16x16x4xbf16> -> vector<16x16x12xbf16>
    %75 = vector.shape_cast %74 : vector<16x16x12xbf16> to vector<256x12xbf16>
    %c0_70 = arith.constant 0 : index
    %c0_71 = arith.constant 0 : index
    %c0_72 = arith.constant 0 : index
    %76 = vector.load %arg3[%c0_70, %c0_71, %c0_72] : memref<3x12x4xbf16, #tpu.memory_space<vmem>>, vector<1x12x4xbf16>
    %77 = vector.shape_cast %76 : vector<1x12x4xbf16> to vector<12x4xbf16>
    %cst_73 = arith.constant dense<0.000000e+00> : vector<256x4xf32>
    %78 = tpu.matmul %75, %77, %cst_73 {dimension_numbers = #tpu.dot_dimension_numbers<[1], [0], [0], [1], [0, 0, 1, 1], [], []>} : vector<256x12xbf16>, vector<12x4xbf16>, vector<256x4xf32> -> vector<256x4xf32>
    %c1_74 = arith.constant 1 : index
    %c0_75 = arith.constant 0 : index
    %c0_76 = arith.constant 0 : index
    %79 = vector.load %arg7[%c1_74, %c0_75, %c0_76] : memref<18x18x4xbf16, #tpu.memory_space<vmem>>, vector<16x18x4xbf16>
    %80 = vector.extract_strided_slice %79 {offsets = [0, 0, 0], sizes = [16, 16, 4], strides = [1, 1, 1]} : vector<16x18x4xbf16> to vector<16x16x4xbf16>
    %81 = vector.extract_strided_slice %79 {offsets = [0, 1, 0], sizes = [16, 16, 4], strides = [1, 1, 1]} : vector<16x18x4xbf16> to vector<16x16x4xbf16>
    %82 = vector.extract_strided_slice %79 {offsets = [0, 2, 0], sizes = [16, 16, 4], strides = [1, 1, 1]} : vector<16x18x4xbf16> to vector<16x16x4xbf16>
    %83 = tpu.concatenate %80, %81, %82 in 2 : vector<16x16x4xbf16>, vector<16x16x4xbf16>, vector<16x16x4xbf16> -> vector<16x16x12xbf16>
    %84 = vector.shape_cast %83 : vector<16x16x12xbf16> to vector<256x12xbf16>
    %c1_77 = arith.constant 1 : index
    %c0_78 = arith.constant 0 : index
    %c0_79 = arith.constant 0 : index
    %85 = vector.load %arg3[%c1_77, %c0_78, %c0_79] : memref<3x12x4xbf16, #tpu.memory_space<vmem>>, vector<1x12x4xbf16>
    %86 = vector.shape_cast %85 : vector<1x12x4xbf16> to vector<12x4xbf16>
    %cst_80 = arith.constant dense<0.000000e+00> : vector<256x4xf32>
    %87 = tpu.matmul %84, %86, %cst_80 {dimension_numbers = #tpu.dot_dimension_numbers<[1], [0], [0], [1], [0, 0, 1, 1], [], []>} : vector<256x12xbf16>, vector<12x4xbf16>, vector<256x4xf32> -> vector<256x4xf32>
    %88 = arith.addf %78, %87 : vector<256x4xf32>
    %c2_81 = arith.constant 2 : index
    %c0_82 = arith.constant 0 : index
    %c0_83 = arith.constant 0 : index
    %89 = vector.load %arg7[%c2_81, %c0_82, %c0_83] : memref<18x18x4xbf16, #tpu.memory_space<vmem>>, vector<16x18x4xbf16>
    %90 = vector.extract_strided_slice %89 {offsets = [0, 0, 0], sizes = [16, 16, 4], strides = [1, 1, 1]} : vector<16x18x4xbf16> to vector<16x16x4xbf16>
    %91 = vector.extract_strided_slice %89 {offsets = [0, 1, 0], sizes = [16, 16, 4], strides = [1, 1, 1]} : vector<16x18x4xbf16> to vector<16x16x4xbf16>
    %92 = vector.extract_strided_slice %89 {offsets = [0, 2, 0], sizes = [16, 16, 4], strides = [1, 1, 1]} : vector<16x18x4xbf16> to vector<16x16x4xbf16>
    %93 = tpu.concatenate %90, %91, %92 in 2 : vector<16x16x4xbf16>, vector<16x16x4xbf16>, vector<16x16x4xbf16> -> vector<16x16x12xbf16>
    %94 = vector.shape_cast %93 : vector<16x16x12xbf16> to vector<256x12xbf16>
    %c2_84 = arith.constant 2 : index
    %c0_85 = arith.constant 0 : index
    %c0_86 = arith.constant 0 : index
    %95 = vector.load %arg3[%c2_84, %c0_85, %c0_86] : memref<3x12x4xbf16, #tpu.memory_space<vmem>>, vector<1x12x4xbf16>
    %96 = vector.shape_cast %95 : vector<1x12x4xbf16> to vector<12x4xbf16>
    %cst_87 = arith.constant dense<0.000000e+00> : vector<256x4xf32>
    %97 = tpu.matmul %94, %96, %cst_87 {dimension_numbers = #tpu.dot_dimension_numbers<[1], [0], [0], [1], [0, 0, 1, 1], [], []>} : vector<256x12xbf16>, vector<12x4xbf16>, vector<256x4xf32> -> vector<256x4xf32>
    %98 = arith.addf %88, %97 : vector<256x4xf32>
    %cst_88 = arith.constant dense<0.000000e+00> : vector<4xf32>
    %99 = vector.multi_reduction <add>, %98, %cst_88 [0] : vector<256x4xf32> to vector<4xf32>
    %100 = vector.shape_cast %99 : vector<4xf32> to vector<1x4xf32>
    %cst_89 = arith.constant 3.906250e-03 : f32
    %101 = vector.broadcast %cst_89 : f32 to vector<1x4xf32>
    %102 = arith.mulf %100, %101 : vector<1x4xf32>
    %103 = vector.broadcast %102 : vector<1x4xf32> to vector<256x4xf32>
    %104 = arith.subf %98, %103 : vector<256x4xf32>
    %105 = arith.mulf %104, %104 : vector<256x4xf32>
    %cst_90 = arith.constant dense<0.000000e+00> : vector<4xf32>
    %106 = vector.multi_reduction <add>, %105, %cst_90 [0] : vector<256x4xf32> to vector<4xf32>
    %107 = vector.shape_cast %106 : vector<4xf32> to vector<1x4xf32>
    %cst_91 = arith.constant 3.906250e-03 : f32
    %108 = vector.broadcast %cst_91 : f32 to vector<1x4xf32>
    %109 = arith.mulf %107, %108 : vector<1x4xf32>
    %cst_92 = arith.constant 9.99999974E-6 : f32
    %110 = vector.broadcast %cst_92 : f32 to vector<1x4xf32>
    %111 = arith.addf %109, %110 : vector<1x4xf32>
    %112 = math.rsqrt %111 : vector<1x4xf32>
    %113 = vector.broadcast %112 : vector<1x4xf32> to vector<256x4xf32>
    %114 = arith.mulf %104, %113 : vector<256x4xf32>
    %115 = vector.shape_cast %1 : vector<16x16x4xf32> to vector<256x4xf32>
    %116 = arith.addf %115, %114 : vector<256x4xf32>
    %c0_93 = arith.constant 0 : index
    %c0_94 = arith.constant 0 : index
    %c0_95 = arith.constant 0 : index
    %117 = vector.load %arg4[%c0_93, %c0_94, %c0_95] : memref<1x1x4xf32, #tpu.memory_space<vmem>>, vector<1x1x4xf32>
    %118 = vector.shape_cast %117 : vector<1x1x4xf32> to vector<1x4xf32>
    %119 = vector.broadcast %118 : vector<1x4xf32> to vector<256x4xf32>
    %120 = arith.mulf %116, %119 : vector<256x4xf32>
    %c0_96 = arith.constant 0 : index
    %c0_97 = arith.constant 0 : index
    %c0_98 = arith.constant 0 : index
    %121 = vector.load %arg5[%c0_96, %c0_97, %c0_98] : memref<1x1x4xf32, #tpu.memory_space<vmem>>, vector<1x1x4xf32>
    %122 = vector.shape_cast %121 : vector<1x1x4xf32> to vector<1x4xf32>
    %123 = vector.broadcast %122 : vector<1x4xf32> to vector<256x4xf32>
    %124 = arith.addf %120, %123 : vector<256x4xf32>
    %125 = vector.shape_cast %124 : vector<256x4xf32> to vector<16x16x4xf32>
    %c0_99 = arith.constant 0 : index
    %c0_100 = arith.constant 0 : index
    %c0_101 = arith.constant 0 : index
    %c0_102 = arith.constant 0 : index
    %126 = vector.load %arg6[%c0_99, %c0_100, %c0_101, %c0_102] : memref<1x16x16x4xf32, #tpu.memory_space<vmem>>, vector<1x16x16x4xf32>
    %127 = vector.shape_cast %126 : vector<1x16x16x4xf32> to vector<16x16x4xf32>
    %128 = vector.shape_cast %125 : vector<16x16x4xf32> to vector<1x16x16x4xf32>
    tpu.vector_store %arg6[%c0_99, %c0_100, %c0_101, %c0_102], %128 {strides = array<i32>} : memref<1x16x16x4xf32, #tpu.memory_space<vmem>>, vector<1x16x16x4xf32>,
    return
  }
  func.func @transform_0(%arg0: i32) -> (i32, i32, i32, i32) {
    %c0_i32 = arith.constant 0 : i32
    %c0_i32_0 = arith.constant 0 : i32
    %c0_i32_1 = arith.constant 0 : i32
    %c0_i32_2 = arith.constant 0 : i32
    return %arg0, %c0_i32, %c0_i32_0, %c0_i32_1 : i32, i32, i32, i32
  }
  func.func @transform_1(%arg0: i32) -> (i32, i32, i32) {
    %c0_i32 = arith.constant 0 : i32
    %c0_i32_0 = arith.constant 0 : i32
    %c0_i32_1 = arith.constant 0 : i32
    %c0_i32_2 = arith.constant 0 : i32
    return %c0_i32, %c0_i32_0, %c0_i32_1 : i32, i32, i32
  }
  func.func @transform_2(%arg0: i32) -> (i32, i32, i32) {
    %c0_i32 = arith.constant 0 : i32
    %c0_i32_0 = arith.constant 0 : i32
    %c0_i32_1 = arith.constant 0 : i32
    %c0_i32_2 = arith.constant 0 : i32
    return %c0_i32, %c0_i32_0, %c0_i32_1 : i32, i32, i32
  }
  func.func @transform_3(%arg0: i32) -> (i32, i32, i32) {
    %c0_i32 = arith.constant 0 : i32
    %c0_i32_0 = arith.constant 0 : i32
    %c0_i32_1 = arith.constant 0 : i32
    return %arg0, %c0_i32, %c0_i32_0 : i32, i32, i32
  }
  func.func @transform_4(%arg0: i32) -> (i32, i32, i32) {
    %c0_i32 = arith.constant 0 : i32
    %c0_i32_0 = arith.constant 0 : i32
    %c0_i32_1 = arith.constant 0 : i32
    return %arg0, %c0_i32, %c0_i32_0 : i32, i32, i32
  }
  func.func @transform_5(%arg0: i32) -> (i32, i32, i32, i32) {
    %c0_i32 = arith.constant 0 : i32
    %c0_i32_0 = arith.constant 0 : i32
    %c0_i32_1 = arith.constant 0 : i32
    %c0_i32_2 = arith.constant 0 : i32
    return %arg0, %c0_i32, %c0_i32_0, %c0_i32_1 : i32, i32, i32, i32
  }
}

</mosaic_0001>

<llo_original>
// kernel: tpu_custom_call.1
$region0: #{tpu_custom_call.1}
  #allocation0 [shape = 'u32[]', space=smem, size = 0x4, offset = 0x4, fixed_abs, tag = 'smem constant byte address 0x4 - core index']
  #allocation1 [shape = 'u32[144,128]{1,0:T(1,128)}', space=vmem, size = 0x12000, scoped, tag = 'internal scratch']
  #allocation2 [shape = 'bf16[18,18,4]{2,1,0:T(8,128)(2,1)}', space=vmem, size = 0x1b000, scoped, tag = 'scratch operand']
  %s0 = inlined_call_operand.vmem [shape: f32[2,16,16,4], index: 0, kind: input, shape index: {}]
  %s1 = inlined_call_operand.vmem [shape: bf16[3,12,4], index: 1, kind: input, shape index: {}]
  %s2 = inlined_call_operand.vmem [shape: bf16[3,12,4], index: 2, kind: input, shape index: {}]
  %s3 = inlined_call_operand.vmem [shape: f32[2,1,4], index: 3, kind: input, shape index: {}]
  %s4 = inlined_call_operand.vmem [shape: f32[2,1,4], index: 4, kind: input, shape index: {}]
  %s5 = inlined_call_operand.vmem [shape: f32[2,16,16,4], index: 5, kind: output, shape index: {}]
  %s6 = sld [smem:[#allocation0]]
  $region53: #{tpu_custom_call.1} parent=0
    _
  %s8 = ssub.s32 1, %s6
  %s9 = scalar_select 0, %s8, %s6
  loop: start=0, step=1, limit=4
  $region2: #{tpu_custom_call.1} parent=0 // loop_pre_header
    _
  $region3: #{tpu_custom_call.1} parent=0 // loop_header
    %s11 = sphi 0, %s15
    %p12 = scmp.ge.s32.totalorder %s11, 4
    %s21 = sphi 0, %s23
    %s24 = sphi 0, %s21
    %s25 = sphi 0, %s24
    %s41 = sphi 0, %s25
    %s45 = sphi 0, %s45
    %s47 = sphi 0, %s45
    %s48 = sphi 0, %s47
    %s62 = sphi 0, %s48
    %s66 = sphi 0, %s66
    %s68 = sphi 0, %s66
    %s69 = sphi 0, %s68
    %s83 = sphi 0, %s69
    %s89 = sphi 0, %s91
    %s92 = sphi 0, %s89
    %s93 = sphi 0, %s92
    %s109 = sphi 0, %s93
    %s115 = sphi 0, %s117
    %s118 = sphi 0, %s115
    %s119 = sphi 0, %s118
    %s135 = sphi 0, %s119
    %s141 = sphi 0, %s143
    %s144 = sphi 0, %s141
    %s145 = sphi 0, %s144
    %s161 = sphi 0, %s145
  $region4: #{tpu_custom_call.1} parent=0 // loop_header_branch
    %14 = sbr.rel (%p12) target = $region8
  $region5: #{tpu_custom_call.1} parent=0 // loop_body
    %s16 = ssub.s32 %s11, 1
    %s17 = ssub.s32 %s11, 2
    %s18 = sadd.s32 %s11, 1
    %s19 = ssub.s32 %s11, %s18
    %p20 = scmp.eq.s32.totalorder %s19, 0
    %s22 = sadd.s32 %s21, 1
    %s23 = scalar_select %p20, %s21, %s22
    %p26 = pneg %p20
    %p27 = scmp.eq.s32.totalorder %s11, 1
    %p28 = por %p26, %p27
    %p29 = scmp.ne.s32.totalorder %s21, %s24
    %p30 = scmp.eq.s32.totalorder %s11, 0
    %p31 = por %p29, %p30
    %p32 = scmp.ne.s32.totalorder %s21, %s24
    %p33 = scmp.eq.s32.totalorder %s16, 1
    %p34 = por %p32, %p33
    %p35 = scmp.ne.s32.totalorder %s24, %s25
    %p36 = scmp.eq.s32.totalorder %s16, 0
    %p37 = por %p35, %p36
    %p38 = scmp.ne.s32.totalorder %s24, %s25
    %p39 = scmp.eq.s32.totalorder %s17, 1
    %p40 = por %p38, %p39
    %p42 = scmp.ne.s32.totalorder %s25, %s41
    %p43 = scmp.eq.s32.totalorder %s17, 0
    %p44 = por %p42, %p43
    %s46 = sadd.s32 %s45, 1
    %p49 = scmp.eq.s32.totalorder %s11, 1
    %p50 = scmp.ne.s32.totalorder %s45, %s47
    %p51 = scmp.eq.s32.totalorder %s11, 0
    %p52 = por %p50, %p51
    %p53 = scmp.ne.s32.totalorder %s45, %s47
    %p54 = scmp.eq.s32.totalorder %s16, 1
    %p55 = por %p53, %p54
    %p56 = scmp.ne.s32.totalorder %s47, %s48
    %p57 = scmp.eq.s32.totalorder %s16, 0
    %p58 = por %p56, %p57
    %p59 = scmp.ne.s32.totalorder %s47, %s48
    %p60 = scmp.eq.s32.totalorder %s17, 1
    %p61 = por %p59, %p60
    %p63 = scmp.ne.s32.totalorder %s48, %s62
    %p64 = scmp.eq.s32.totalorder %s17, 0
    %p65 = por %p63, %p64
    %s67 = sadd.s32 %s66, 1
    %p70 = scmp.eq.s32.totalorder %s11, 1
    %p71 = scmp.ne.s32.totalorder %s66, %s68
    %p72 = scmp.eq.s32.totalorder %s11, 0
    %p73 = por %p71, %p72
    %p74 = scmp.ne.s32.totalorder %s66, %s68
    %p75 = scmp.eq.s32.totalorder %s16, 1
    %p76 = por %p74, %p75
    %p77 = scmp.ne.s32.totalorder %s68, %s69
    %p78 = scmp.eq.s32.totalorder %s16, 0
    %p79 = por %p77, %p78
    %p80 = scmp.ne.s32.totalorder %s68, %s69
    %p81 = scmp.eq.s32.totalorder %s17, 1
    %p82 = por %p80, %p81
    %p84 = scmp.ne.s32.totalorder %s69, %s83
    %p85 = scmp.eq.s32.totalorder %s17, 0
    %p86 = por %p84, %p85
    %s87 = ssub.s32 %s11, %s18
    %p88 = scmp.eq.s32.totalorder %s87, 0
    %s90 = sadd.s32 %s89, 1
    %s91 = scalar_select %p88, %s89, %s90
    %p94 = pneg %p88
    %p95 = scmp.eq.s32.totalorder %s11, 1
    %p96 = por %p94, %p95
    %p97 = scmp.ne.s32.totalorder %s89, %s92
    %p98 = scmp.eq.s32.totalorder %s11, 0
    %p99 = por %p97, %p98
    %p100 = scmp.ne.s32.totalorder %s89, %s92
    %p101 = scmp.eq.s32.totalorder %s16, 1
    %p102 = por %p100, %p101
    %p103 = scmp.ne.s32.totalorder %s92, %s93
    %p104 = scmp.eq.s32.totalorder %s16, 0
    %p105 = por %p103, %p104
    %p106 = scmp.ne.s32.totalorder %s92, %s93
    %p107 = scmp.eq.s32.totalorder %s17, 1
    %p108 = por %p106, %p107
    %p110 = scmp.ne.s32.totalorder %s93, %s109
    %p111 = scmp.eq.s32.totalorder %s17, 0
    %p112 = por %p110, %p111
    %s113 = ssub.s32 %s11, %s18
    %p114 = scmp.eq.s32.totalorder %s113, 0
    %s116 = sadd.s32 %s115, 1
    %s117 = scalar_select %p114, %s115, %s116
    %p120 = pneg %p114
    %p121 = scmp.eq.s32.totalorder %s11, 1
    %p122 = por %p120, %p121
    %p123 = scmp.ne.s32.totalorder %s115, %s118
    %p124 = scmp.eq.s32.totalorder %s11, 0
    %p125 = por %p123, %p124
    %p126 = scmp.ne.s32.totalorder %s115, %s118
    %p127 = scmp.eq.s32.totalorder %s16, 1
    %p128 = por %p126, %p127
    %p129 = scmp.ne.s32.totalorder %s118, %s119
    %p130 = scmp.eq.s32.totalorder %s16, 0
    %p131 = por %p129, %p130
    %p132 = scmp.ne.s32.totalorder %s118, %s119
    %p133 = scmp.eq.s32.totalorder %s17, 1
    %p134 = por %p132, %p133
    %p136 = scmp.ne.s32.totalorder %s119, %s135
    %p137 = scmp.eq.s32.totalorder %s17, 0
    %p138 = por %p136, %p137
    %s139 = ssub.s32 %s11, %s18
    %p140 = scmp.eq.s32.totalorder %s139, 0
    %s142 = sadd.s32 %s141, 1
    %s143 = scalar_select %p140, %s141, %s142
    %p146 = pneg %p140
    %p147 = scmp.eq.s32.totalorder %s11, 1
    %p148 = por %p146, %p147
    %p149 = scmp.ne.s32.totalorder %s141, %s144
    %p150 = scmp.eq.s32.totalorder %s11, 0
    %p151 = por %p149, %p150
    %p152 = scmp.ne.s32.totalorder %s141, %s144
    %p153 = scmp.eq.s32.totalorder %s16, 1
    %p154 = por %p152, %p153
    %p155 = scmp.ne.s32.totalorder %s144, %s145
    %p156 = scmp.eq.s32.totalorder %s16, 0
    %p157 = por %p155, %p156
    %p158 = scmp.ne.s32.totalorder %s144, %s145
    %p159 = scmp.eq.s32.totalorder %s17, 1
    %p160 = por %p158, %p159
    %p162 = scmp.ne.s32.totalorder %s145, %s161
    %p163 = scmp.eq.s32.totalorder %s17, 0
    %p164 = por %p162, %p163
    %p165 = scmp.le.s32.totalorder 1, %s11
    %p166 = scmp.lt.s32.totalorder %s11, 3
    %p167 = pnand %p165, %p166
    %p168 = pneg %p167
    // Predicated region
    $region9: #{tpu_custom_call.1} parent=5 // pred_check
      _
    $region10: #{tpu_custom_call.1} parent=5 // pred_check_branch
      %170 = sbr.rel (%p167) target = $region12
    $region11: #{tpu_custom_call.1} parent=5 // pred_region
      %s171 = ssub.s32 %s11, 1
      // Predicated region
      $region13: #{tpu_custom_call.1} parent=11 // pred_check
        %p172 = pneg %p58
      $region14: #{tpu_custom_call.1} parent=11 // pred_check_branch
        %174 = sbr.rel (%p172) target = $region16
      $region15: #{tpu_custom_call.1} parent=11 // pred_region
        _
      $region16: #{tpu_custom_call.1} parent=11 // pred_fallthru
        _
      // Predicated region
      $region17: #{tpu_custom_call.1} parent=11 // pred_check
        %p175 = pneg %p79
      $region18: #{tpu_custom_call.1} parent=11 // pred_check_branch
        %177 = sbr.rel (%p175) target = $region20
      $region19: #{tpu_custom_call.1} parent=11 // pred_region
        _
      $region20: #{tpu_custom_call.1} parent=11 // pred_fallthru
        _
    $region12: #{tpu_custom_call.1} parent=5 // pred_fallthru
      _
    %p178 = scmp.lt.s32.totalorder %s11, 2
    // Predicated region
    $region21: #{tpu_custom_call.1} parent=5 // pred_check
      %p179 = pneg %p178
    $region22: #{tpu_custom_call.1} parent=5 // pred_check_branch
      %181 = sbr.rel (%p179) target = $region24
    $region23: #{tpu_custom_call.1} parent=5 // pred_region
      // Predicated region
      $region25: #{tpu_custom_call.1} parent=23 // pred_check
        %p182 = pneg %p31
      $region26: #{tpu_custom_call.1} parent=23 // pred_check_branch
        %184 = sbr.rel (%p182) target = $region28
      $region27: #{tpu_custom_call.1} parent=23 // pred_region
        %p185 = scmp.lt.s32.totalorder %s11, 1
        %s186 = scalar_select %p185, %s11, 1
        %s187 = smul.addr %s186, 32
        %s188 = smul.addr %s187, 8
        %s189 = scalar_lea.vmem %s0, %s188
      $region28: #{tpu_custom_call.1} parent=23 // pred_fallthru
        _
      // Predicated region
      $region29: #{tpu_custom_call.1} parent=23 // pred_check
        %p190 = pneg %p99
      $region30: #{tpu_custom_call.1} parent=23 // pred_check_branch
        %192 = sbr.rel (%p190) target = $region32
      $region31: #{tpu_custom_call.1} parent=23 // pred_region
        %p193 = scmp.lt.s32.totalorder %s11, 1
        %s194 = scalar_select %p193, %s11, 1
        %s195 = scalar_lea.vmem %s3, %s194
      $region32: #{tpu_custom_call.1} parent=23 // pred_fallthru
        _
      // Predicated region
      $region33: #{tpu_custom_call.1} parent=23 // pred_check
        %p196 = pneg %p125
      $region34: #{tpu_custom_call.1} parent=23 // pred_check_branch
        %198 = sbr.rel (%p196) target = $region36
      $region35: #{tpu_custom_call.1} parent=23 // pred_region
        %p199 = scmp.lt.s32.totalorder %s11, 1
        %s200 = scalar_select %p199, %s11, 1
        %s201 = scalar_lea.vmem %s4, %s200
      $region36: #{tpu_custom_call.1} parent=23 // pred_fallthru
        _
    $region24: #{tpu_custom_call.1} parent=5 // pred_fallthru
      _
    %p202 = scmp.le.s32.totalorder 1, %s11
    %p203 = scmp.lt.s32.totalorder %s11, 3
    %p204 = pnand %p202, %p203
    %p205 = pneg %p204
    // Predicated region
    $region37: #{tpu_custom_call.1} parent=5 // pred_check
      _
    $region38: #{tpu_custom_call.1} parent=5 // pred_check_branch
      %207 = sbr.rel (%p204) target = $region40
    $region39: #{tpu_custom_call.1} parent=5 // pred_region
      %s208 = ssub.s32 %s11, 1
      %p209 = scmp.lt.s32.totalorder %s16, 1
      %s210 = scalar_select %p209, %s16, 1
      %s211 = smul.addr %s210, 32
      %s212 = smul.addr %s211, 8
      %s213 = scalar_lea.vmem %s0, %s212
      %p214 = pneg %p37
      %p215 = pneg %p34
      %p216 = pneg %p58
      %p217 = pneg %p55
      %p218 = pneg %p79
      %p219 = pneg %p76
      %p220 = scmp.lt.s32.totalorder %s16, 1
      %s221 = scalar_select %p220, %s16, 1
      %s222 = scalar_lea.vmem %s3, %s221
      %p223 = pneg %p105
      %p224 = pneg %p102
      %p225 = scmp.lt.s32.totalorder %s16, 1
      %s226 = scalar_select %p225, %s16, 1
      %s227 = scalar_lea.vmem %s4, %s226
      %p228 = pneg %p131
      %p229 = pneg %p128
      %p230 = pneg %p157
      %p231 = pneg %p154
      %p232 = scmp.lt.s32.totalorder %s16, 1
      %s233 = scalar_select %p232, %s16, 1
      %s234 = smul.addr %s233, 32
      %s235 = smul.addr %s234, 8
      %s236 = scalar_lea.vmem %s5, %s235
      %p237 = scmp.lt.s32.totalorder %s16, 1
      %s238 = scalar_select %p237, %s16, 1
      %s239 = smul.addr %s238, 32
      %s240 = smul.addr %s239, 8
      %s241 = scalar_lea.vmem %s0, %s240
      %p242 = scmp.lt.s32.totalorder %s16, 1
      %s243 = scalar_select %p242, %s16, 1
      %s244 = scalar_lea.vmem %s3, %s243
      %p245 = scmp.lt.s32.totalorder %s16, 1
      %s246 = scalar_select %p245, %s16, 1
      %s247 = scalar_lea.vmem %s4, %s246
      %p248 = scmp.lt.s32.totalorder %s16, 1
      %s249 = scalar_select %p248, %s16, 1
      %s250 = smul.addr %s249, 32
      %s251 = smul.addr %s250, 8
      %s252 = scalar_lea.vmem %s5, %s251
      %v254 = vld [vmem:[%s241] sm:$0xff]
      %v255 = vld [vmem:[%s241 + $0x8] sm:$0xff]
      %v256 = vld [vmem:[%s241 + $0x10] sm:$0xff]
      %v257 = vld [vmem:[%s241 + $0x18] sm:$0xff]
      %v258 = vld [vmem:[%s241 + $0x20] sm:$0xff]
      %v259 = vld [vmem:[%s241 + $0x28] sm:$0xff]
      %v260 = vld [vmem:[%s241 + $0x30] sm:$0xff]
      %v261 = vld [vmem:[%s241 + $0x38] sm:$0xff]
      %v262 = vld [vmem:[%s241 + $0x40] sm:$0xff]
      %v263 = vld [vmem:[%s241 + $0x48] sm:$0xff]
      %v264 = vld [vmem:[%s241 + $0x50] sm:$0xff]
      %v265 = vld [vmem:[%s241 + $0x58] sm:$0xff]
      %v266 = vld [vmem:[%s241 + $0x60] sm:$0xff]
      %v267 = vld [vmem:[%s241 + $0x68] sm:$0xff]
      %v268 = vld [vmem:[%s241 + $0x70] sm:$0xff]
      %v269 = vld [vmem:[%s241 + $0x78] sm:$0xff]
      %v270 = vld [vmem:[%s241 + $0x80] sm:$0xff]
      %v271 = vld [vmem:[%s241 + $0x88] sm:$0xff]
      %v272 = vld [vmem:[%s241 + $0x90] sm:$0xff]
      %v273 = vld [vmem:[%s241 + $0x98] sm:$0xff]
      %v274 = vld [vmem:[%s241 + $0xa0] sm:$0xff]
      %v275 = vld [vmem:[%s241 + $0xa8] sm:$0xff]
      %v276 = vld [vmem:[%s241 + $0xb0] sm:$0xff]
      %v277 = vld [vmem:[%s241 + $0xb8] sm:$0xff]
      %v278 = vld [vmem:[%s241 + $0xc0] sm:$0xff]
      %v279 = vld [vmem:[%s241 + $0xc8] sm:$0xff]
      %v280 = vld [vmem:[%s241 + $0xd0] sm:$0xff]
      %v281 = vld [vmem:[%s241 + $0xd8] sm:$0xff]
      %v282 = vld [vmem:[%s241 + $0xe0] sm:$0xff]
      %v283 = vld [vmem:[%s241 + $0xe8] sm:$0xff]
      %v284 = vld [vmem:[%s241 + $0xf0] sm:$0xff]
      %v285 = vld [vmem:[%s241 + $0xf8] sm:$0xff]
      %v286 = vpack.c.bf16 %v255, %v254
      %v287 = vpack.c.bf16 %v257, %v256
      %v288 = vpack.c.bf16 %v259, %v258
      %v289 = vpack.c.bf16 %v261, %v260
      %v290 = vpack.c.bf16 %v263, %v262
      %v291 = vpack.c.bf16 %v265, %v264
      %v292 = vpack.c.bf16 %v267, %v266
      %v293 = vpack.c.bf16 %v269, %v268
      %v294 = vpack.c.bf16 %v271, %v270
      %v295 = vpack.c.bf16 %v273, %v272
      %v296 = vpack.c.bf16 %v275, %v274
      %v297 = vpack.c.bf16 %v277, %v276
      %v298 = vpack.c.bf16 %v279, %v278
      %v299 = vpack.c.bf16 %v281, %v280
      %v300 = vpack.c.bf16 %v283, %v282
      %v301 = vpack.c.bf16 %v285, %v284
      %v318 = vunpack.c.l.b16 %v286
      %v319 = vunpack.c.h.b16 %v286
      %v320 = vunpack.c.l.b16 %v287
      %v321 = vunpack.c.h.b16 %v287
      %v322 = vunpack.c.l.b16 %v288
      %v323 = vunpack.c.h.b16 %v288
      %v324 = vunpack.c.l.b16 %v289
      %v325 = vunpack.c.h.b16 %v289
      %v326 = vunpack.c.l.b16 %v290
      %v327 = vunpack.c.h.b16 %v290
      %v328 = vunpack.c.l.b16 %v291
      %v329 = vunpack.c.h.b16 %v291
      %v330 = vunpack.c.l.b16 %v292
      %v331 = vunpack.c.h.b16 %v292
      %v332 = vunpack.c.l.b16 %v293
      %v333 = vunpack.c.h.b16 %v293
      %v334 = vunpack.c.l.b16 %v294
      %v335 = vunpack.c.h.b16 %v294
      %v336 = vunpack.c.l.b16 %v295
      %v337 = vunpack.c.h.b16 %v295
      %v338 = vunpack.c.l.b16 %v296
      %v339 = vunpack.c.h.b16 %v296
      %v340 = vunpack.c.l.b16 %v297
      %v341 = vunpack.c.h.b16 %v297
      %v342 = vunpack.c.l.b16 %v298
      %v343 = vunpack.c.h.b16 %v298
      %v344 = vunpack.c.l.b16 %v299
      %v345 = vunpack.c.h.b16 %v299
      %v346 = vunpack.c.l.b16 %v300
      %v347 = vunpack.c.h.b16 %v300
      %v348 = vunpack.c.l.b16 %v301
      %v349 = vunpack.c.h.b16 %v301
      %v350 = vpack.c.b16 %v318, %v318
      %v351 = vpack.c.b16 %v319, %v319
      %v352 = vpack.c.b16 %v320, %v320
      %v353 = vpack.c.b16 %v321, %v321
      %v354 = vpack.c.b16 %v322, %v322
      %v355 = vpack.c.b16 %v323, %v323
      %v356 = vpack.c.b16 %v324, %v324
      %v357 = vpack.c.b16 %v325, %v325
      %v358 = vpack.c.b16 %v326, %v326
      %v359 = vpack.c.b16 %v327, %v327
      %v360 = vpack.c.b16 %v328, %v328
      %v361 = vpack.c.b16 %v329, %v329
      %v362 = vpack.c.b16 %v330, %v330
      %v363 = vpack.c.b16 %v331, %v331
      %v364 = vpack.c.b16 %v332, %v332
      %v365 = vpack.c.b16 %v333, %v333
      %v366 = vpack.c.b16 %v334, %v334
      %v367 = vpack.c.b16 %v335, %v335
      %v368 = vpack.c.b16 %v336, %v336
      %v369 = vpack.c.b16 %v337, %v337
      %v370 = vpack.c.b16 %v338, %v338
      %v371 = vpack.c.b16 %v339, %v339
      %v372 = vpack.c.b16 %v340, %v340
      %v373 = vpack.c.b16 %v341, %v341
      %v374 = vpack.c.b16 %v342, %v342
      %v375 = vpack.c.b16 %v343, %v343
      %v376 = vpack.c.b16 %v344, %v344
      %v377 = vpack.c.b16 %v345, %v345
      %v378 = vpack.c.b16 %v346, %v346
      %v379 = vpack.c.b16 %v347, %v347
      %v380 = vpack.c.b16 %v348, %v348
      %v381 = vpack.c.b16 %v349, %v349
      %vm382 = vsmask.f32 256
      %vm383 = vsmask.f32 4368
      %vm384 = vmor %vm382, %vm383
      %v386 = vshrl.u32 %v350, 16
      %v388 = vrot.slane %v386, 7
      %v389 = vshll.u32 %v350, 16
      %v391 = vor.u32 %v388, %v389
      %v392 = vrot.slane %v388, 4
      %v394 = vshrl.u32 %v351, 16
      %v396 = vrot.slane %v394, 7
      %v397 = vshll.u32 %v351, 16
      %v399 = vor.u32 %v396, %v397
      %v400 = vsel %vm384, %v392, %v399
      %v401 = vrot.slane %v396, 4
      %v403 = vshrl.u32 %v352, 16
      %v405 = vrot.slane %v403, 7
      %v406 = vshll.u32 %v352, 16
      %v408 = vor.u32 %v405, %v406
      %v409 = vrot.slane %v405, 4
      %v411 = vshrl.u32 %v353, 16
      %v413 = vrot.slane %v411, 7
      %v414 = vshll.u32 %v353, 16
      %v416 = vor.u32 %v413, %v414
      %v417 = vsel %vm384, %v409, %v416
      %v418 = vrot.slane %v413, 4
      %v420 = vshrl.u32 %v354, 16
      %v422 = vrot.slane %v420, 7
      %v423 = vshll.u32 %v354, 16
      %v425 = vor.u32 %v422, %v423
      %v426 = vrot.slane %v422, 4
      %v428 = vshrl.u32 %v355, 16
      %v430 = vrot.slane %v428, 7
      %v431 = vshll.u32 %v355, 16
      %v433 = vor.u32 %v430, %v431
      %v434 = vsel %vm384, %v426, %v433
      %v435 = vrot.slane %v430, 4
      %v437 = vshrl.u32 %v356, 16
      %v439 = vrot.slane %v437, 7
      %v440 = vshll.u32 %v356, 16
      %v442 = vor.u32 %v439, %v440
      %v443 = vrot.slane %v439, 4
      %v445 = vshrl.u32 %v357, 16
      %v447 = vrot.slane %v445, 7
      %v448 = vshll.u32 %v357, 16
      %v450 = vor.u32 %v447, %v448
      %v451 = vsel %vm384, %v443, %v450
      %v452 = vrot.slane %v447, 4
      %v454 = vshrl.u32 %v358, 16
      %v456 = vrot.slane %v454, 7
      %v457 = vshll.u32 %v358, 16
      %v459 = vor.u32 %v456, %v457
      %v460 = vrot.slane %v456, 4
      %v462 = vshrl.u32 %v359, 16
      %v464 = vrot.slane %v462, 7
      %v465 = vshll.u32 %v359, 16
      %v467 = vor.u32 %v464, %v465
      %v468 = vsel %vm384, %v460, %v467
      %v469 = vrot.slane %v464, 4
      %v471 = vshrl.u32 %v360, 16
      %v473 = vrot.slane %v471, 7
      %v474 = vshll.u32 %v360, 16
      %v476 = vor.u32 %v473, %v474
      %v477 = vrot.slane %v473, 4
      %v479 = vshrl.u32 %v361, 16
      %v481 = vrot.slane %v479, 7
      %v482 = vshll.u32 %v361, 16
      %v484 = vor.u32 %v481, %v482
      %v485 = vsel %vm384, %v477, %v484
      %v486 = vrot.slane %v481, 4
      %v488 = vshrl.u32 %v362, 16
      %v490 = vrot.slane %v488, 7
      %v491 = vshll.u32 %v362, 16
      %v493 = vor.u32 %v490, %v491
      %v494 = vrot.slane %v490, 4
      %v496 = vshrl.u32 %v363, 16
      %v498 = vrot.slane %v496, 7
      %v499 = vshll.u32 %v363, 16
      %v501 = vor.u32 %v498, %v499
      %v502 = vsel %vm384, %v494, %v501
      %v503 = vrot.slane %v498, 4
      %v505 = vshrl.u32 %v364, 16
      %v507 = vrot.slane %v505, 7
      %v508 = vshll.u32 %v364, 16
      %v510 = vor.u32 %v507, %v508
      %v511 = vrot.slane %v507, 4
      %v513 = vshrl.u32 %v365, 16
      %v515 = vrot.slane %v513, 7
      %v516 = vshll.u32 %v365, 16
      %v518 = vor.u32 %v515, %v516
      %v519 = vsel %vm384, %v511, %v518
      %v520 = vrot.slane %v515, 4
      %v522 = vshrl.u32 %v366, 16
      %v524 = vrot.slane %v522, 7
      %v525 = vshll.u32 %v366, 16
      %v527 = vor.u32 %v524, %v525
      %v528 = vrot.slane %v524, 4
      %v530 = vshrl.u32 %v367, 16
      %v532 = vrot.slane %v530, 7
      %v533 = vshll.u32 %v367, 16
      %v535 = vor.u32 %v532, %v533
      %v536 = vsel %vm384, %v528, %v535
      %v537 = vrot.slane %v532, 4
      %v539 = vshrl.u32 %v368, 16
      %v541 = vrot.slane %v539, 7
      %v542 = vshll.u32 %v368, 16
      %v544 = vor.u32 %v541, %v542
      %v545 = vrot.slane %v541, 4
      %v547 = vshrl.u32 %v369, 16
      %v549 = vrot.slane %v547, 7
      %v550 = vshll.u32 %v369, 16
      %v552 = vor.u32 %v549, %v550
      %v553 = vsel %vm384, %v545, %v552
      %v554 = vrot.slane %v549, 4
      %v556 = vshrl.u32 %v370, 16
      %v558 = vrot.slane %v556, 7
      %v559 = vshll.u32 %v370, 16
      %v561 = vor.u32 %v558, %v559
      %v562 = vrot.slane %v558, 4
      %v564 = vshrl.u32 %v371, 16
      %v566 = vrot.slane %v564, 7
      %v567 = vshll.u32 %v371, 16
      %v569 = vor.u32 %v566, %v567
      %v570 = vsel %vm384, %v562, %v569
      %v571 = vrot.slane %v566, 4
      %v573 = vshrl.u32 %v372, 16
      %v575 = vrot.slane %v573, 7
      %v576 = vshll.u32 %v372, 16
      %v578 = vor.u32 %v575, %v576
      %v579 = vrot.slane %v575, 4
      %v581 = vshrl.u32 %v373, 16
      %v583 = vrot.slane %v581, 7
      %v584 = vshll.u32 %v373, 16
      %v586 = vor.u32 %v583, %v584
      %v587 = vsel %vm384, %v579, %v586
      %v588 = vrot.slane %v583, 4
      %v590 = vshrl.u32 %v374, 16
      %v592 = vrot.slane %v590, 7
      %v593 = vshll.u32 %v374, 16
      %v595 = vor.u32 %v592, %v593
      %v596 = vrot.slane %v592, 4
      %v598 = vshrl.u32 %v375, 16
      %v600 = vrot.slane %v598, 7
      %v601 = vshll.u32 %v375, 16
      %v603 = vor.u32 %v600, %v601
      %v604 = vsel %vm384, %v596, %v603
      %v605 = vrot.slane %v600, 4
      %v607 = vshrl.u32 %v376, 16
      %v609 = vrot.slane %v607, 7
      %v610 = vshll.u32 %v376, 16
      %v612 = vor.u32 %v609, %v610
      %v613 = vrot.slane %v609, 4
      %v615 = vshrl.u32 %v377, 16
      %v617 = vrot.slane %v615, 7
      %v618 = vshll.u32 %v377, 16
      %v620 = vor.u32 %v617, %v618
      %v621 = vsel %vm384, %v613, %v620
      %v622 = vrot.slane %v617, 4
      %v624 = vshrl.u32 %v378, 16
      %v626 = vrot.slane %v624, 7
      %v627 = vshll.u32 %v378, 16
      %v629 = vor.u32 %v626, %v627
      %v630 = vrot.slane %v626, 4
      %v632 = vshrl.u32 %v379, 16
      %v634 = vrot.slane %v632, 7
      %v635 = vshll.u32 %v379, 16
      %v637 = vor.u32 %v634, %v635
      %v638 = vsel %vm384, %v630, %v637
      %v639 = vrot.slane %v634, 4
      %v641 = vshrl.u32 %v380, 16
      %v643 = vrot.slane %v641, 7
      %v644 = vshll.u32 %v380, 16
      %v646 = vor.u32 %v643, %v644
      %v647 = vrot.slane %v643, 4
      %v649 = vshrl.u32 %v381, 16
      %v651 = vrot.slane %v649, 7
      %v652 = vshll.u32 %v381, 16
      %v654 = vor.u32 %v651, %v652
      %v655 = vsel %vm384, %v647, %v654
      %v656 = vrot.slane %v651, 4
      %s705 = scalar_lea.vmem [#allocation2], 12
      %vm706 = vcmask 27648
      %vm707 = vsmask.f32 7938
      %vm708 = vmand %vm706, %vm707
      %v709 = vld [vmem:[%s705] sm:$0xf]
      %v710 = vsel %vm708, %v391, %v709
      %711 = vst [vmem:[%s705] sm:$0xf] %v710
      %vm712 = vcmask 27648
      %713 = vst.msk [vmem:[%s705 + $0x4] sm:$0xf] %vm712, %v400
      %vm714 = vcmask 24576
      %vm715 = vmand %vm714, %vm382
      %v716 = vld [vmem:[%s705 + $0x8] sm:$0x1]
      %v717 = vsel %vm715, %v401, %v716
      %718 = vst [vmem:[%s705 + $0x8] sm:$0x1] %v717
      %v719 = vld [vmem:[%s705 + $0xc] sm:$0xf]
      %v720 = vsel %vm708, %v408, %v719
      %721 = vst [vmem:[%s705 + $0xc] sm:$0xf] %v720
      %722 = vst.msk [vmem:[%s705 + $0x10] sm:$0xf] %vm712, %v417
      %v723 = vld [vmem:[%s705 + $0x14] sm:$0x1]
      %v724 = vsel %vm715, %v418, %v723
      %725 = vst [vmem:[%s705 + $0x14] sm:$0x1] %v724
      %v726 = vld [vmem:[%s705 + $0x18] sm:$0xf]
      %v727 = vsel %vm708, %v425, %v726
      %728 = vst [vmem:[%s705 + $0x18] sm:$0xf] %v727
      %729 = vst.msk [vmem:[%s705 + $0x1c] sm:$0xf] %vm712, %v434
      %v730 = vld [vmem:[%s705 + $0x20] sm:$0x1]
      %v731 = vsel %vm715, %v435, %v730
      %732 = vst [vmem:[%s705 + $0x20] sm:$0x1] %v731
      %v733 = vld [vmem:[%s705 + $0x24] sm:$0xf]
      %v734 = vsel %vm708, %v442, %v733
      %735 = vst [vmem:[%s705 + $0x24] sm:$0xf] %v734
      %736 = vst.msk [vmem:[%s705 + $0x28] sm:$0xf] %vm712, %v451
      %v737 = vld [vmem:[%s705 + $0x2c] sm:$0x1]
      %v738 = vsel %vm715, %v452, %v737
      %739 = vst [vmem:[%s705 + $0x2c] sm:$0x1] %v738
      %v740 = vld [vmem:[%s705 + $0x30] sm:$0xf]
      %v741 = vsel %vm708, %v459, %v740
      %742 = vst [vmem:[%s705 + $0x30] sm:$0xf] %v741
      %743 = vst.msk [vmem:[%s705 + $0x34] sm:$0xf] %vm712, %v468
      %v744 = vld [vmem:[%s705 + $0x38] sm:$0x1]
      %v745 = vsel %vm715, %v469, %v744
      %746 = vst [vmem:[%s705 + $0x38] sm:$0x1] %v745
      %v747 = vld [vmem:[%s705 + $0x3c] sm:$0xf]
      %v748 = vsel %vm708, %v476, %v747
      %749 = vst [vmem:[%s705 + $0x3c] sm:$0xf] %v748
      %750 = vst.msk [vmem:[%s705 + $0x40] sm:$0xf] %vm712, %v485
      %v751 = vld [vmem:[%s705 + $0x44] sm:$0x1]
      %v752 = vsel %vm715, %v486, %v751
      %753 = vst [vmem:[%s705 + $0x44] sm:$0x1] %v752
      %v754 = vld [vmem:[%s705 + $0x48] sm:$0xf]
      %v755 = vsel %vm708, %v493, %v754
      %756 = vst [vmem:[%s705 + $0x48] sm:$0xf] %v755
      %757 = vst.msk [vmem:[%s705 + $0x4c] sm:$0xf] %vm712, %v502
      %v758 = vld [vmem:[%s705 + $0x50] sm:$0x1]
      %v759 = vsel %vm715, %v503, %v758
      %760 = vst [vmem:[%s705 + $0x50] sm:$0x1] %v759
      %v761 = vld [vmem:[%s705 + $0x54] sm:$0xf]
      %v762 = vsel %vm708, %v510, %v761
      %763 = vst [vmem:[%s705 + $0x54] sm:$0xf] %v762
      %764 = vst.msk [vmem:[%s705 + $0x58] sm:$0xf] %vm712, %v519
      %v765 = vld [vmem:[%s705 + $0x5c] sm:$0x1]
      %v766 = vsel %vm715, %v520, %v765
      %767 = vst [vmem:[%s705 + $0x5c] sm:$0x1] %v766
      %v768 = vld [vmem:[%s705 + $0x60] sm:$0xf]
      %v769 = vsel %vm708, %v527, %v768
      %770 = vst [vmem:[%s705 + $0x60] sm:$0xf] %v769
      %771 = vst.msk [vmem:[%s705 + $0x64] sm:$0xf] %vm712, %v536
      %v772 = vld [vmem:[%s705 + $0x68] sm:$0x1]
      %v773 = vsel %vm715, %v537, %v772
      %774 = vst [vmem:[%s705 + $0x68] sm:$0x1] %v773
      %v775 = vld [vmem:[%s705 + $0x6c] sm:$0xf]
      %v776 = vsel %vm708, %v544, %v775
      %777 = vst [vmem:[%s705 + $0x6c] sm:$0xf] %v776
      %778 = vst.msk [vmem:[%s705 + $0x70] sm:$0xf] %vm712, %v553
      %v779 = vld [vmem:[%s705 + $0x74] sm:$0x1]
      %v780 = vsel %vm715, %v554, %v779
      %781 = vst [vmem:[%s705 + $0x74] sm:$0x1] %v780
      %v782 = vld [vmem:[%s705 + $0x78] sm:$0xf]
      %v783 = vsel %vm708, %v561, %v782
      %784 = vst [vmem:[%s705 + $0x78] sm:$0xf] %v783
      %785 = vst.msk [vmem:[%s705 + $0x7c] sm:$0xf] %vm712, %v570
      %v786 = vld [vmem:[%s705 + $0x80] sm:$0x1]
      %v787 = vsel %vm715, %v571, %v786
      %788 = vst [vmem:[%s705 + $0x80] sm:$0x1] %v787
      %v789 = vld [vmem:[%s705 + $0x84] sm:$0xf]
      %v790 = vsel %vm708, %v578, %v789
      %791 = vst [vmem:[%s705 + $0x84] sm:$0xf] %v790
      %792 = vst.msk [vmem:[%s705 + $0x88] sm:$0xf] %vm712, %v587
      %v793 = vld [vmem:[%s705 + $0x8c] sm:$0x1]
      %v794 = vsel %vm715, %v588, %v793
      %795 = vst [vmem:[%s705 + $0x8c] sm:$0x1] %v794
      %v796 = vld [vmem:[%s705 + $0x90] sm:$0xf]
      %v797 = vsel %vm708, %v595, %v796
      %798 = vst [vmem:[%s705 + $0x90] sm:$0xf] %v797
      %799 = vst.msk [vmem:[%s705 + $0x94] sm:$0xf] %vm712, %v604
      %v800 = vld [vmem:[%s705 + $0x98] sm:$0x1]
      %v801 = vsel %vm715, %v605, %v800
      %802 = vst [vmem:[%s705 + $0x98] sm:$0x1] %v801
      %v803 = vld [vmem:[%s705 + $0x9c] sm:$0xf]
      %v804 = vsel %vm708, %v612, %v803
      %805 = vst [vmem:[%s705 + $0x9c] sm:$0xf] %v804
      %806 = vst.msk [vmem:[%s705 + $0xa0] sm:$0xf] %vm712, %v621
      %v807 = vld [vmem:[%s705 + $0xa4] sm:$0x1]
      %v808 = vsel %vm715, %v622, %v807
      %809 = vst [vmem:[%s705 + $0xa4] sm:$0x1] %v808
      %v810 = vld [vmem:[%s705 + $0xa8] sm:$0xf]
      %v811 = vsel %vm708, %v629, %v810
      %812 = vst [vmem:[%s705 + $0xa8] sm:$0xf] %v811
      %813 = vst.msk [vmem:[%s705 + $0xac] sm:$0xf] %vm712, %v638
      %v814 = vld [vmem:[%s705 + $0xb0] sm:$0x1]
      %v815 = vsel %vm715, %v639, %v814
      %816 = vst [vmem:[%s705 + $0xb0] sm:$0x1] %v815
      %v817 = vld [vmem:[%s705 + $0xb4] sm:$0xf]
      %v818 = vsel %vm708, %v646, %v817
      %819 = vst [vmem:[%s705 + $0xb4] sm:$0xf] %v818
      %820 = vst.msk [vmem:[%s705 + $0xb8] sm:$0xf] %vm712, %v655
      %v821 = vld [vmem:[%s705 + $0xbc] sm:$0x1]
      %v822 = vsel %vm715, %v656, %v821
      %823 = vst [vmem:[%s705 + $0xbc] sm:$0x1] %v822
      %v824 = vld [vmem:[#allocation2] sm:$0xf]
      %v825 = vsel %vm708, %v408, %v824
      %826 = vst [vmem:[#allocation2] sm:$0xf] %v825
      %827 = vst.msk [vmem:[#allocation2 + $0x4] sm:$0xf] %vm712, %v417
      %v828 = vld [vmem:[#allocation2 + $0x8] sm:$0x1]
      %v829 = vsel %vm715, %v418, %v828
      %830 = vst [vmem:[#allocation2 + $0x8] sm:$0x1] %v829
      %s831 = scalar_lea.vmem [#allocation2], 204
      %v832 = vld [vmem:[%s831] sm:$0xf]
      %v833 = vsel %vm708, %v629, %v832
      %834 = vst [vmem:[%s831] sm:$0xf] %v833
      %835 = vst.msk [vmem:[%s831 + $0x4] sm:$0xf] %vm712, %v638
      %v836 = vld [vmem:[%s831 + $0x8] sm:$0x1]
      %v837 = vsel %vm715, %v639, %v836
      %838 = vst [vmem:[%s831 + $0x8] sm:$0x1] %v837
      %v839 = vld [vmem:[#allocation2] sm:$0x2]
      %v840 = vld [vmem:[#allocation2 + $0xc] sm:$0x2]
      %v841 = vld [vmem:[#allocation2 + $0x18] sm:$0x2]
      %v842 = vld [vmem:[#allocation2 + $0x24] sm:$0x2]
      %v843 = vld [vmem:[#allocation2 + $0x30] sm:$0x2]
      %v844 = vld [vmem:[#allocation2 + $0x3c] sm:$0x2]
      %v845 = vld [vmem:[#allocation2 + $0x48] sm:$0x2]
      %v846 = vld [vmem:[#allocation2 + $0x54] sm:$0x2]
      %v847 = vld [vmem:[#allocation2 + $0x60] sm:$0x2]
      %v848 = vld [vmem:[#allocation2 + $0x6c] sm:$0x2]
      %v849 = vld [vmem:[#allocation2 + $0x78] sm:$0x2]
      %v850 = vld [vmem:[#allocation2 + $0x84] sm:$0x2]
      %v851 = vld [vmem:[#allocation2 + $0x90] sm:$0x2]
      %v852 = vld [vmem:[#allocation2 + $0x9c] sm:$0x2]
      %v853 = vld [vmem:[#allocation2 + $0xa8] sm:$0x2]
      %v854 = vld [vmem:[#allocation2 + $0xb4] sm:$0x2]
      %v855 = vld [vmem:[#allocation2 + $0xc0] sm:$0x2]
      %v856 = vld [vmem:[#allocation2 + $0xcc] sm:$0x2]
      %v875 = vrot.slane %v839, 5
      %v876 = vrot.slane %v875, 4
      %v877 = vrot.slane %v840, 5
      %v878 = vrot.slane %v877, 4
      %v879 = vrot.slane %v841, 5
      %v880 = vrot.slane %v879, 4
      %v881 = vrot.slane %v842, 5
      %v882 = vrot.slane %v881, 4
      %v883 = vrot.slane %v843, 5
      %v884 = vrot.slane %v883, 4
      %v885 = vrot.slane %v844, 5
      %v886 = vrot.slane %v885, 4
      %v887 = vrot.slane %v845, 5
      %v888 = vrot.slane %v887, 4
      %v889 = vrot.slane %v846, 5
      %v890 = vrot.slane %v889, 4
      %v891 = vrot.slane %v847, 5
      %v892 = vrot.slane %v891, 4
      %v893 = vrot.slane %v848, 5
      %v894 = vrot.slane %v893, 4
      %v895 = vrot.slane %v849, 5
      %v896 = vrot.slane %v895, 4
      %v897 = vrot.slane %v850, 5
      %v898 = vrot.slane %v897, 4
      %v899 = vrot.slane %v851, 5
      %v900 = vrot.slane %v899, 4
      %v901 = vrot.slane %v852, 5
      %v902 = vrot.slane %v901, 4
      %v903 = vrot.slane %v853, 5
      %v904 = vrot.slane %v903, 4
      %v905 = vrot.slane %v854, 5
      %v906 = vrot.slane %v905, 4
      %v907 = vrot.slane %v855, 5
      %v908 = vrot.slane %v907, 4
      %v909 = vrot.slane %v856, 5
      %v910 = vrot.slane %v909, 4
      %v929 = vld [vmem:[#allocation2] sm:$0x1]
      %v930 = vsel %vm715, %v876, %v929
      %931 = vst [vmem:[#allocation2] sm:$0x1] %v930
      %v932 = vld [vmem:[#allocation2 + $0xc] sm:$0x1]
      %v933 = vsel %vm715, %v878, %v932
      %934 = vst [vmem:[#allocation2 + $0xc] sm:$0x1] %v933
      %v935 = vld [vmem:[#allocation2 + $0x18] sm:$0x1]
      %v936 = vsel %vm715, %v880, %v935
      %937 = vst [vmem:[#allocation2 + $0x18] sm:$0x1] %v936
      %v938 = vld [vmem:[#allocation2 + $0x24] sm:$0x1]
      %v939 = vsel %vm715, %v882, %v938
      %940 = vst [vmem:[#allocation2 + $0x24] sm:$0x1] %v939
      %v941 = vld [vmem:[#allocation2 + $0x30] sm:$0x1]
      %v942 = vsel %vm715, %v884, %v941
      %943 = vst [vmem:[#allocation2 + $0x30] sm:$0x1] %v942
      %v944 = vld [vmem:[#allocation2 + $0x3c] sm:$0x1]
      %v945 = vsel %vm715, %v886, %v944
      %946 = vst [vmem:[#allocation2 + $0x3c] sm:$0x1] %v945
      %v947 = vld [vmem:[#allocation2 + $0x48] sm:$0x1]
      %v948 = vsel %vm715, %v888, %v947
      %949 = vst [vmem:[#allocation2 + $0x48] sm:$0x1] %v948
      %v950 = vld [vmem:[#allocation2 + $0x54] sm:$0x1]
      %v951 = vsel %vm715, %v890, %v950
      %952 = vst [vmem:[#allocation2 + $0x54] sm:$0x1] %v951
      %v953 = vld [vmem:[#allocation2 + $0x60] sm:$0x1]
      %v954 = vsel %vm715, %v892, %v953
      %955 = vst [vmem:[#allocation2 + $0x60] sm:$0x1] %v954
      %v956 = vld [vmem:[#allocation2 + $0x6c] sm:$0x1]
      %v957 = vsel %vm715, %v894, %v956
      %958 = vst [vmem:[#allocation2 + $0x6c] sm:$0x1] %v957
      %v959 = vld [vmem:[#allocation2 + $0x78] sm:$0x1]
      %v960 = vsel %vm715, %v896, %v959
      %961 = vst [vmem:[#allocation2 + $0x78] sm:$0x1] %v960
      %v962 = vld [vmem:[#allocation2 + $0x84] sm:$0x1]
      %v963 = vsel %vm715, %v898, %v962
      %964 = vst [vmem:[#allocation2 + $0x84] sm:$0x1] %v963
      %v965 = vld [vmem:[#allocation2 + $0x90] sm:$0x1]
      %v966 = vsel %vm715, %v900, %v965
      %967 = vst [vmem:[#allocation2 + $0x90] sm:$0x1] %v966
      %v968 = vld [vmem:[#allocation2 + $0x9c] sm:$0x1]
      %v969 = vsel %vm715, %v902, %v968
      %970 = vst [vmem:[#allocation2 + $0x9c] sm:$0x1] %v969
      %v971 = vld [vmem:[#allocation2 + $0xa8] sm:$0x1]
      %v972 = vsel %vm715, %v904, %v971
      %973 = vst [vmem:[#allocation2 + $0xa8] sm:$0x1] %v972
      %v974 = vld [vmem:[#allocation2 + $0xb4] sm:$0x1]
      %v975 = vsel %vm715, %v906, %v974
      %976 = vst [vmem:[#allocation2 + $0xb4] sm:$0x1] %v975
      %v977 = vld [vmem:[#allocation2 + $0xc0] sm:$0x1]
      %v978 = vsel %vm715, %v908, %v977
      %979 = vst [vmem:[#allocation2 + $0xc0] sm:$0x1] %v978
      %v980 = vld [vmem:[#allocation2 + $0xcc] sm:$0x1]
      %v981 = vsel %vm715, %v910, %v980
      %982 = vst [vmem:[#allocation2 + $0xcc] sm:$0x1] %v981
      %v983 = vld [vmem:[#allocation2 + $0x4] sm:$0x8]
      %v984 = vld [vmem:[#allocation2 + $0x10] sm:$0x8]
      %v985 = vld [vmem:[#allocation2 + $0x1c] sm:$0x8]
      %v986 = vld [vmem:[#allocation2 + $0x28] sm:$0x8]
      %v987 = vld [vmem:[#allocation2 + $0x34] sm:$0x8]
      %v988 = vld [vmem:[#allocation2 + $0x40] sm:$0x8]
      %v989 = vld [vmem:[#allocation2 + $0x4c] sm:$0x8]
      %v990 = vld [vmem:[#allocation2 + $0x58] sm:$0x8]
      %v991 = vld [vmem:[#allocation2 + $0x64] sm:$0x8]
      %v992 = vld [vmem:[#allocation2 + $0x70] sm:$0x8]
      %v993 = vld [vmem:[#allocation2 + $0x7c] sm:$0x8]
      %v994 = vld [vmem:[#allocation2 + $0x88] sm:$0x8]
      %v995 = vld [vmem:[#allocation2 + $0x94] sm:$0x8]
      %v996 = vld [vmem:[#allocation2 + $0xa0] sm:$0x8]
      %v997 = vld [vmem:[#allocation2 + $0xac] sm:$0x8]
      %v998 = vld [vmem:[#allocation2 + $0xb8] sm:$0x8]
      %v999 = vld [vmem:[#allocation2 + $0xc4] sm:$0x8]
      %v1000 = vld [vmem:[#allocation2 + $0xd0] sm:$0x8]
      %v1019 = vrot.slane %v983, 7
      %v1020 = vrot.slane %v1019, 4
      %v1021 = vrot.slane %v984, 7
      %v1022 = vrot.slane %v1021, 4
      %v1023 = vrot.slane %v985, 7
      %v1024 = vrot.slane %v1023, 4
      %v1025 = vrot.slane %v986, 7
      %v1026 = vrot.slane %v1025, 4
      %v1027 = vrot.slane %v987, 7
      %v1028 = vrot.slane %v1027, 4
      %v1029 = vrot.slane %v988, 7
      %v1030 = vrot.slane %v1029, 4
      %v1031 = vrot.slane %v989, 7
      %v1032 = vrot.slane %v1031, 4
      %v1033 = vrot.slane %v990, 7
      %v1034 = vrot.slane %v1033, 4
      %v1035 = vrot.slane %v991, 7
      %v1036 = vrot.slane %v1035, 4
      %v1037 = vrot.slane %v992, 7
      %v1038 = vrot.slane %v1037, 4
      %v1039 = vrot.slane %v993, 7
      %v1040 = vrot.slane %v1039, 4
      %v1041 = vrot.slane %v994, 7
      %v1042 = vrot.slane %v1041, 4
      %v1043 = vrot.slane %v995, 7
      %v1044 = vrot.slane %v1043, 4
      %v1045 = vrot.slane %v996, 7
      %v1046 = vrot.slane %v1045, 4
      %v1047 = vrot.slane %v997, 7
      %v1048 = vrot.slane %v1047, 4
      %v1049 = vrot.slane %v998, 7
      %v1050 = vrot.slane %v1049, 4
      %v1051 = vrot.slane %v999, 7
      %v1052 = vrot.slane %v1051, 4
      %v1053 = vrot.slane %v1000, 7
      %v1054 = vrot.slane %v1053, 4
      %vm1073 = vmand %vm714, %vm707
      %v1074 = vld [vmem:[#allocation2 + $0x8] sm:$0x1]
      %v1075 = vsel %vm1073, %v1020, %v1074
      %1076 = vst [vmem:[#allocation2 + $0x8] sm:$0x1] %v1075
      %v1077 = vld [vmem:[#allocation2 + $0x14] sm:$0x1]
      %v1078 = vsel %vm1073, %v1022, %v1077
      %1079 = vst [vmem:[#allocation2 + $0x14] sm:$0x1] %v1078
      %v1080 = vld [vmem:[#allocation2 + $0x20] sm:$0x1]
      %v1081 = vsel %vm1073, %v1024, %v1080
      %1082 = vst [vmem:[#allocation2 + $0x20] sm:$0x1] %v1081
      %v1083 = vld [vmem:[#allocation2 + $0x2c] sm:$0x1]
      %v1084 = vsel %vm1073, %v1026, %v1083
      %1085 = vst [vmem:[#allocation2 + $0x2c] sm:$0x1] %v1084
      %v1086 = vld [vmem:[#allocation2 + $0x38] sm:$0x1]
      %v1087 = vsel %vm1073, %v1028, %v1086
      %1088 = vst [vmem:[#allocation2 + $0x38] sm:$0x1] %v1087
      %v1089 = vld [vmem:[#allocation2 + $0x44] sm:$0x1]
      %v1090 = vsel %vm1073, %v1030, %v1089
      %1091 = vst [vmem:[#allocation2 + $0x44] sm:$0x1] %v1090
      %v1092 = vld [vmem:[#allocation2 + $0x50] sm:$0x1]
      %v1093 = vsel %vm1073, %v1032, %v1092
      %1094 = vst [vmem:[#allocation2 + $0x50] sm:$0x1] %v1093
      %v1095 = vld [vmem:[#allocation2 + $0x5c] sm:$0x1]
      %v1096 = vsel %vm1073, %v1034, %v1095
      %1097 = vst [vmem:[#allocation2 + $0x5c] sm:$0x1] %v1096
      %v1098 = vld [vmem:[#allocation2 + $0x68] sm:$0x1]
      %v1099 = vsel %vm1073, %v1036, %v1098
      %1100 = vst [vmem:[#allocation2 + $0x68] sm:$0x1] %v1099
      %v1101 = vld [vmem:[#allocation2 + $0x74] sm:$0x1]
      %v1102 = vsel %vm1073, %v1038, %v1101
      %1103 = vst [vmem:[#allocation2 + $0x74] sm:$0x1] %v1102
      %v1104 = vld [vmem:[#allocation2 + $0x80] sm:$0x1]
      %v1105 = vsel %vm1073, %v1040, %v1104
      %1106 = vst [vmem:[#allocation2 + $0x80] sm:$0x1] %v1105
      %v1107 = vld [vmem:[#allocation2 + $0x8c] sm:$0x1]
      %v1108 = vsel %vm1073, %v1042, %v1107
      %1109 = vst [vmem:[#allocation2 + $0x8c] sm:$0x1] %v1108
      %v1110 = vld [vmem:[#allocation2 + $0x98] sm:$0x1]
      %v1111 = vsel %vm1073, %v1044, %v1110
      %1112 = vst [vmem:[#allocation2 + $0x98] sm:$0x1] %v1111
      %v1113 = vld [vmem:[#allocation2 + $0xa4] sm:$0x1]
      %v1114 = vsel %vm1073, %v1046, %v1113
      %1115 = vst [vmem:[#allocation2 + $0xa4] sm:$0x1] %v1114
      %v1116 = vld [vmem:[#allocation2 + $0xb0] sm:$0x1]
      %v1117 = vsel %vm1073, %v1048, %v1116
      %1118 = vst [vmem:[#allocation2 + $0xb0] sm:$0x1] %v1117
      %v1119 = vld [vmem:[#allocation2 + $0xbc] sm:$0x1]
      %v1120 = vsel %vm1073, %v1050, %v1119
      %1121 = vst [vmem:[#allocation2 + $0xbc] sm:$0x1] %v1120
      %v1122 = vld [vmem:[#allocation2 + $0xc8] sm:$0x1]
      %v1123 = vsel %vm1073, %v1052, %v1122
      %1124 = vst [vmem:[#allocation2 + $0xc8] sm:$0x1] %v1123
      %v1125 = vld [vmem:[#allocation2 + $0xd4] sm:$0x1]
      %v1126 = vsel %vm1073, %v1054, %v1125
      %1127 = vst [vmem:[#allocation2 + $0xd4] sm:$0x1] %v1126
      %v1128 = vld [vmem:[#allocation2] sm:$0xf]
      %v1129 = vld [vmem:[#allocation2 + $0x4] sm:$0xf]
      %v1130 = vld [vmem:[#allocation2 + $0x8] sm:$0x1]
      %v1131 = vld [vmem:[#allocation2 + $0xc] sm:$0xf]
      %v1132 = vld [vmem:[#allocation2 + $0x10] sm:$0xf]
      %v1133 = vld [vmem:[#allocation2 + $0x14] sm:$0x1]
      %v1134 = vld [vmem:[#allocation2 + $0x18] sm:$0xf]
      %v1135 = vld [vmem:[#allocation2 + $0x1c] sm:$0xf]
      %v1136 = vld [vmem:[#allocation2 + $0x20] sm:$0x1]
      %v1137 = vld [vmem:[#allocation2 + $0x24] sm:$0xf]
      %v1138 = vld [vmem:[#allocation2 + $0x28] sm:$0xf]
      %v1139 = vld [vmem:[#allocation2 + $0x2c] sm:$0x1]
      %v1140 = vld [vmem:[#allocation2 + $0x30] sm:$0xf]
      %v1141 = vld [vmem:[#allocation2 + $0x34] sm:$0xf]
      %v1142 = vld [vmem:[#allocation2 + $0x38] sm:$0x1]
      %v1143 = vld [vmem:[#allocation2 + $0x3c] sm:$0xf]
      %v1144 = vld [vmem:[#allocation2 + $0x40] sm:$0xf]
      %v1145 = vld [vmem:[#allocation2 + $0x44] sm:$0x1]
      %v1146 = vld [vmem:[#allocation2 + $0x48] sm:$0xf]
      %v1147 = vld [vmem:[#allocation2 + $0x4c] sm:$0xf]
      %v1148 = vld [vmem:[#allocation2 + $0x50] sm:$0x1]
      %v1149 = vld [vmem:[#allocation2 + $0x54] sm:$0xf]
      %v1150 = vld [vmem:[#allocation2 + $0x58] sm:$0xf]
      %v1151 = vld [vmem:[#allocation2 + $0x5c] sm:$0x1]
      %v1152 = vld [vmem:[#allocation2 + $0x60] sm:$0xf]
      %v1153 = vld [vmem:[#allocation2 + $0x64] sm:$0xf]
      %v1154 = vld [vmem:[#allocation2 + $0x68] sm:$0x1]
      %v1155 = vld [vmem:[#allocation2 + $0x6c] sm:$0xf]
      %v1156 = vld [vmem:[#allocation2 + $0x70] sm:$0xf]
      %v1157 = vld [vmem:[#allocation2 + $0x74] sm:$0x1]
      %v1158 = vld [vmem:[#allocation2 + $0x78] sm:$0xf]
      %v1159 = vld [vmem:[#allocation2 + $0x7c] sm:$0xf]
      %v1160 = vld [vmem:[#allocation2 + $0x80] sm:$0x1]
      %v1161 = vld [vmem:[#allocation2 + $0x84] sm:$0xf]
      %v1162 = vld [vmem:[#allocation2 + $0x88] sm:$0xf]
      %v1163 = vld [vmem:[#allocation2 + $0x8c] sm:$0x1]
      %v1164 = vld [vmem:[#allocation2 + $0x90] sm:$0xf]
      %v1165 = vld [vmem:[#allocation2 + $0x94] sm:$0xf]
      %v1166 = vld [vmem:[#allocation2 + $0x98] sm:$0x1]
      %v1167 = vld [vmem:[#allocation2 + $0x9c] sm:$0xf]
      %v1168 = vld [vmem:[#allocation2 + $0xa0] sm:$0xf]
      %v1169 = vld [vmem:[#allocation2 + $0xa4] sm:$0x1]
      %v1170 = vld [vmem:[#allocation2 + $0xa8] sm:$0xf]
      %v1171 = vld [vmem:[#allocation2 + $0xac] sm:$0xf]
      %v1172 = vld [vmem:[#allocation2 + $0xb0] sm:$0x1]
      %v1173 = vld [vmem:[#allocation2 + $0xb4] sm:$0xf]
      %v1174 = vld [vmem:[#allocation2 + $0xb8] sm:$0xf]
      %v1175 = vld [vmem:[#allocation2 + $0xbc] sm:$0x1]
      %v1208 = vunpack.c.l.b16 %v1128
      %v1209 = vunpack.c.l.b16 %v1129
      %v1210 = vunpack.c.l.b16 %v1131
      %v1211 = vunpack.c.l.b16 %v1132
      %v1212 = vunpack.c.l.b16 %v1134
      %v1213 = vunpack.c.l.b16 %v1135
      %v1214 = vunpack.c.l.b16 %v1137
      %v1215 = vunpack.c.l.b16 %v1138
      %v1216 = vunpack.c.l.b16 %v1140
      %v1217 = vunpack.c.l.b16 %v1141
      %v1218 = vunpack.c.l.b16 %v1143
      %v1219 = vunpack.c.l.b16 %v1144
      %v1220 = vunpack.c.l.b16 %v1146
      %v1221 = vunpack.c.l.b16 %v1147
      %v1222 = vunpack.c.l.b16 %v1149
      %v1223 = vunpack.c.l.b16 %v1150
      %v1224 = vunpack.c.l.b16 %v1152
      %v1225 = vunpack.c.l.b16 %v1153
      %v1226 = vunpack.c.l.b16 %v1155
      %v1227 = vunpack.c.l.b16 %v1156
      %v1228 = vunpack.c.l.b16 %v1158
      %v1229 = vunpack.c.l.b16 %v1159
      %v1230 = vunpack.c.l.b16 %v1161
      %v1231 = vunpack.c.l.b16 %v1162
      %v1232 = vunpack.c.l.b16 %v1164
      %v1233 = vunpack.c.l.b16 %v1165
      %v1234 = vunpack.c.l.b16 %v1167
      %v1235 = vunpack.c.l.b16 %v1168
      %v1236 = vunpack.c.l.b16 %v1170
      %v1237 = vunpack.c.l.b16 %v1171
      %v1238 = vunpack.c.l.b16 %v1173
      %v1239 = vunpack.c.l.b16 %v1174
      %v1240 = vpack.c.b16 %v1209, %v1208
      %v1241 = vpack.c.b16 %v1211, %v1210
      %v1242 = vpack.c.b16 %v1213, %v1212
      %v1243 = vpack.c.b16 %v1215, %v1214
      %v1244 = vpack.c.b16 %v1217, %v1216
      %v1245 = vpack.c.b16 %v1219, %v1218
      %v1246 = vpack.c.b16 %v1221, %v1220
      %v1247 = vpack.c.b16 %v1223, %v1222
      %v1248 = vpack.c.b16 %v1225, %v1224
      %v1249 = vpack.c.b16 %v1227, %v1226
      %v1250 = vpack.c.b16 %v1229, %v1228
      %v1251 = vpack.c.b16 %v1231, %v1230
      %v1252 = vpack.c.b16 %v1233, %v1232
      %v1253 = vpack.c.b16 %v1235, %v1234
      %v1254 = vpack.c.b16 %v1237, %v1236
      %v1255 = vpack.c.b16 %v1239, %v1238
      %v1272 = vunpack.c.l.b16 %v1130
      %v1273 = vunpack.c.l.b16 %v1133
      %v1274 = vunpack.c.l.b16 %v1136
      %v1275 = vunpack.c.l.b16 %v1139
      %v1276 = vunpack.c.l.b16 %v1142
      %v1277 = vunpack.c.l.b16 %v1145
      %v1278 = vunpack.c.l.b16 %v1148
      %v1279 = vunpack.c.l.b16 %v1151
      %v1280 = vunpack.c.l.b16 %v1154
      %v1281 = vunpack.c.l.b16 %v1157
      %v1282 = vunpack.c.l.b16 %v1160
      %v1283 = vunpack.c.l.b16 %v1163
      %v1284 = vunpack.c.l.b16 %v1166
      %v1285 = vunpack.c.l.b16 %v1169
      %v1286 = vunpack.c.l.b16 %v1172
      %v1287 = vunpack.c.l.b16 %v1175
      %v1288 = vpack.c.b16 %v1272, %v1272
      %v1289 = vpack.c.b16 %v1273, %v1273
      %v1290 = vpack.c.b16 %v1274, %v1274
      %v1291 = vpack.c.b16 %v1275, %v1275
      %v1292 = vpack.c.b16 %v1276, %v1276
      %v1293 = vpack.c.b16 %v1277, %v1277
      %v1294 = vpack.c.b16 %v1278, %v1278
      %v1295 = vpack.c.b16 %v1279, %v1279
      %v1296 = vpack.c.b16 %v1280, %v1280
      %v1297 = vpack.c.b16 %v1281, %v1281
      %v1298 = vpack.c.b16 %v1282, %v1282
      %v1299 = vpack.c.b16 %v1283, %v1283
      %v1300 = vpack.c.b16 %v1284, %v1284
      %v1301 = vpack.c.b16 %v1285, %v1285
      %v1302 = vpack.c.b16 %v1286, %v1286
      %v1303 = vpack.c.b16 %v1287, %v1287
      %vm1304 = vsmask.f32 7424
      %v1306 = vshrl.u32 %v1240, 16
      %v1308 = vshll.u32 %v1240, 16
      %v1310 = vrot.slane %v1308, 1
      %v1311 = vor.u32 %v1306, %v1310
      %v1313 = vshll.u32 %v1288, 16
      %v1315 = vrot.slane %v1313, 1
      %v1316 = vsel %vm1304, %v1311, %v1315
      %v1318 = vshrl.u32 %v1241, 16
      %v1320 = vshll.u32 %v1241, 16
      %v1322 = vrot.slane %v1320, 1
      %v1323 = vor.u32 %v1318, %v1322
      %v1325 = vshll.u32 %v1289, 16
      %v1327 = vrot.slane %v1325, 1
      %v1328 = vsel %vm1304, %v1323, %v1327
      %v1330 = vshrl.u32 %v1242, 16
      %v1332 = vshll.u32 %v1242, 16
      %v1334 = vrot.slane %v1332, 1
      %v1335 = vor.u32 %v1330, %v1334
      %v1337 = vshll.u32 %v1290, 16
      %v1339 = vrot.slane %v1337, 1
      %v1340 = vsel %vm1304, %v1335, %v1339
      %v1342 = vshrl.u32 %v1243, 16
      %v1344 = vshll.u32 %v1243, 16
      %v1346 = vrot.slane %v1344, 1
      %v1347 = vor.u32 %v1342, %v1346
      %v1349 = vshll.u32 %v1291, 16
      %v1351 = vrot.slane %v1349, 1
      %v1352 = vsel %vm1304, %v1347, %v1351
      %v1354 = vshrl.u32 %v1244, 16
      %v1356 = vshll.u32 %v1244, 16
      %v1358 = vrot.slane %v1356, 1
      %v1359 = vor.u32 %v1354, %v1358
      %v1361 = vshll.u32 %v1292, 16
      %v1363 = vrot.slane %v1361, 1
      %v1364 = vsel %vm1304, %v1359, %v1363
      %v1366 = vshrl.u32 %v1245, 16
      %v1368 = vshll.u32 %v1245, 16
      %v1370 = vrot.slane %v1368, 1
      %v1371 = vor.u32 %v1366, %v1370
      %v1373 = vshll.u32 %v1293, 16
      %v1375 = vrot.slane %v1373, 1
      %v1376 = vsel %vm1304, %v1371, %v1375
      %v1378 = vshrl.u32 %v1246, 16
      %v1380 = vshll.u32 %v1246, 16
      %v1382 = vrot.slane %v1380, 1
      %v1383 = vor.u32 %v1378, %v1382
      %v1385 = vshll.u32 %v1294, 16
      %v1387 = vrot.slane %v1385, 1
      %v1388 = vsel %vm1304, %v1383, %v1387
      %v1390 = vshrl.u32 %v1247, 16
      %v1392 = vshll.u32 %v1247, 16
      %v1394 = vrot.slane %v1392, 1
      %v1395 = vor.u32 %v1390, %v1394
      %v1397 = vshll.u32 %v1295, 16
      %v1399 = vrot.slane %v1397, 1
      %v1400 = vsel %vm1304, %v1395, %v1399
      %v1402 = vshrl.u32 %v1248, 16
      %v1404 = vshll.u32 %v1248, 16
      %v1406 = vrot.slane %v1404, 1
      %v1407 = vor.u32 %v1402, %v1406
      %v1409 = vshll.u32 %v1296, 16
      %v1411 = vrot.slane %v1409, 1
      %v1412 = vsel %vm1304, %v1407, %v1411
      %v1414 = vshrl.u32 %v1249, 16
      %v1416 = vshll.u32 %v1249, 16
      %v1418 = vrot.slane %v1416, 1
      %v1419 = vor.u32 %v1414, %v1418
      %v1421 = vshll.u32 %v1297, 16
      %v1423 = vrot.slane %v1421, 1
      %v1424 = vsel %vm1304, %v1419, %v1423
      %v1426 = vshrl.u32 %v1250, 16
      %v1428 = vshll.u32 %v1250, 16
      %v1430 = vrot.slane %v1428, 1
      %v1431 = vor.u32 %v1426, %v1430
      %v1433 = vshll.u32 %v1298, 16
      %v1435 = vrot.slane %v1433, 1
      %v1436 = vsel %vm1304, %v1431, %v1435
      %v1438 = vshrl.u32 %v1251, 16
      %v1440 = vshll.u32 %v1251, 16
      %v1442 = vrot.slane %v1440, 1
      %v1443 = vor.u32 %v1438, %v1442
      %v1445 = vshll.u32 %v1299, 16
      %v1447 = vrot.slane %v1445, 1
      %v1448 = vsel %vm1304, %v1443, %v1447
      %v1450 = vshrl.u32 %v1252, 16
      %v1452 = vshll.u32 %v1252, 16
      %v1454 = vrot.slane %v1452, 1
      %v1455 = vor.u32 %v1450, %v1454
      %v1457 = vshll.u32 %v1300, 16
      %v1459 = vrot.slane %v1457, 1
      %v1460 = vsel %vm1304, %v1455, %v1459
      %v1462 = vshrl.u32 %v1253, 16
      %v1464 = vshll.u32 %v1253, 16
      %v1466 = vrot.slane %v1464, 1
      %v1467 = vor.u32 %v1462, %v1466
      %v1469 = vshll.u32 %v1301, 16
      %v1471 = vrot.slane %v1469, 1
      %v1472 = vsel %vm1304, %v1467, %v1471
      %v1474 = vshrl.u32 %v1254, 16
      %v1476 = vshll.u32 %v1254, 16
      %v1478 = vrot.slane %v1476, 1
      %v1479 = vor.u32 %v1474, %v1478
      %v1481 = vshll.u32 %v1302, 16
      %v1483 = vrot.slane %v1481, 1
      %v1484 = vsel %vm1304, %v1479, %v1483
      %v1486 = vshrl.u32 %v1255, 16
      %v1488 = vshll.u32 %v1255, 16
      %v1490 = vrot.slane %v1488, 1
      %v1491 = vor.u32 %v1486, %v1490
      %v1493 = vshll.u32 %v1303, 16
      %v1495 = vrot.slane %v1493, 1
      %v1496 = vsel %vm1304, %v1491, %v1495
      %1497 = vrot.lane.b32.xlu0 %v1316, 4
      %v1498 = vpop.permute.xlu0 %1497
      %1499 = vrot.lane.b32.xlu0 %v1328, 4
      %v1500 = vpop.permute.xlu0 %1499
      %1501 = vrot.lane.b32.xlu0 %v1340, 4
      %v1502 = vpop.permute.xlu0 %1501
      %1503 = vrot.lane.b32.xlu0 %v1352, 4
      %v1504 = vpop.permute.xlu0 %1503
      %1505 = vrot.lane.b32.xlu0 %v1364, 4
      %v1506 = vpop.permute.xlu0 %1505
      %1507 = vrot.lane.b32.xlu0 %v1376, 4
      %v1508 = vpop.permute.xlu0 %1507
      %1509 = vrot.lane.b32.xlu0 %v1388, 4
      %v1510 = vpop.permute.xlu0 %1509
      %1511 = vrot.lane.b32.xlu0 %v1400, 4
      %v1512 = vpop.permute.xlu0 %1511
      %1513 = vrot.lane.b32.xlu0 %v1412, 4
      %v1514 = vpop.permute.xlu0 %1513
      %1515 = vrot.lane.b32.xlu0 %v1424, 4
      %v1516 = vpop.permute.xlu0 %1515
      %1517 = vrot.lane.b32.xlu0 %v1436, 4
      %v1518 = vpop.permute.xlu0 %1517
      %1519 = vrot.lane.b32.xlu0 %v1448, 4
      %v1520 = vpop.permute.xlu0 %1519
      %1521 = vrot.lane.b32.xlu0 %v1460, 4
      %v1522 = vpop.permute.xlu0 %1521
      %1523 = vrot.lane.b32.xlu0 %v1472, 4
      %v1524 = vpop.permute.xlu0 %1523
      %1525 = vrot.lane.b32.xlu0 %v1484, 4
      %v1526 = vpop.permute.xlu0 %1525
      %1527 = vrot.lane.b32.xlu0 %v1496, 4
      %v1528 = vpop.permute.xlu0 %1527
      %vm1529 = vcmask 1046528
      %v1530 = vrot.slane %v1240, 1
      %v1531 = vrot.slane %v1288, 1
      %v1532 = vsel %vm1529, %v1530, %v1531
      %v1533 = vrot.slane %v1241, 1
      %v1534 = vrot.slane %v1289, 1
      %v1535 = vsel %vm1529, %v1533, %v1534
      %v1536 = vrot.slane %v1242, 1
      %v1537 = vrot.slane %v1290, 1
      %v1538 = vsel %vm1529, %v1536, %v1537
      %v1539 = vrot.slane %v1243, 1
      %v1540 = vrot.slane %v1291, 1
      %v1541 = vsel %vm1529, %v1539, %v1540
      %v1542 = vrot.slane %v1244, 1
      %v1543 = vrot.slane %v1292, 1
      %v1544 = vsel %vm1529, %v1542, %v1543
      %v1545 = vrot.slane %v1245, 1
      %v1546 = vrot.slane %v1293, 1
      %v1547 = vsel %vm1529, %v1545, %v1546
      %v1548 = vrot.slane %v1246, 1
      %v1549 = vrot.slane %v1294, 1
      %v1550 = vsel %vm1529, %v1548, %v1549
      %v1551 = vrot.slane %v1247, 1
      %v1552 = vrot.slane %v1295, 1
      %v1553 = vsel %vm1529, %v1551, %v1552
      %v1554 = vrot.slane %v1248, 1
      %v1555 = vrot.slane %v1296, 1
      %v1556 = vsel %vm1529, %v1554, %v1555
      %v1557 = vrot.slane %v1249, 1
      %v1558 = vrot.slane %v1297, 1
      %v1559 = vsel %vm1529, %v1557, %v1558
      %v1560 = vrot.slane %v1250, 1
      %v1561 = vrot.slane %v1298, 1
      %v1562 = vsel %vm1529, %v1560, %v1561
      %v1563 = vrot.slane %v1251, 1
      %v1564 = vrot.slane %v1299, 1
      %v1565 = vsel %vm1529, %v1563, %v1564
      %v1566 = vrot.slane %v1252, 1
      %v1567 = vrot.slane %v1300, 1
      %v1568 = vsel %vm1529, %v1566, %v1567
      %v1569 = vrot.slane %v1253, 1
      %v1570 = vrot.slane %v1301, 1
      %v1571 = vsel %vm1529, %v1569, %v1570
      %v1572 = vrot.slane %v1254, 1
      %v1573 = vrot.slane %v1302, 1
      %v1574 = vsel %vm1529, %v1572, %v1573
      %v1575 = vrot.slane %v1255, 1
      %v1576 = vrot.slane %v1303, 1
      %v1577 = vsel %vm1529, %v1575, %v1576
      %1578 = vrot.lane.b32.xlu0 %v1532, 8
      %v1579 = vpop.permute.xlu0 %1578
      %1580 = vrot.lane.b32.xlu0 %v1535, 8
      %v1581 = vpop.permute.xlu0 %1580
      %1582 = vrot.lane.b32.xlu0 %v1538, 8
      %v1583 = vpop.permute.xlu0 %1582
      %1584 = vrot.lane.b32.xlu0 %v1541, 8
      %v1585 = vpop.permute.xlu0 %1584
      %1586 = vrot.lane.b32.xlu0 %v1544, 8
      %v1587 = vpop.permute.xlu0 %1586
      %1588 = vrot.lane.b32.xlu0 %v1547, 8
      %v1589 = vpop.permute.xlu0 %1588
      %1590 = vrot.lane.b32.xlu0 %v1550, 8
      %v1591 = vpop.permute.xlu0 %1590
      %1592 = vrot.lane.b32.xlu0 %v1553, 8
      %v1593 = vpop.permute.xlu0 %1592
      %1594 = vrot.lane.b32.xlu0 %v1556, 8
      %v1595 = vpop.permute.xlu0 %1594
      %1596 = vrot.lane.b32.xlu0 %v1559, 8
      %v1597 = vpop.permute.xlu0 %1596
      %1598 = vrot.lane.b32.xlu0 %v1562, 8
      %v1599 = vpop.permute.xlu0 %1598
      %1600 = vrot.lane.b32.xlu0 %v1565, 8
      %v1601 = vpop.permute.xlu0 %1600
      %1602 = vrot.lane.b32.xlu0 %v1568, 8
      %v1603 = vpop.permute.xlu0 %1602
      %1604 = vrot.lane.b32.xlu0 %v1571, 8
      %v1605 = vpop.permute.xlu0 %1604
      %1606 = vrot.lane.b32.xlu0 %v1574, 8
      %v1607 = vpop.permute.xlu0 %1606
      %1608 = vrot.lane.b32.xlu0 %v1577, 8
      %v1609 = vpop.permute.xlu0 %1608
      %vm1610 = vcmask 31744
      %v1612 = vsel %vm1610, %v1240, %v1498
      %v1614 = vsel %vm1610, %v1241, %v1500
      %v1616 = vsel %vm1610, %v1242, %v1502
      %v1618 = vsel %vm1610, %v1243, %v1504
      %v1620 = vsel %vm1610, %v1244, %v1506
      %v1622 = vsel %vm1610, %v1245, %v1508
      %v1624 = vsel %vm1610, %v1246, %v1510
      %v1626 = vsel %vm1610, %v1247, %v1512
      %v1628 = vsel %vm1610, %v1248, %v1514
      %v1630 = vsel %vm1610, %v1249, %v1516
      %v1632 = vsel %vm1610, %v1250, %v1518
      %v1634 = vsel %vm1610, %v1251, %v1520
      %v1636 = vsel %vm1610, %v1252, %v1522
      %v1638 = vsel %vm1610, %v1253, %v1524
      %v1640 = vsel %vm1610, %v1254, %v1526
      %v1642 = vsel %vm1610, %v1255, %v1528
      %vm1643 = vcmask 64512
      %v1645 = vsel %vm1643, %v1612, %v1579
      %v1647 = vsel %vm1643, %v1614, %v1581
      %v1649 = vsel %vm1643, %v1616, %v1583
      %v1651 = vsel %vm1643, %v1618, %v1585
      %v1653 = vsel %vm1643, %v1620, %v1587
      %v1655 = vsel %vm1643, %v1622, %v1589
      %v1657 = vsel %vm1643, %v1624, %v1591
      %v1659 = vsel %vm1643, %v1626, %v1593
      %v1661 = vsel %vm1643, %v1628, %v1595
      %v1663 = vsel %vm1643, %v1630, %v1597
      %v1665 = vsel %vm1643, %v1632, %v1599
      %v1667 = vsel %vm1643, %v1634, %v1601
      %v1669 = vsel %vm1643, %v1636, %v1603
      %v1671 = vsel %vm1643, %v1638, %v1605
      %v1673 = vsel %vm1643, %v1640, %v1607
      %v1675 = vsel %vm1643, %v1642, %v1609
      %v1676 = vld [vmem:[%s1] sm:$0xf]
      %v1677 = vld [vmem:[%s1 + $0x4] sm:$0x3]
      %v1678 = vld [vmem:[%s705] sm:$0xf]
      %v1679 = vld [vmem:[%s705 + $0x4] sm:$0xf]
      %v1680 = vld [vmem:[%s705 + $0x8] sm:$0x1]
      %v1681 = vld [vmem:[%s705 + $0xc] sm:$0xf]
      %v1682 = vld [vmem:[%s705 + $0x10] sm:$0xf]
      %v1683 = vld [vmem:[%s705 + $0x14] sm:$0x1]
      %v1684 = vld [vmem:[%s705 + $0x18] sm:$0xf]
      %v1685 = vld [vmem:[%s705 + $0x1c] sm:$0xf]
      %v1686 = vld [vmem:[%s705 + $0x20] sm:$0x1]
      %v1687 = vld [vmem:[%s705 + $0x24] sm:$0xf]
      %v1688 = vld [vmem:[%s705 + $0x28] sm:$0xf]
      %v1689 = vld [vmem:[%s705 + $0x2c] sm:$0x1]
      %v1690 = vld [vmem:[%s705 + $0x30] sm:$0xf]
      %v1691 = vld [vmem:[%s705 + $0x34] sm:$0xf]
      %v1692 = vld [vmem:[%s705 + $0x38] sm:$0x1]
      %v1693 = vld [vmem:[%s705 + $0x3c] sm:$0xf]
      %v1694 = vld [vmem:[%s705 + $0x40] sm:$0xf]
      %v1695 = vld [vmem:[%s705 + $0x44] sm:$0x1]
      %v1696 = vld [vmem:[%s705 + $0x48] sm:$0xf]
      %v1697 = vld [vmem:[%s705 + $0x4c] sm:$0xf]
      %v1698 = vld [vmem:[%s705 + $0x50] sm:$0x1]
      %v1699 = vld [vmem:[%s705 + $0x54] sm:$0xf]
      %v1700 = vld [vmem:[%s705 + $0x58] sm:$0xf]
      %v1701 = vld [vmem:[%s705 + $0x5c] sm:$0x1]
      %v1702 = vld [vmem:[%s705 + $0x60] sm:$0xf]
      %v1703 = vld [vmem:[%s705 + $0x64] sm:$0xf]
      %v1704 = vld [vmem:[%s705 + $0x68] sm:$0x1]
      %v1705 = vld [vmem:[%s705 + $0x6c] sm:$0xf]
      %v1706 = vld [vmem:[%s705 + $0x70] sm:$0xf]
      %v1707 = vld [vmem:[%s705 + $0x74] sm:$0x1]
      %v1708 = vld [vmem:[%s705 + $0x78] sm:$0xf]
      %v1709 = vld [vmem:[%s705 + $0x7c] sm:$0xf]
      %v1710 = vld [vmem:[%s705 + $0x80] sm:$0x1]
      %v1711 = vld [vmem:[%s705 + $0x84] sm:$0xf]
      %v1712 = vld [vmem:[%s705 + $0x88] sm:$0xf]
      %v1713 = vld [vmem:[%s705 + $0x8c] sm:$0x1]
      %v1714 = vld [vmem:[%s705 + $0x90] sm:$0xf]
      %v1715 = vld [vmem:[%s705 + $0x94] sm:$0xf]
      %v1716 = vld [vmem:[%s705 + $0x98] sm:$0x1]
      %v1717 = vld [vmem:[%s705 + $0x9c] sm:$0xf]
      %v1718 = vld [vmem:[%s705 + $0xa0] sm:$0xf]
      %v1719 = vld [vmem:[%s705 + $0xa4] sm:$0x1]
      %v1720 = vld [vmem:[%s705 + $0xa8] sm:$0xf]
      %v1721 = vld [vmem:[%s705 + $0xac] sm:$0xf]
      %v1722 = vld [vmem:[%s705 + $0xb0] sm:$0x1]
      %v1723 = vld [vmem:[%s705 + $0xb4] sm:$0xf]
      %v1724 = vld [vmem:[%s705 + $0xb8] sm:$0xf]
      %v1725 = vld [vmem:[%s705 + $0xbc] sm:$0x1]
      %v1758 = vunpack.c.l.b16 %v1678
      %v1759 = vunpack.c.l.b16 %v1679
      %v1760 = vunpack.c.l.b16 %v1681
      %v1761 = vunpack.c.l.b16 %v1682
      %v1762 = vunpack.c.l.b16 %v1684
      %v1763 = vunpack.c.l.b16 %v1685
      %v1764 = vunpack.c.l.b16 %v1687
      %v1765 = vunpack.c.l.b16 %v1688
      %v1766 = vunpack.c.l.b16 %v1690
      %v1767 = vunpack.c.l.b16 %v1691
      %v1768 = vunpack.c.l.b16 %v1693
      %v1769 = vunpack.c.l.b16 %v1694
      %v1770 = vunpack.c.l.b16 %v1696
      %v1771 = vunpack.c.l.b16 %v1697
      %v1772 = vunpack.c.l.b16 %v1699
      %v1773 = vunpack.c.l.b16 %v1700
      %v1774 = vunpack.c.l.b16 %v1702
      %v1775 = vunpack.c.l.b16 %v1703
      %v1776 = vunpack.c.l.b16 %v1705
      %v1777 = vunpack.c.l.b16 %v1706
      %v1778 = vunpack.c.l.b16 %v1708
      %v1779 = vunpack.c.l.b16 %v1709
      %v1780 = vunpack.c.l.b16 %v1711
      %v1781 = vunpack.c.l.b16 %v1712
      %v1782 = vunpack.c.l.b16 %v1714
      %v1783 = vunpack.c.l.b16 %v1715
      %v1784 = vunpack.c.l.b16 %v1717
      %v1785 = vunpack.c.l.b16 %v1718
      %v1786 = vunpack.c.l.b16 %v1720
      %v1787 = vunpack.c.l.b16 %v1721
      %v1788 = vunpack.c.l.b16 %v1723
      %v1789 = vunpack.c.l.b16 %v1724
      %v1790 = vpack.c.b16 %v1759, %v1758
      %v1791 = vpack.c.b16 %v1761, %v1760
      %v1792 = vpack.c.b16 %v1763, %v1762
      %v1793 = vpack.c.b16 %v1765, %v1764
      %v1794 = vpack.c.b16 %v1767, %v1766
      %v1795 = vpack.c.b16 %v1769, %v1768
      %v1796 = vpack.c.b16 %v1771, %v1770
      %v1797 = vpack.c.b16 %v1773, %v1772
      %v1798 = vpack.c.b16 %v1775, %v1774
      %v1799 = vpack.c.b16 %v1777, %v1776
      %v1800 = vpack.c.b16 %v1779, %v1778
      %v1801 = vpack.c.b16 %v1781, %v1780
      %v1802 = vpack.c.b16 %v1783, %v1782
      %v1803 = vpack.c.b16 %v1785, %v1784
      %v1804 = vpack.c.b16 %v1787, %v1786
      %v1805 = vpack.c.b16 %v1789, %v1788
      %v1822 = vunpack.c.l.b16 %v1680
      %v1823 = vunpack.c.l.b16 %v1683
      %v1824 = vunpack.c.l.b16 %v1686
      %v1825 = vunpack.c.l.b16 %v1689
      %v1826 = vunpack.c.l.b16 %v1692
      %v1827 = vunpack.c.l.b16 %v1695
      %v1828 = vunpack.c.l.b16 %v1698
      %v1829 = vunpack.c.l.b16 %v1701
      %v1830 = vunpack.c.l.b16 %v1704
      %v1831 = vunpack.c.l.b16 %v1707
      %v1832 = vunpack.c.l.b16 %v1710
      %v1833 = vunpack.c.l.b16 %v1713
      %v1834 = vunpack.c.l.b16 %v1716
      %v1835 = vunpack.c.l.b16 %v1719
      %v1836 = vunpack.c.l.b16 %v1722
      %v1837 = vunpack.c.l.b16 %v1725
      %v1838 = vpack.c.b16 %v1822, %v1822
      %v1839 = vpack.c.b16 %v1823, %v1823
      %v1840 = vpack.c.b16 %v1824, %v1824
      %v1841 = vpack.c.b16 %v1825, %v1825
      %v1842 = vpack.c.b16 %v1826, %v1826
      %v1843 = vpack.c.b16 %v1827, %v1827
      %v1844 = vpack.c.b16 %v1828, %v1828
      %v1845 = vpack.c.b16 %v1829, %v1829
      %v1846 = vpack.c.b16 %v1830, %v1830
      %v1847 = vpack.c.b16 %v1831, %v1831
      %v1848 = vpack.c.b16 %v1832, %v1832
      %v1849 = vpack.c.b16 %v1833, %v1833
      %v1850 = vpack.c.b16 %v1834, %v1834
      %v1851 = vpack.c.b16 %v1835, %v1835
      %v1852 = vpack.c.b16 %v1836, %v1836
      %v1853 = vpack.c.b16 %v1837, %v1837
      %v1855 = vshrl.u32 %v1790, 16
      %v1857 = vshll.u32 %v1790, 16
      %v1859 = vrot.slane %v1857, 1
      %v1860 = vor.u32 %v1855, %v1859
      %v1862 = vshll.u32 %v1838, 16
      %v1864 = vrot.slane %v1862, 1
      %v1865 = vsel %vm1304, %v1860, %v1864
      %v1867 = vshrl.u32 %v1791, 16
      %v1869 = vshll.u32 %v1791, 16
      %v1871 = vrot.slane %v1869, 1
      %v1872 = vor.u32 %v1867, %v1871
      %v1874 = vshll.u32 %v1839, 16
      %v1876 = vrot.slane %v1874, 1
      %v1877 = vsel %vm1304, %v1872, %v1876
      %v1879 = vshrl.u32 %v1792, 16
      %v1881 = vshll.u32 %v1792, 16
      %v1883 = vrot.slane %v1881, 1
      %v1884 = vor.u32 %v1879, %v1883
      %v1886 = vshll.u32 %v1840, 16
      %v1888 = vrot.slane %v1886, 1
      %v1889 = vsel %vm1304, %v1884, %v1888
      %v1891 = vshrl.u32 %v1793, 16
      %v1893 = vshll.u32 %v1793, 16
      %v1895 = vrot.slane %v1893, 1
      %v1896 = vor.u32 %v1891, %v1895
      %v1898 = vshll.u32 %v1841, 16
      %v1900 = vrot.slane %v1898, 1
      %v1901 = vsel %vm1304, %v1896, %v1900
      %v1903 = vshrl.u32 %v1794, 16
      %v1905 = vshll.u32 %v1794, 16
      %v1907 = vrot.slane %v1905, 1
      %v1908 = vor.u32 %v1903, %v1907
      %v1910 = vshll.u32 %v1842, 16
      %v1912 = vrot.slane %v1910, 1
      %v1913 = vsel %vm1304, %v1908, %v1912
      %v1915 = vshrl.u32 %v1795, 16
      %v1917 = vshll.u32 %v1795, 16
      %v1919 = vrot.slane %v1917, 1
      %v1920 = vor.u32 %v1915, %v1919
      %v1922 = vshll.u32 %v1843, 16
      %v1924 = vrot.slane %v1922, 1
      %v1925 = vsel %vm1304, %v1920, %v1924
      %v1927 = vshrl.u32 %v1796, 16
      %v1929 = vshll.u32 %v1796, 16
      %v1931 = vrot.slane %v1929, 1
      %v1932 = vor.u32 %v1927, %v1931
      %v1934 = vshll.u32 %v1844, 16
      %v1936 = vrot.slane %v1934, 1
      %v1937 = vsel %vm1304, %v1932, %v1936
      %v1939 = vshrl.u32 %v1797, 16
      %v1941 = vshll.u32 %v1797, 16
      %v1943 = vrot.slane %v1941, 1
      %v1944 = vor.u32 %v1939, %v1943
      %v1946 = vshll.u32 %v1845, 16
      %v1948 = vrot.slane %v1946, 1
      %v1949 = vsel %vm1304, %v1944, %v1948
      %v1951 = vshrl.u32 %v1798, 16
      %v1953 = vshll.u32 %v1798, 16
      %v1955 = vrot.slane %v1953, 1
      %v1956 = vor.u32 %v1951, %v1955
      %v1958 = vshll.u32 %v1846, 16
      %v1960 = vrot.slane %v1958, 1
      %v1961 = vsel %vm1304, %v1956, %v1960
      %v1963 = vshrl.u32 %v1799, 16
      %v1965 = vshll.u32 %v1799, 16
      %v1967 = vrot.slane %v1965, 1
      %v1968 = vor.u32 %v1963, %v1967
      %v1970 = vshll.u32 %v1847, 16
      %v1972 = vrot.slane %v1970, 1
      %v1973 = vsel %vm1304, %v1968, %v1972
      %v1975 = vshrl.u32 %v1800, 16
      %v1977 = vshll.u32 %v1800, 16
      %v1979 = vrot.slane %v1977, 1
      %v1980 = vor.u32 %v1975, %v1979
      %v1982 = vshll.u32 %v1848, 16
      %v1984 = vrot.slane %v1982, 1
      %v1985 = vsel %vm1304, %v1980, %v1984
      %v1987 = vshrl.u32 %v1801, 16
      %v1989 = vshll.u32 %v1801, 16
      %v1991 = vrot.slane %v1989, 1
      %v1992 = vor.u32 %v1987, %v1991
      %v1994 = vshll.u32 %v1849, 16
      %v1996 = vrot.slane %v1994, 1
      %v1997 = vsel %vm1304, %v1992, %v1996
      %v1999 = vshrl.u32 %v1802, 16
      %v2001 = vshll.u32 %v1802, 16
      %v2003 = vrot.slane %v2001, 1
      %v2004 = vor.u32 %v1999, %v2003
      %v2006 = vshll.u32 %v1850, 16
      %v2008 = vrot.slane %v2006, 1
      %v2009 = vsel %vm1304, %v2004, %v2008
      %v2011 = vshrl.u32 %v1803, 16
      %v2013 = vshll.u32 %v1803, 16
      %v2015 = vrot.slane %v2013, 1
      %v2016 = vor.u32 %v2011, %v2015
      %v2018 = vshll.u32 %v1851, 16
      %v2020 = vrot.slane %v2018, 1
      %v2021 = vsel %vm1304, %v2016, %v2020
      %v2023 = vshrl.u32 %v1804, 16
      %v2025 = vshll.u32 %v1804, 16
      %v2027 = vrot.slane %v2025, 1
      %v2028 = vor.u32 %v2023, %v2027
      %v2030 = vshll.u32 %v1852, 16
      %v2032 = vrot.slane %v2030, 1
      %v2033 = vsel %vm1304, %v2028, %v2032
      %v2035 = vshrl.u32 %v1805, 16
      %v2037 = vshll.u32 %v1805, 16
      %v2039 = vrot.slane %v2037, 1
      %v2040 = vor.u32 %v2035, %v2039
      %v2042 = vshll.u32 %v1853, 16
      %v2044 = vrot.slane %v2042, 1
      %v2045 = vsel %vm1304, %v2040, %v2044
      %2046 = vrot.lane.b32.xlu0 %v1865, 4
      %v2047 = vpop.permute.xlu0 %2046
      %2048 = vrot.lane.b32.xlu0 %v1877, 4
      %v2049 = vpop.permute.xlu0 %2048
      %2050 = vrot.lane.b32.xlu0 %v1889, 4
      %v2051 = vpop.permute.xlu0 %2050
      %2052 = vrot.lane.b32.xlu0 %v1901, 4
      %v2053 = vpop.permute.xlu0 %2052
      %2054 = vrot.lane.b32.xlu0 %v1913, 4
      %v2055 = vpop.permute.xlu0 %2054
      %2056 = vrot.lane.b32.xlu0 %v1925, 4
      %v2057 = vpop.permute.xlu0 %2056
      %2058 = vrot.lane.b32.xlu0 %v1937, 4
      %v2059 = vpop.permute.xlu0 %2058
      %2060 = vrot.lane.b32.xlu0 %v1949, 4
      %v2061 = vpop.permute.xlu0 %2060
      %2062 = vrot.lane.b32.xlu0 %v1961, 4
      %v2063 = vpop.permute.xlu0 %2062
      %2064 = vrot.lane.b32.xlu0 %v1973, 4
      %v2065 = vpop.permute.xlu0 %2064
      %2066 = vrot.lane.b32.xlu0 %v1985, 4
      %v2067 = vpop.permute.xlu0 %2066
      %2068 = vrot.lane.b32.xlu0 %v1997, 4
      %v2069 = vpop.permute.xlu0 %2068
      %2070 = vrot.lane.b32.xlu0 %v2009, 4
      %v2071 = vpop.permute.xlu0 %2070
      %2072 = vrot.lane.b32.xlu0 %v2021, 4
      %v2073 = vpop.permute.xlu0 %2072
      %2074 = vrot.lane.b32.xlu0 %v2033, 4
      %v2075 = vpop.permute.xlu0 %2074
      %2076 = vrot.lane.b32.xlu0 %v2045, 4
      %v2077 = vpop.permute.xlu0 %2076
      %v2078 = vrot.slane %v1790, 1
      %v2079 = vrot.slane %v1838, 1
      %v2080 = vsel %vm1529, %v2078, %v2079
      %v2081 = vrot.slane %v1791, 1
      %v2082 = vrot.slane %v1839, 1
      %v2083 = vsel %vm1529, %v2081, %v2082
      %v2084 = vrot.slane %v1792, 1
      %v2085 = vrot.slane %v1840, 1
      %v2086 = vsel %vm1529, %v2084, %v2085
      %v2087 = vrot.slane %v1793, 1
      %v2088 = vrot.slane %v1841, 1
      %v2089 = vsel %vm1529, %v2087, %v2088
      %v2090 = vrot.slane %v1794, 1
      %v2091 = vrot.slane %v1842, 1
      %v2092 = vsel %vm1529, %v2090, %v2091
      %v2093 = vrot.slane %v1795, 1
      %v2094 = vrot.slane %v1843, 1
      %v2095 = vsel %vm1529, %v2093, %v2094
      %v2096 = vrot.slane %v1796, 1
      %v2097 = vrot.slane %v1844, 1
      %v2098 = vsel %vm1529, %v2096, %v2097
      %v2099 = vrot.slane %v1797, 1
      %v2100 = vrot.slane %v1845, 1
      %v2101 = vsel %vm1529, %v2099, %v2100
      %v2102 = vrot.slane %v1798, 1
      %v2103 = vrot.slane %v1846, 1
      %v2104 = vsel %vm1529, %v2102, %v2103
      %v2105 = vrot.slane %v1799, 1
      %v2106 = vrot.slane %v1847, 1
      %v2107 = vsel %vm1529, %v2105, %v2106
      %v2108 = vrot.slane %v1800, 1
      %v2109 = vrot.slane %v1848, 1
      %v2110 = vsel %vm1529, %v2108, %v2109
      %v2111 = vrot.slane %v1801, 1
      %v2112 = vrot.slane %v1849, 1
      %v2113 = vsel %vm1529, %v2111, %v2112
      %v2114 = vrot.slane %v1802, 1
      %v2115 = vrot.slane %v1850, 1
      %v2116 = vsel %vm1529, %v2114, %v2115
      %v2117 = vrot.slane %v1803, 1
      %v2118 = vrot.slane %v1851, 1
      %v2119 = vsel %vm1529, %v2117, %v2118
      %v2120 = vrot.slane %v1804, 1
      %v2121 = vrot.slane %v1852, 1
      %v2122 = vsel %vm1529, %v2120, %v2121
      %v2123 = vrot.slane %v1805, 1
      %v2124 = vrot.slane %v1853, 1
      %v2125 = vsel %vm1529, %v2123, %v2124
      %2126 = vrot.lane.b32.xlu0 %v2080, 8
      %v2127 = vpop.permute.xlu0 %2126
      %2128 = vrot.lane.b32.xlu0 %v2083, 8
      %v2129 = vpop.permute.xlu0 %2128
      %2130 = vrot.lane.b32.xlu0 %v2086, 8
      %v2131 = vpop.permute.xlu0 %2130
      %2132 = vrot.lane.b32.xlu0 %v2089, 8
      %v2133 = vpop.permute.xlu0 %2132
      %2134 = vrot.lane.b32.xlu0 %v2092, 8
      %v2135 = vpop.permute.xlu0 %2134
      %2136 = vrot.lane.b32.xlu0 %v2095, 8
      %v2137 = vpop.permute.xlu0 %2136
      %2138 = vrot.lane.b32.xlu0 %v2098, 8
      %v2139 = vpop.permute.xlu0 %2138
      %2140 = vrot.lane.b32.xlu0 %v2101, 8
      %v2141 = vpop.permute.xlu0 %2140
      %2142 = vrot.lane.b32.xlu0 %v2104, 8
      %v2143 = vpop.permute.xlu0 %2142
      %2144 = vrot.lane.b32.xlu0 %v2107, 8
      %v2145 = vpop.permute.xlu0 %2144
      %2146 = vrot.lane.b32.xlu0 %v2110, 8
      %v2147 = vpop.permute.xlu0 %2146
      %2148 = vrot.lane.b32.xlu0 %v2113, 8
      %v2149 = vpop.permute.xlu0 %2148
      %2150 = vrot.lane.b32.xlu0 %v2116, 8
      %v2151 = vpop.permute.xlu0 %2150
      %2152 = vrot.lane.b32.xlu0 %v2119, 8
      %v2153 = vpop.permute.xlu0 %2152
      %2154 = vrot.lane.b32.xlu0 %v2122, 8
      %v2155 = vpop.permute.xlu0 %2154
      %2156 = vrot.lane.b32.xlu0 %v2125, 8
      %v2157 = vpop.permute.xlu0 %2156
      %v2159 = vsel %vm1610, %v1790, %v2047
      %v2161 = vsel %vm1610, %v1791, %v2049
      %v2163 = vsel %vm1610, %v1792, %v2051
      %v2165 = vsel %vm1610, %v1793, %v2053
      %v2167 = vsel %vm1610, %v1794, %v2055
      %v2169 = vsel %vm1610, %v1795, %v2057
      %v2171 = vsel %vm1610, %v1796, %v2059
      %v2173 = vsel %vm1610, %v1797, %v2061
      %v2175 = vsel %vm1610, %v1798, %v2063
      %v2177 = vsel %vm1610, %v1799, %v2065
      %v2179 = vsel %vm1610, %v1800, %v2067
      %v2181 = vsel %vm1610, %v1801, %v2069
      %v2183 = vsel %vm1610, %v1802, %v2071
      %v2185 = vsel %vm1610, %v1803, %v2073
      %v2187 = vsel %vm1610, %v1804, %v2075
      %v2189 = vsel %vm1610, %v1805, %v2077
      %v2191 = vsel %vm1643, %v2159, %v2127
      %v2193 = vsel %vm1643, %v2161, %v2129
      %v2195 = vsel %vm1643, %v2163, %v2131
      %v2197 = vsel %vm1643, %v2165, %v2133
      %v2199 = vsel %vm1643, %v2167, %v2135
      %v2201 = vsel %vm1643, %v2169, %v2137
      %v2203 = vsel %vm1643, %v2171, %v2139
      %v2205 = vsel %vm1643, %v2173, %v2141
      %v2207 = vsel %vm1643, %v2175, %v2143
      %v2209 = vsel %vm1643, %v2177, %v2145
      %v2211 = vsel %vm1643, %v2179, %v2147
      %v2213 = vsel %vm1643, %v2181, %v2149
      %v2215 = vsel %vm1643, %v2183, %v2151
      %v2217 = vsel %vm1643, %v2185, %v2153
      %v2219 = vsel %vm1643, %v2187, %v2155
      %v2221 = vsel %vm1643, %v2189, %v2157
      %s2222 = scalar_lea.vmem %s1, 8
      %v2223 = vld [vmem:[%s2222] sm:$0xf]
      %v2224 = vld [vmem:[%s2222 + $0x4] sm:$0x3]
      %v2227 = vunpack.c.l.b16 %v2223
      %v2228 = vunpack.c.l.b16 %v2224
      %v2229 = vpack.c.b16 %v2228, %v2227
      %vm2230 = vcmask 97280
      %v2231 = vsel %vm2230, %v2191, 0
      %v2233 = vsel %vm2230, %v2193, 0
      %v2235 = vsel %vm2230, %v2195, 0
      %v2237 = vsel %vm2230, %v2197, 0
      %v2239 = vsel %vm2230, %v2199, 0
      %v2241 = vsel %vm2230, %v2201, 0
      %v2243 = vsel %vm2230, %v2203, 0
      %v2245 = vsel %vm2230, %v2205, 0
      %v2247 = vsel %vm2230, %v2207, 0
      %v2249 = vsel %vm2230, %v2209, 0
      %v2251 = vsel %vm2230, %v2211, 0
      %v2253 = vsel %vm2230, %v2213, 0
      %v2255 = vsel %vm2230, %v2215, 0
      %v2257 = vsel %vm2230, %v2217, 0
      %v2259 = vsel %vm2230, %v2219, 0
      %v2261 = vsel %vm2230, %v2221, 0
      %vm2263 = vcmask 1045504
      %v2265 = vsel %vm2263, %v2229, 0
      %2267 = vmatprep.subr.bf16.mxu0 0
      %2268 = vmatpush1.bf16.msra.mxu0 0
      %2269 = vmatprep.subr.bf16.mxu0 0
      %2270 = vmatpush1.bf16.msra.mxu0 0
      %2271 = vmatprep.subr.bf16.mxu0 0
      %2272 = vmatpush1.bf16.msra.mxu0 0
      %2273 = vmatprep.subr.bf16.mxu0 0
      %2274 = vmatpush1.bf16.msra.mxu0 0
      %2275 = vmatprep.subr.bf16.mxu0 0
      %2276 = vmatpush1.bf16.msra.mxu0 0
      %2277 = vmatprep.subr.bf16.mxu0 0
      %2278 = vmatpush1.bf16.msra.mxu0 0
      %2279 = vmatprep.subr.bf16.mxu0 0
      %2280 = vmatpush1.bf16.msra.mxu0 0
      %2281 = vmatprep.subr.bf16.mxu0 0
      %2282 = vmatpush1.bf16.msra.mxu0 %v2265
      %2283 = vmatprep.subr.bf16.mxu0 0
      %2284 = vmatpush2.bf16.msra.mxu0 0
      %2285 = vmatprep.subr.bf16.mxu0 0
      %2286 = vmatpush2.bf16.msra.mxu0 0
      %2287 = vmatprep.subr.bf16.mxu0 0
      %2288 = vmatpush2.bf16.msra.mxu0 0
      %2289 = vmatprep.subr.bf16.mxu0 0
      %2290 = vmatpush2.bf16.msra.mxu0 0
      %2291 = vmatprep.subr.bf16.mxu0 0
      %2292 = vmatpush2.bf16.msra.mxu0 0
      %2293 = vmatprep.subr.bf16.mxu0 0
      %2294 = vmatpush2.bf16.msra.mxu0 0
      %2295 = vmatprep.subr.bf16.mxu0 0
      %2296 = vmatpush2.bf16.msra.mxu0 0
      %2297 = vmatprep.subr.bf16.mxu0 0
      %2298 = vmatpush2.bf16.msra.mxu0 0
      %2299 = vmatprep.mubr.bf16.mxu0 0
      %2300 = vmatmul.mubr.bf16.gmra.mxu0 %v2231
      %v2301 = vpop.f32.mrf.mxu0
      %v2302 = vadd.f32 0.0, %v2301
      %v2303 = vpop.f32.mrf.mxu0
      %v2304 = vpop.f32.mrf.mxu0
      %v2305 = vadd.f32 0.0, %v2304
      %v2306 = vpop.f32.mrf.mxu0
      %2307 = vmatprep.mubr.bf16.mxu0 0
      %2308 = vmatmul.mubr.bf16.gmra.mxu0 %v2233
      %v2309 = vpop.f32.mrf.mxu0
      %v2310 = vadd.f32 0.0, %v2309
      %v2311 = vpop.f32.mrf.mxu0
      %v2312 = vpop.f32.mrf.mxu0
      %v2313 = vadd.f32 0.0, %v2312
      %v2314 = vpop.f32.mrf.mxu0
      %2315 = vmatprep.mubr.bf16.mxu0 0
      %2316 = vmatmul.mubr.bf16.gmra.mxu0 %v2235
      %v2317 = vpop.f32.mrf.mxu0
      %v2318 = vadd.f32 0.0, %v2317
      %v2319 = vpop.f32.mrf.mxu0
      %v2320 = vpop.f32.mrf.mxu0
      %v2321 = vadd.f32 0.0, %v2320
      %v2322 = vpop.f32.mrf.mxu0
      %2323 = vmatprep.mubr.bf16.mxu0 0
      %2324 = vmatmul.mubr.bf16.gmra.mxu0 %v2237
      %v2325 = vpop.f32.mrf.mxu0
      %v2326 = vadd.f32 0.0, %v2325
      %v2327 = vpop.f32.mrf.mxu0
      %v2328 = vpop.f32.mrf.mxu0
      %v2329 = vadd.f32 0.0, %v2328
      %v2330 = vpop.f32.mrf.mxu0
      %2331 = vmatprep.mubr.bf16.mxu0 0
      %2332 = vmatmul.mubr.bf16.gmra.mxu0 %v2239
      %v2333 = vpop.f32.mrf.mxu0
      %v2334 = vadd.f32 0.0, %v2333
      %v2335 = vpop.f32.mrf.mxu0
      %v2336 = vpop.f32.mrf.mxu0
      %v2337 = vadd.f32 0.0, %v2336
      %v2338 = vpop.f32.mrf.mxu0
      %2339 = vmatprep.mubr.bf16.mxu0 0
      %2340 = vmatmul.mubr.bf16.gmra.mxu0 %v2241
      %v2341 = vpop.f32.mrf.mxu0
      %v2342 = vadd.f32 0.0, %v2341
      %v2343 = vpop.f32.mrf.mxu0
      %v2344 = vpop.f32.mrf.mxu0
      %v2345 = vadd.f32 0.0, %v2344
      %v2346 = vpop.f32.mrf.mxu0
      %2347 = vmatprep.mubr.bf16.mxu0 0
      %2348 = vmatmul.mubr.bf16.gmra.mxu0 %v2243
      %v2349 = vpop.f32.mrf.mxu0
      %v2350 = vadd.f32 0.0, %v2349
      %v2351 = vpop.f32.mrf.mxu0
      %v2352 = vpop.f32.mrf.mxu0
      %v2353 = vadd.f32 0.0, %v2352
      %v2354 = vpop.f32.mrf.mxu0
      %2355 = vmatprep.mubr.bf16.mxu0 0
      %2356 = vmatmul.mubr.bf16.gmra.mxu0 %v2245
      %v2357 = vpop.f32.mrf.mxu0
      %v2358 = vadd.f32 0.0, %v2357
      %v2359 = vpop.f32.mrf.mxu0
      %v2360 = vpop.f32.mrf.mxu0
      %v2361 = vadd.f32 0.0, %v2360
      %v2362 = vpop.f32.mrf.mxu0
      %2363 = vmatprep.mubr.bf16.mxu0 0
      %2364 = vmatmul.mubr.bf16.gmra.mxu0 %v2247
      %v2365 = vpop.f32.mrf.mxu0
      %v2366 = vadd.f32 0.0, %v2365
      %v2367 = vpop.f32.mrf.mxu0
      %v2368 = vpop.f32.mrf.mxu0
      %v2369 = vadd.f32 0.0, %v2368
      %v2370 = vpop.f32.mrf.mxu0
      %2371 = vmatprep.mubr.bf16.mxu0 0
      %2372 = vmatmul.mubr.bf16.gmra.mxu0 %v2249
      %v2373 = vpop.f32.mrf.mxu0
      %v2374 = vadd.f32 0.0, %v2373
      %v2375 = vpop.f32.mrf.mxu0
      %v2376 = vpop.f32.mrf.mxu0
      %v2377 = vadd.f32 0.0, %v2376
      %v2378 = vpop.f32.mrf.mxu0
      %2379 = vmatprep.mubr.bf16.mxu0 0
      %2380 = vmatmul.mubr.bf16.gmra.mxu0 %v2251
      %v2381 = vpop.f32.mrf.mxu0
      %v2382 = vadd.f32 0.0, %v2381
      %v2383 = vpop.f32.mrf.mxu0
      %v2384 = vpop.f32.mrf.mxu0
      %v2385 = vadd.f32 0.0, %v2384
      %v2386 = vpop.f32.mrf.mxu0
      %2387 = vmatprep.mubr.bf16.mxu0 0
      %2388 = vmatmul.mubr.bf16.gmra.mxu0 %v2253
      %v2389 = vpop.f32.mrf.mxu0
      %v2390 = vadd.f32 0.0, %v2389
      %v2391 = vpop.f32.mrf.mxu0
      %v2392 = vpop.f32.mrf.mxu0
      %v2393 = vadd.f32 0.0, %v2392
      %v2394 = vpop.f32.mrf.mxu0
      %2395 = vmatprep.mubr.bf16.mxu0 0
      %2396 = vmatmul.mubr.bf16.gmra.mxu0 %v2255
      %v2397 = vpop.f32.mrf.mxu0
      %v2398 = vadd.f32 0.0, %v2397
      %v2399 = vpop.f32.mrf.mxu0
      %v2400 = vpop.f32.mrf.mxu0
      %v2401 = vadd.f32 0.0, %v2400
      %v2402 = vpop.f32.mrf.mxu0
      %2403 = vmatprep.mubr.bf16.mxu0 0
      %2404 = vmatmul.mubr.bf16.gmra.mxu0 %v2257
      %v2405 = vpop.f32.mrf.mxu0
      %v2406 = vadd.f32 0.0, %v2405
      %v2407 = vpop.f32.mrf.mxu0
      %v2408 = vpop.f32.mrf.mxu0
      %v2409 = vadd.f32 0.0, %v2408
      %v2410 = vpop.f32.mrf.mxu0
      %2411 = vmatprep.mubr.bf16.mxu0 0
      %2412 = vmatmul.mubr.bf16.gmra.mxu0 %v2259
      %v2413 = vpop.f32.mrf.mxu0
      %v2414 = vadd.f32 0.0, %v2413
      %v2415 = vpop.f32.mrf.mxu0
      %v2416 = vpop.f32.mrf.mxu0
      %v2417 = vadd.f32 0.0, %v2416
      %v2418 = vpop.f32.mrf.mxu0
      %2419 = vmatprep.mubr.bf16.mxu0 0
      %2420 = vmatmul.mubr.bf16.gmra.mxu0 %v2261
      %v2421 = vpop.f32.mrf.mxu0
      %v2422 = vadd.f32 0.0, %v2421
      %v2423 = vpop.f32.mrf.mxu0
      %v2424 = vpop.f32.mrf.mxu0
      %v2425 = vadd.f32 0.0, %v2424
      %v2426 = vpop.f32.mrf.mxu0
      %2427 = vdwg.mxu0
      %v2430 = vunpack.c.l.b16 %v1676
      %v2431 = vunpack.c.l.b16 %v1677
      %v2432 = vpack.c.b16 %v2431, %v2430
      %v2433 = vsel %vm2230, %v1645, 0
      %v2435 = vsel %vm2230, %v1647, 0
      %v2437 = vsel %vm2230, %v1649, 0
      %v2439 = vsel %vm2230, %v1651, 0
      %v2441 = vsel %vm2230, %v1653, 0
      %v2443 = vsel %vm2230, %v1655, 0
      %v2445 = vsel %vm2230, %v1657, 0
      %v2447 = vsel %vm2230, %v1659, 0
      %v2449 = vsel %vm2230, %v1661, 0
      %v2451 = vsel %vm2230, %v1663, 0
      %v2453 = vsel %vm2230, %v1665, 0
      %v2455 = vsel %vm2230, %v1667, 0
      %v2457 = vsel %vm2230, %v1669, 0
      %v2459 = vsel %vm2230, %v1671, 0
      %v2461 = vsel %vm2230, %v1673, 0
      %v2463 = vsel %vm2230, %v1675, 0
      %v2466 = vsel %vm2263, %v2432, 0
      %2468 = vmatprep.subr.bf16.mxu0 0
      %2469 = vmatpush1.bf16.msra.mxu0 0
      %2470 = vmatprep.subr.bf16.mxu0 0
      %2471 = vmatpush1.bf16.msra.mxu0 0
      %2472 = vmatprep.subr.bf16.mxu0 0
      %2473 = vmatpush1.bf16.msra.mxu0 0
      %2474 = vmatprep.subr.bf16.mxu0 0
      %2475 = vmatpush1.bf16.msra.mxu0 0
      %2476 = vmatprep.subr.bf16.mxu0 0
      %2477 = vmatpush1.bf16.msra.mxu0 0
      %2478 = vmatprep.subr.bf16.mxu0 0
      %2479 = vmatpush1.bf16.msra.mxu0 0
      %2480 = vmatprep.subr.bf16.mxu0 0
      %2481 = vmatpush1.bf16.msra.mxu0 0
      %2482 = vmatprep.subr.bf16.mxu0 0
      %2483 = vmatpush1.bf16.msra.mxu0 %v2466
      %2484 = vmatprep.subr.bf16.mxu0 0
      %2485 = vmatpush2.bf16.msra.mxu0 0
      %2486 = vmatprep.subr.bf16.mxu0 0
      %2487 = vmatpush2.bf16.msra.mxu0 0
      %2488 = vmatprep.subr.bf16.mxu0 0
      %2489 = vmatpush2.bf16.msra.mxu0 0
      %2490 = vmatprep.subr.bf16.mxu0 0
      %2491 = vmatpush2.bf16.msra.mxu0 0
      %2492 = vmatprep.subr.bf16.mxu0 0
      %2493 = vmatpush2.bf16.msra.mxu0 0
      %2494 = vmatprep.subr.bf16.mxu0 0
      %2495 = vmatpush2.bf16.msra.mxu0 0
      %2496 = vmatprep.subr.bf16.mxu0 0
      %2497 = vmatpush2.bf16.msra.mxu0 0
      %2498 = vmatprep.subr.bf16.mxu0 0
      %2499 = vmatpush2.bf16.msra.mxu0 0
      %2500 = vmatprep.mubr.bf16.mxu0 0
      %2501 = vmatmul.mubr.bf16.gmra.mxu0 %v2433
      %v2502 = vpop.f32.mrf.mxu0
      %v2503 = vadd.f32 %v2302, %v2502
      %v2504 = vpop.f32.mrf.mxu0
      %v2505 = vpop.f32.mrf.mxu0
      %v2506 = vadd.f32 %v2305, %v2505
      %v2507 = vpop.f32.mrf.mxu0
      %2508 = vmatprep.mubr.bf16.mxu0 0
      %2509 = vmatmul.mubr.bf16.gmra.mxu0 %v2435
      %v2510 = vpop.f32.mrf.mxu0
      %v2511 = vadd.f32 %v2310, %v2510
      %v2512 = vpop.f32.mrf.mxu0
      %v2513 = vpop.f32.mrf.mxu0
      %v2514 = vadd.f32 %v2313, %v2513
      %v2515 = vpop.f32.mrf.mxu0
      %2516 = vmatprep.mubr.bf16.mxu0 0
      %2517 = vmatmul.mubr.bf16.gmra.mxu0 %v2437
      %v2518 = vpop.f32.mrf.mxu0
      %v2519 = vadd.f32 %v2318, %v2518
      %v2520 = vpop.f32.mrf.mxu0
      %v2521 = vpop.f32.mrf.mxu0
      %v2522 = vadd.f32 %v2321, %v2521
      %v2523 = vpop.f32.mrf.mxu0
      %2524 = vmatprep.mubr.bf16.mxu0 0
      %2525 = vmatmul.mubr.bf16.gmra.mxu0 %v2439
      %v2526 = vpop.f32.mrf.mxu0
      %v2527 = vadd.f32 %v2326, %v2526
      %v2528 = vpop.f32.mrf.mxu0
      %v2529 = vpop.f32.mrf.mxu0
      %v2530 = vadd.f32 %v2329, %v2529
      %v2531 = vpop.f32.mrf.mxu0
      %2532 = vmatprep.mubr.bf16.mxu0 0
      %2533 = vmatmul.mubr.bf16.gmra.mxu0 %v2441
      %v2534 = vpop.f32.mrf.mxu0
      %v2535 = vadd.f32 %v2334, %v2534
      %v2536 = vpop.f32.mrf.mxu0
      %v2537 = vpop.f32.mrf.mxu0
      %v2538 = vadd.f32 %v2337, %v2537
      %v2539 = vpop.f32.mrf.mxu0
      %2540 = vmatprep.mubr.bf16.mxu0 0
      %2541 = vmatmul.mubr.bf16.gmra.mxu0 %v2443
      %v2542 = vpop.f32.mrf.mxu0
      %v2543 = vadd.f32 %v2342, %v2542
      %v2544 = vpop.f32.mrf.mxu0
      %v2545 = vpop.f32.mrf.mxu0
      %v2546 = vadd.f32 %v2345, %v2545
      %v2547 = vpop.f32.mrf.mxu0
      %2548 = vmatprep.mubr.bf16.mxu0 0
      %2549 = vmatmul.mubr.bf16.gmra.mxu0 %v2445
      %v2550 = vpop.f32.mrf.mxu0
      %v2551 = vadd.f32 %v2350, %v2550
      %v2552 = vpop.f32.mrf.mxu0
      %v2553 = vpop.f32.mrf.mxu0
      %v2554 = vadd.f32 %v2353, %v2553
      %v2555 = vpop.f32.mrf.mxu0
      %2556 = vmatprep.mubr.bf16.mxu0 0
      %2557 = vmatmul.mubr.bf16.gmra.mxu0 %v2447
      %v2558 = vpop.f32.mrf.mxu0
      %v2559 = vadd.f32 %v2358, %v2558
      %v2560 = vpop.f32.mrf.mxu0
      %v2561 = vpop.f32.mrf.mxu0
      %v2562 = vadd.f32 %v2361, %v2561
      %v2563 = vpop.f32.mrf.mxu0
      %2564 = vmatprep.mubr.bf16.mxu0 0
      %2565 = vmatmul.mubr.bf16.gmra.mxu0 %v2449
      %v2566 = vpop.f32.mrf.mxu0
      %v2567 = vadd.f32 %v2366, %v2566
      %v2568 = vpop.f32.mrf.mxu0
      %v2569 = vpop.f32.mrf.mxu0
      %v2570 = vadd.f32 %v2369, %v2569
      %v2571 = vpop.f32.mrf.mxu0
      %2572 = vmatprep.mubr.bf16.mxu0 0
      %2573 = vmatmul.mubr.bf16.gmra.mxu0 %v2451
      %v2574 = vpop.f32.mrf.mxu0
      %v2575 = vadd.f32 %v2374, %v2574
      %v2576 = vpop.f32.mrf.mxu0
      %v2577 = vpop.f32.mrf.mxu0
      %v2578 = vadd.f32 %v2377, %v2577
      %v2579 = vpop.f32.mrf.mxu0
      %2580 = vmatprep.mubr.bf16.mxu0 0
      %2581 = vmatmul.mubr.bf16.gmra.mxu0 %v2453
      %v2582 = vpop.f32.mrf.mxu0
      %v2583 = vadd.f32 %v2382, %v2582
      %v2584 = vpop.f32.mrf.mxu0
      %v2585 = vpop.f32.mrf.mxu0
      %v2586 = vadd.f32 %v2385, %v2585
      %v2587 = vpop.f32.mrf.mxu0
      %2588 = vmatprep.mubr.bf16.mxu0 0
      %2589 = vmatmul.mubr.bf16.gmra.mxu0 %v2455
      %v2590 = vpop.f32.mrf.mxu0
      %v2591 = vadd.f32 %v2390, %v2590
      %v2592 = vpop.f32.mrf.mxu0
      %v2593 = vpop.f32.mrf.mxu0
      %v2594 = vadd.f32 %v2393, %v2593
      %v2595 = vpop.f32.mrf.mxu0
      %2596 = vmatprep.mubr.bf16.mxu0 0
      %2597 = vmatmul.mubr.bf16.gmra.mxu0 %v2457
      %v2598 = vpop.f32.mrf.mxu0
      %v2599 = vadd.f32 %v2398, %v2598
      %v2600 = vpop.f32.mrf.mxu0
      %v2601 = vpop.f32.mrf.mxu0
      %v2602 = vadd.f32 %v2401, %v2601
      %v2603 = vpop.f32.mrf.mxu0
      %2604 = vmatprep.mubr.bf16.mxu0 0
      %2605 = vmatmul.mubr.bf16.gmra.mxu0 %v2459
      %v2606 = vpop.f32.mrf.mxu0
      %v2607 = vadd.f32 %v2406, %v2606
      %v2608 = vpop.f32.mrf.mxu0
      %v2609 = vpop.f32.mrf.mxu0
      %v2610 = vadd.f32 %v2409, %v2609
      %v2611 = vpop.f32.mrf.mxu0
      %2612 = vmatprep.mubr.bf16.mxu0 0
      %2613 = vmatmul.mubr.bf16.gmra.mxu0 %v2461
      %v2614 = vpop.f32.mrf.mxu0
      %v2615 = vadd.f32 %v2414, %v2614
      %v2616 = vpop.f32.mrf.mxu0
      %v2617 = vpop.f32.mrf.mxu0
      %v2618 = vadd.f32 %v2417, %v2617
      %v2619 = vpop.f32.mrf.mxu0
      %2620 = vmatprep.mubr.bf16.mxu0 0
      %2621 = vmatmul.mubr.bf16.gmra.mxu0 %v2463
      %v2622 = vpop.f32.mrf.mxu0
      %v2623 = vadd.f32 %v2422, %v2622
      %v2624 = vpop.f32.mrf.mxu0
      %v2625 = vpop.f32.mrf.mxu0
      %v2626 = vadd.f32 %v2425, %v2625
      %v2627 = vpop.f32.mrf.mxu0
      %2628 = vdwg.mxu0
      %s2629 = scalar_lea.vmem [#allocation2], 24
      %v2630 = vld [vmem:[%s2629] sm:$0xf]
      %v2631 = vld [vmem:[%s2629 + $0x4] sm:$0xf]
      %v2632 = vld [vmem:[%s2629 + $0x8] sm:$0x1]
      %v2633 = vld [vmem:[%s2629 + $0xc] sm:$0xf]
      %v2634 = vld [vmem:[%s2629 + $0x10] sm:$0xf]
      %v2635 = vld [vmem:[%s2629 + $0x14] sm:$0x1]
      %v2636 = vld [vmem:[%s2629 + $0x18] sm:$0xf]
      %v2637 = vld [vmem:[%s2629 + $0x1c] sm:$0xf]
      %v2638 = vld [vmem:[%s2629 + $0x20] sm:$0x1]
      %v2639 = vld [vmem:[%s2629 + $0x24] sm:$0xf]
      %v2640 = vld [vmem:[%s2629 + $0x28] sm:$0xf]
      %v2641 = vld [vmem:[%s2629 + $0x2c] sm:$0x1]
      %v2642 = vld [vmem:[%s2629 + $0x30] sm:$0xf]
      %v2643 = vld [vmem:[%s2629 + $0x34] sm:$0xf]
      %v2644 = vld [vmem:[%s2629 + $0x38] sm:$0x1]
      %v2645 = vld [vmem:[%s2629 + $0x3c] sm:$0xf]
      %v2646 = vld [vmem:[%s2629 + $0x40] sm:$0xf]
      %v2647 = vld [vmem:[%s2629 + $0x44] sm:$0x1]
      %v2648 = vld [vmem:[%s2629 + $0x48] sm:$0xf]
      %v2649 = vld [vmem:[%s2629 + $0x4c] sm:$0xf]
      %v2650 = vld [vmem:[%s2629 + $0x50] sm:$0x1]
      %v2651 = vld [vmem:[%s2629 + $0x54] sm:$0xf]
      %v2652 = vld [vmem:[%s2629 + $0x58] sm:$0xf]
      %v2653 = vld [vmem:[%s2629 + $0x5c] sm:$0x1]
      %v2654 = vld [vmem:[%s2629 + $0x60] sm:$0xf]
      %v2655 = vld [vmem:[%s2629 + $0x64] sm:$0xf]
      %v2656 = vld [vmem:[%s2629 + $0x68] sm:$0x1]
      %v2657 = vld [vmem:[%s2629 + $0x6c] sm:$0xf]
      %v2658 = vld [vmem:[%s2629 + $0x70] sm:$0xf]
      %v2659 = vld [vmem:[%s2629 + $0x74] sm:$0x1]
      %v2660 = vld [vmem:[%s2629 + $0x78] sm:$0xf]
      %v2661 = vld [vmem:[%s2629 + $0x7c] sm:$0xf]
      %v2662 = vld [vmem:[%s2629 + $0x80] sm:$0x1]
      %v2663 = vld [vmem:[%s2629 + $0x84] sm:$0xf]
      %v2664 = vld [vmem:[%s2629 + $0x88] sm:$0xf]
      %v2665 = vld [vmem:[%s2629 + $0x8c] sm:$0x1]
      %v2666 = vld [vmem:[%s2629 + $0x90] sm:$0xf]
      %v2667 = vld [vmem:[%s2629 + $0x94] sm:$0xf]
      %v2668 = vld [vmem:[%s2629 + $0x98] sm:$0x1]
      %v2669 = vld [vmem:[%s2629 + $0x9c] sm:$0xf]
      %v2670 = vld [vmem:[%s2629 + $0xa0] sm:$0xf]
      %v2671 = vld [vmem:[%s2629 + $0xa4] sm:$0x1]
      %v2672 = vld [vmem:[%s2629 + $0xa8] sm:$0xf]
      %v2673 = vld [vmem:[%s2629 + $0xac] sm:$0xf]
      %v2674 = vld [vmem:[%s2629 + $0xb0] sm:$0x1]
      %v2675 = vld [vmem:[%s2629 + $0xb4] sm:$0xf]
      %v2676 = vld [vmem:[%s2629 + $0xb8] sm:$0xf]
      %v2677 = vld [vmem:[%s2629 + $0xbc] sm:$0x1]
      %v2710 = vunpack.c.l.b16 %v2630
      %v2711 = vunpack.c.l.b16 %v2631
      %v2712 = vunpack.c.l.b16 %v2633
      %v2713 = vunpack.c.l.b16 %v2634
      %v2714 = vunpack.c.l.b16 %v2636
      %v2715 = vunpack.c.l.b16 %v2637
      %v2716 = vunpack.c.l.b16 %v2639
      %v2717 = vunpack.c.l.b16 %v2640
      %v2718 = vunpack.c.l.b16 %v2642
      %v2719 = vunpack.c.l.b16 %v2643
      %v2720 = vunpack.c.l.b16 %v2645
      %v2721 = vunpack.c.l.b16 %v2646
      %v2722 = vunpack.c.l.b16 %v2648
      %v2723 = vunpack.c.l.b16 %v2649
      %v2724 = vunpack.c.l.b16 %v2651
      %v2725 = vunpack.c.l.b16 %v2652
      %v2726 = vunpack.c.l.b16 %v2654
      %v2727 = vunpack.c.l.b16 %v2655
      %v2728 = vunpack.c.l.b16 %v2657
      %v2729 = vunpack.c.l.b16 %v2658
      %v2730 = vunpack.c.l.b16 %v2660
      %v2731 = vunpack.c.l.b16 %v2661
      %v2732 = vunpack.c.l.b16 %v2663
      %v2733 = vunpack.c.l.b16 %v2664
      %v2734 = vunpack.c.l.b16 %v2666
      %v2735 = vunpack.c.l.b16 %v2667
      %v2736 = vunpack.c.l.b16 %v2669
      %v2737 = vunpack.c.l.b16 %v2670
      %v2738 = vunpack.c.l.b16 %v2672
      %v2739 = vunpack.c.l.b16 %v2673
      %v2740 = vunpack.c.l.b16 %v2675
      %v2741 = vunpack.c.l.b16 %v2676
      %v2742 = vpack.c.b16 %v2711, %v2710
      %v2743 = vpack.c.b16 %v2713, %v2712
      %v2744 = vpack.c.b16 %v2715, %v2714
      %v2745 = vpack.c.b16 %v2717, %v2716
      %v2746 = vpack.c.b16 %v2719, %v2718
      %v2747 = vpack.c.b16 %v2721, %v2720
      %v2748 = vpack.c.b16 %v2723, %v2722
      %v2749 = vpack.c.b16 %v2725, %v2724
      %v2750 = vpack.c.b16 %v2727, %v2726
      %v2751 = vpack.c.b16 %v2729, %v2728
      %v2752 = vpack.c.b16 %v2731, %v2730
      %v2753 = vpack.c.b16 %v2733, %v2732
      %v2754 = vpack.c.b16 %v2735, %v2734
      %v2755 = vpack.c.b16 %v2737, %v2736
      %v2756 = vpack.c.b16 %v2739, %v2738
      %v2757 = vpack.c.b16 %v2741, %v2740
      %v2774 = vunpack.c.l.b16 %v2632
      %v2775 = vunpack.c.l.b16 %v2635
      %v2776 = vunpack.c.l.b16 %v2638
      %v2777 = vunpack.c.l.b16 %v2641
      %v2778 = vunpack.c.l.b16 %v2644
      %v2779 = vunpack.c.l.b16 %v2647
      %v2780 = vunpack.c.l.b16 %v2650
      %v2781 = vunpack.c.l.b16 %v2653
      %v2782 = vunpack.c.l.b16 %v2656
      %v2783 = vunpack.c.l.b16 %v2659
      %v2784 = vunpack.c.l.b16 %v2662
      %v2785 = vunpack.c.l.b16 %v2665
      %v2786 = vunpack.c.l.b16 %v2668
      %v2787 = vunpack.c.l.b16 %v2671
      %v2788 = vunpack.c.l.b16 %v2674
      %v2789 = vunpack.c.l.b16 %v2677
      %v2790 = vpack.c.b16 %v2774, %v2774
      %v2791 = vpack.c.b16 %v2775, %v2775
      %v2792 = vpack.c.b16 %v2776, %v2776
      %v2793 = vpack.c.b16 %v2777, %v2777
      %v2794 = vpack.c.b16 %v2778, %v2778
      %v2795 = vpack.c.b16 %v2779, %v2779
      %v2796 = vpack.c.b16 %v2780, %v2780
      %v2797 = vpack.c.b16 %v2781, %v2781
      %v2798 = vpack.c.b16 %v2782, %v2782
      %v2799 = vpack.c.b16 %v2783, %v2783
      %v2800 = vpack.c.b16 %v2784, %v2784
      %v2801 = vpack.c.b16 %v2785, %v2785
      %v2802 = vpack.c.b16 %v2786, %v2786
      %v2803 = vpack.c.b16 %v2787, %v2787
      %v2804 = vpack.c.b16 %v2788, %v2788
      %v2805 = vpack.c.b16 %v2789, %v2789
      %v2807 = vshrl.u32 %v2742, 16
      %v2809 = vshll.u32 %v2742, 16
      %v2811 = vrot.slane %v2809, 1
      %v2812 = vor.u32 %v2807, %v2811
      %v2814 = vshll.u32 %v2790, 16
      %v2816 = vrot.slane %v2814, 1
      %v2817 = vsel %vm1304, %v2812, %v2816
      %v2819 = vshrl.u32 %v2743, 16
      %v2821 = vshll.u32 %v2743, 16
      %v2823 = vrot.slane %v2821, 1
      %v2824 = vor.u32 %v2819, %v2823
      %v2826 = vshll.u32 %v2791, 16
      %v2828 = vrot.slane %v2826, 1
      %v2829 = vsel %vm1304, %v2824, %v2828
      %v2831 = vshrl.u32 %v2744, 16
      %v2833 = vshll.u32 %v2744, 16
      %v2835 = vrot.slane %v2833, 1
      %v2836 = vor.u32 %v2831, %v2835
      %v2838 = vshll.u32 %v2792, 16
      %v2840 = vrot.slane %v2838, 1
      %v2841 = vsel %vm1304, %v2836, %v2840
      %v2843 = vshrl.u32 %v2745, 16
      %v2845 = vshll.u32 %v2745, 16
      %v2847 = vrot.slane %v2845, 1
      %v2848 = vor.u32 %v2843, %v2847
      %v2850 = vshll.u32 %v2793, 16
      %v2852 = vrot.slane %v2850, 1
      %v2853 = vsel %vm1304, %v2848, %v2852
      %v2855 = vshrl.u32 %v2746, 16
      %v2857 = vshll.u32 %v2746, 16
      %v2859 = vrot.slane %v2857, 1
      %v2860 = vor.u32 %v2855, %v2859
      %v2862 = vshll.u32 %v2794, 16
      %v2864 = vrot.slane %v2862, 1
      %v2865 = vsel %vm1304, %v2860, %v2864
      %v2867 = vshrl.u32 %v2747, 16
      %v2869 = vshll.u32 %v2747, 16
      %v2871 = vrot.slane %v2869, 1
      %v2872 = vor.u32 %v2867, %v2871
      %v2874 = vshll.u32 %v2795, 16
      %v2876 = vrot.slane %v2874, 1
      %v2877 = vsel %vm1304, %v2872, %v2876
      %v2879 = vshrl.u32 %v2748, 16
      %v2881 = vshll.u32 %v2748, 16
      %v2883 = vrot.slane %v2881, 1
      %v2884 = vor.u32 %v2879, %v2883
      %v2886 = vshll.u32 %v2796, 16
      %v2888 = vrot.slane %v2886, 1
      %v2889 = vsel %vm1304, %v2884, %v2888
      %v2891 = vshrl.u32 %v2749, 16
      %v2893 = vshll.u32 %v2749, 16
      %v2895 = vrot.slane %v2893, 1
      %v2896 = vor.u32 %v2891, %v2895
      %v2898 = vshll.u32 %v2797, 16
      %v2900 = vrot.slane %v2898, 1
      %v2901 = vsel %vm1304, %v2896, %v2900
      %v2903 = vshrl.u32 %v2750, 16
      %v2905 = vshll.u32 %v2750, 16
      %v2907 = vrot.slane %v2905, 1
      %v2908 = vor.u32 %v2903, %v2907
      %v2910 = vshll.u32 %v2798, 16
      %v2912 = vrot.slane %v2910, 1
      %v2913 = vsel %vm1304, %v2908, %v2912
      %v2915 = vshrl.u32 %v2751, 16
      %v2917 = vshll.u32 %v2751, 16
      %v2919 = vrot.slane %v2917, 1
      %v2920 = vor.u32 %v2915, %v2919
      %v2922 = vshll.u32 %v2799, 16
      %v2924 = vrot.slane %v2922, 1
      %v2925 = vsel %vm1304, %v2920, %v2924
      %v2927 = vshrl.u32 %v2752, 16
      %v2929 = vshll.u32 %v2752, 16
      %v2931 = vrot.slane %v2929, 1
      %v2932 = vor.u32 %v2927, %v2931
      %v2934 = vshll.u32 %v2800, 16
      %v2936 = vrot.slane %v2934, 1
      %v2937 = vsel %vm1304, %v2932, %v2936
      %v2939 = vshrl.u32 %v2753, 16
      %v2941 = vshll.u32 %v2753, 16
      %v2943 = vrot.slane %v2941, 1
      %v2944 = vor.u32 %v2939, %v2943
      %v2946 = vshll.u32 %v2801, 16
      %v2948 = vrot.slane %v2946, 1
      %v2949 = vsel %vm1304, %v2944, %v2948
      %v2951 = vshrl.u32 %v2754, 16
      %v2953 = vshll.u32 %v2754, 16
      %v2955 = vrot.slane %v2953, 1
      %v2956 = vor.u32 %v2951, %v2955
      %v2958 = vshll.u32 %v2802, 16
      %v2960 = vrot.slane %v2958, 1
      %v2961 = vsel %vm1304, %v2956, %v2960
      %v2963 = vshrl.u32 %v2755, 16
      %v2965 = vshll.u32 %v2755, 16
      %v2967 = vrot.slane %v2965, 1
      %v2968 = vor.u32 %v2963, %v2967
      %v2970 = vshll.u32 %v2803, 16
      %v2972 = vrot.slane %v2970, 1
      %v2973 = vsel %vm1304, %v2968, %v2972
      %v2975 = vshrl.u32 %v2756, 16
      %v2977 = vshll.u32 %v2756, 16
      %v2979 = vrot.slane %v2977, 1
      %v2980 = vor.u32 %v2975, %v2979
      %v2982 = vshll.u32 %v2804, 16
      %v2984 = vrot.slane %v2982, 1
      %v2985 = vsel %vm1304, %v2980, %v2984
      %v2987 = vshrl.u32 %v2757, 16
      %v2989 = vshll.u32 %v2757, 16
      %v2991 = vrot.slane %v2989, 1
      %v2992 = vor.u32 %v2987, %v2991
      %v2994 = vshll.u32 %v2805, 16
      %v2996 = vrot.slane %v2994, 1
      %v2997 = vsel %vm1304, %v2992, %v2996
      %2998 = vrot.lane.b32.xlu0 %v2817, 4
      %v2999 = vpop.permute.xlu0 %2998
      %3000 = vrot.lane.b32.xlu0 %v2829, 4
      %v3001 = vpop.permute.xlu0 %3000
      %3002 = vrot.lane.b32.xlu0 %v2841, 4
      %v3003 = vpop.permute.xlu0 %3002
      %3004 = vrot.lane.b32.xlu0 %v2853, 4
      %v3005 = vpop.permute.xlu0 %3004
      %3006 = vrot.lane.b32.xlu0 %v2865, 4
      %v3007 = vpop.permute.xlu0 %3006
      %3008 = vrot.lane.b32.xlu0 %v2877, 4
      %v3009 = vpop.permute.xlu0 %3008
      %3010 = vrot.lane.b32.xlu0 %v2889, 4
      %v3011 = vpop.permute.xlu0 %3010
      %3012 = vrot.lane.b32.xlu0 %v2901, 4
      %v3013 = vpop.permute.xlu0 %3012
      %3014 = vrot.lane.b32.xlu0 %v2913, 4
      %v3015 = vpop.permute.xlu0 %3014
      %3016 = vrot.lane.b32.xlu0 %v2925, 4
      %v3017 = vpop.permute.xlu0 %3016
      %3018 = vrot.lane.b32.xlu0 %v2937, 4
      %v3019 = vpop.permute.xlu0 %3018
      %3020 = vrot.lane.b32.xlu0 %v2949, 4
      %v3021 = vpop.permute.xlu0 %3020
      %3022 = vrot.lane.b32.xlu0 %v2961, 4
      %v3023 = vpop.permute.xlu0 %3022
      %3024 = vrot.lane.b32.xlu0 %v2973, 4
      %v3025 = vpop.permute.xlu0 %3024
      %3026 = vrot.lane.b32.xlu0 %v2985, 4
      %v3027 = vpop.permute.xlu0 %3026
      %3028 = vrot.lane.b32.xlu0 %v2997, 4
      %v3029 = vpop.permute.xlu0 %3028
      %v3030 = vrot.slane %v2742, 1
      %v3031 = vrot.slane %v2790, 1
      %v3032 = vsel %vm1529, %v3030, %v3031
      %v3033 = vrot.slane %v2743, 1
      %v3034 = vrot.slane %v2791, 1
      %v3035 = vsel %vm1529, %v3033, %v3034
      %v3036 = vrot.slane %v2744, 1
      %v3037 = vrot.slane %v2792, 1
      %v3038 = vsel %vm1529, %v3036, %v3037
      %v3039 = vrot.slane %v2745, 1
      %v3040 = vrot.slane %v2793, 1
      %v3041 = vsel %vm1529, %v3039, %v3040
      %v3042 = vrot.slane %v2746, 1
      %v3043 = vrot.slane %v2794, 1
      %v3044 = vsel %vm1529, %v3042, %v3043
      %v3045 = vrot.slane %v2747, 1
      %v3046 = vrot.slane %v2795, 1
      %v3047 = vsel %vm1529, %v3045, %v3046
      %v3048 = vrot.slane %v2748, 1
      %v3049 = vrot.slane %v2796, 1
      %v3050 = vsel %vm1529, %v3048, %v3049
      %v3051 = vrot.slane %v2749, 1
      %v3052 = vrot.slane %v2797, 1
      %v3053 = vsel %vm1529, %v3051, %v3052
      %v3054 = vrot.slane %v2750, 1
      %v3055 = vrot.slane %v2798, 1
      %v3056 = vsel %vm1529, %v3054, %v3055
      %v3057 = vrot.slane %v2751, 1
      %v3058 = vrot.slane %v2799, 1
      %v3059 = vsel %vm1529, %v3057, %v3058
      %v3060 = vrot.slane %v2752, 1
      %v3061 = vrot.slane %v2800, 1
      %v3062 = vsel %vm1529, %v3060, %v3061
      %v3063 = vrot.slane %v2753, 1
      %v3064 = vrot.slane %v2801, 1
      %v3065 = vsel %vm1529, %v3063, %v3064
      %v3066 = vrot.slane %v2754, 1
      %v3067 = vrot.slane %v2802, 1
      %v3068 = vsel %vm1529, %v3066, %v3067
      %v3069 = vrot.slane %v2755, 1
      %v3070 = vrot.slane %v2803, 1
      %v3071 = vsel %vm1529, %v3069, %v3070
      %v3072 = vrot.slane %v2756, 1
      %v3073 = vrot.slane %v2804, 1
      %v3074 = vsel %vm1529, %v3072, %v3073
      %v3075 = vrot.slane %v2757, 1
      %v3076 = vrot.slane %v2805, 1
      %v3077 = vsel %vm1529, %v3075, %v3076
      %3078 = vrot.lane.b32.xlu0 %v3032, 8
      %v3079 = vpop.permute.xlu0 %3078
      %3080 = vrot.lane.b32.xlu0 %v3035, 8
      %v3081 = vpop.permute.xlu0 %3080
      %3082 = vrot.lane.b32.xlu0 %v3038, 8
      %v3083 = vpop.permute.xlu0 %3082
      %3084 = vrot.lane.b32.xlu0 %v3041, 8
      %v3085 = vpop.permute.xlu0 %3084
      %3086 = vrot.lane.b32.xlu0 %v3044, 8
      %v3087 = vpop.permute.xlu0 %3086
      %3088 = vrot.lane.b32.xlu0 %v3047, 8
      %v3089 = vpop.permute.xlu0 %3088
      %3090 = vrot.lane.b32.xlu0 %v3050, 8
      %v3091 = vpop.permute.xlu0 %3090
      %3092 = vrot.lane.b32.xlu0 %v3053, 8
      %v3093 = vpop.permute.xlu0 %3092
      %3094 = vrot.lane.b32.xlu0 %v3056, 8
      %v3095 = vpop.permute.xlu0 %3094
      %3096 = vrot.lane.b32.xlu0 %v3059, 8
      %v3097 = vpop.permute.xlu0 %3096
      %3098 = vrot.lane.b32.xlu0 %v3062, 8
      %v3099 = vpop.permute.xlu0 %3098
      %3100 = vrot.lane.b32.xlu0 %v3065, 8
      %v3101 = vpop.permute.xlu0 %3100
      %3102 = vrot.lane.b32.xlu0 %v3068, 8
      %v3103 = vpop.permute.xlu0 %3102
      %3104 = vrot.lane.b32.xlu0 %v3071, 8
      %v3105 = vpop.permute.xlu0 %3104
      %3106 = vrot.lane.b32.xlu0 %v3074, 8
      %v3107 = vpop.permute.xlu0 %3106
      %3108 = vrot.lane.b32.xlu0 %v3077, 8
      %v3109 = vpop.permute.xlu0 %3108
      %v3111 = vsel %vm1610, %v2742, %v2999
      %v3113 = vsel %vm1610, %v2743, %v3001
      %v3115 = vsel %vm1610, %v2744, %v3003
      %v3117 = vsel %vm1610, %v2745, %v3005
      %v3119 = vsel %vm1610, %v2746, %v3007
      %v3121 = vsel %vm1610, %v2747, %v3009
      %v3123 = vsel %vm1610, %v2748, %v3011
      %v3125 = vsel %vm1610, %v2749, %v3013
      %v3127 = vsel %vm1610, %v2750, %v3015
      %v3129 = vsel %vm1610, %v2751, %v3017
      %v3131 = vsel %vm1610, %v2752, %v3019
      %v3133 = vsel %vm1610, %v2753, %v3021
      %v3135 = vsel %vm1610, %v2754, %v3023
      %v3137 = vsel %vm1610, %v2755, %v3025
      %v3139 = vsel %vm1610, %v2756, %v3027
      %v3141 = vsel %vm1610, %v2757, %v3029
      %v3143 = vsel %vm1643, %v3111, %v3079
      %v3145 = vsel %vm1643, %v3113, %v3081
      %v3147 = vsel %vm1643, %v3115, %v3083
      %v3149 = vsel %vm1643, %v3117, %v3085
      %v3151 = vsel %vm1643, %v3119, %v3087
      %v3153 = vsel %vm1643, %v3121, %v3089
      %v3155 = vsel %vm1643, %v3123, %v3091
      %v3157 = vsel %vm1643, %v3125, %v3093
      %v3159 = vsel %vm1643, %v3127, %v3095
      %v3161 = vsel %vm1643, %v3129, %v3097
      %v3163 = vsel %vm1643, %v3131, %v3099
      %v3165 = vsel %vm1643, %v3133, %v3101
      %v3167 = vsel %vm1643, %v3135, %v3103
      %v3169 = vsel %vm1643, %v3137, %v3105
      %v3171 = vsel %vm1643, %v3139, %v3107
      %v3173 = vsel %vm1643, %v3141, %v3109
      %s3174 = scalar_lea.vmem %s1, 16
      %v3175 = vld [vmem:[%s3174] sm:$0xf]
      %v3176 = vld [vmem:[%s3174 + $0x4] sm:$0x3]
      %v3179 = vunpack.c.l.b16 %v3175
      %v3180 = vunpack.c.l.b16 %v3176
      %v3181 = vpack.c.b16 %v3180, %v3179
      %v3182 = vsel %vm2230, %v3143, 0
      %v3184 = vsel %vm2230, %v3145, 0
      %v3186 = vsel %vm2230, %v3147, 0
      %v3188 = vsel %vm2230, %v3149, 0
      %v3190 = vsel %vm2230, %v3151, 0
      %v3192 = vsel %vm2230, %v3153, 0
      %v3194 = vsel %vm2230, %v3155, 0
      %v3196 = vsel %vm2230, %v3157, 0
      %v3198 = vsel %vm2230, %v3159, 0
      %v3200 = vsel %vm2230, %v3161, 0
      %v3202 = vsel %vm2230, %v3163, 0
      %v3204 = vsel %vm2230, %v3165, 0
      %v3206 = vsel %vm2230, %v3167, 0
      %v3208 = vsel %vm2230, %v3169, 0
      %v3210 = vsel %vm2230, %v3171, 0
      %v3212 = vsel %vm2230, %v3173, 0
      %v3215 = vsel %vm2263, %v3181, 0
      %3217 = vmatprep.subr.bf16.mxu0 0
      %3218 = vmatpush1.bf16.msra.mxu0 0
      %3219 = vmatprep.subr.bf16.mxu0 0
      %3220 = vmatpush1.bf16.msra.mxu0 0
      %3221 = vmatprep.subr.bf16.mxu0 0
      %3222 = vmatpush1.bf16.msra.mxu0 0
      %3223 = vmatprep.subr.bf16.mxu0 0
      %3224 = vmatpush1.bf16.msra.mxu0 0
      %3225 = vmatprep.subr.bf16.mxu0 0
      %3226 = vmatpush1.bf16.msra.mxu0 0
      %3227 = vmatprep.subr.bf16.mxu0 0
      %3228 = vmatpush1.bf16.msra.mxu0 0
      %3229 = vmatprep.subr.bf16.mxu0 0
      %3230 = vmatpush1.bf16.msra.mxu0 0
      %3231 = vmatprep.subr.bf16.mxu0 0
      %3232 = vmatpush1.bf16.msra.mxu0 %v3215
      %3233 = vmatprep.subr.bf16.mxu0 0
      %3234 = vmatpush2.bf16.msra.mxu0 0
      %3235 = vmatprep.subr.bf16.mxu0 0
      %3236 = vmatpush2.bf16.msra.mxu0 0
      %3237 = vmatprep.subr.bf16.mxu0 0
      %3238 = vmatpush2.bf16.msra.mxu0 0
      %3239 = vmatprep.subr.bf16.mxu0 0
      %3240 = vmatpush2.bf16.msra.mxu0 0
      %3241 = vmatprep.subr.bf16.mxu0 0
      %3242 = vmatpush2.bf16.msra.mxu0 0
      %3243 = vmatprep.subr.bf16.mxu0 0
      %3244 = vmatpush2.bf16.msra.mxu0 0
      %3245 = vmatprep.subr.bf16.mxu0 0
      %3246 = vmatpush2.bf16.msra.mxu0 0
      %3247 = vmatprep.subr.bf16.mxu0 0
      %3248 = vmatpush2.bf16.msra.mxu0 0
      %3249 = vmatprep.mubr.bf16.mxu0 0
      %3250 = vmatmul.mubr.bf16.gmra.mxu0 %v3182
      %v3251 = vpop.f32.mrf.mxu0
      %v3252 = vadd.f32 0.0, %v3251
      %v3253 = vpop.f32.mrf.mxu0
      %v3254 = vpop.f32.mrf.mxu0
      %v3255 = vadd.f32 0.0, %v3254
      %v3256 = vpop.f32.mrf.mxu0
      %3257 = vmatprep.mubr.bf16.mxu0 0
      %3258 = vmatmul.mubr.bf16.gmra.mxu0 %v3184
      %v3259 = vpop.f32.mrf.mxu0
      %v3260 = vadd.f32 0.0, %v3259
      %v3261 = vpop.f32.mrf.mxu0
      %v3262 = vpop.f32.mrf.mxu0
      %v3263 = vadd.f32 0.0, %v3262
      %v3264 = vpop.f32.mrf.mxu0
      %3265 = vmatprep.mubr.bf16.mxu0 0
      %3266 = vmatmul.mubr.bf16.gmra.mxu0 %v3186
      %v3267 = vpop.f32.mrf.mxu0
      %v3268 = vadd.f32 0.0, %v3267
      %v3269 = vpop.f32.mrf.mxu0
      %v3270 = vpop.f32.mrf.mxu0
      %v3271 = vadd.f32 0.0, %v3270
      %v3272 = vpop.f32.mrf.mxu0
      %3273 = vmatprep.mubr.bf16.mxu0 0
      %3274 = vmatmul.mubr.bf16.gmra.mxu0 %v3188
      %v3275 = vpop.f32.mrf.mxu0
      %v3276 = vadd.f32 0.0, %v3275
      %v3277 = vpop.f32.mrf.mxu0
      %v3278 = vpop.f32.mrf.mxu0
      %v3279 = vadd.f32 0.0, %v3278
      %v3280 = vpop.f32.mrf.mxu0
      %3281 = vmatprep.mubr.bf16.mxu0 0
      %3282 = vmatmul.mubr.bf16.gmra.mxu0 %v3190
      %v3283 = vpop.f32.mrf.mxu0
      %v3284 = vadd.f32 0.0, %v3283
      %v3285 = vpop.f32.mrf.mxu0
      %v3286 = vpop.f32.mrf.mxu0
      %v3287 = vadd.f32 0.0, %v3286
      %v3288 = vpop.f32.mrf.mxu0
      %3289 = vmatprep.mubr.bf16.mxu0 0
      %3290 = vmatmul.mubr.bf16.gmra.mxu0 %v3192
      %v3291 = vpop.f32.mrf.mxu0
      %v3292 = vadd.f32 0.0, %v3291
      %v3293 = vpop.f32.mrf.mxu0
      %v3294 = vpop.f32.mrf.mxu0
      %v3295 = vadd.f32 0.0, %v3294
      %v3296 = vpop.f32.mrf.mxu0
      %3297 = vmatprep.mubr.bf16.mxu0 0
      %3298 = vmatmul.mubr.bf16.gmra.mxu0 %v3194
      %v3299 = vpop.f32.mrf.mxu0
      %v3300 = vadd.f32 0.0, %v3299
      %v3301 = vpop.f32.mrf.mxu0
      %v3302 = vpop.f32.mrf.mxu0
      %v3303 = vadd.f32 0.0, %v3302
      %v3304 = vpop.f32.mrf.mxu0
      %3305 = vmatprep.mubr.bf16.mxu0 0
      %3306 = vmatmul.mubr.bf16.gmra.mxu0 %v3196
      %v3307 = vpop.f32.mrf.mxu0
      %v3308 = vadd.f32 0.0, %v3307
      %v3309 = vpop.f32.mrf.mxu0
      %v3310 = vpop.f32.mrf.mxu0
      %v3311 = vadd.f32 0.0, %v3310
      %v3312 = vpop.f32.mrf.mxu0
      %3313 = vmatprep.mubr.bf16.mxu0 0
      %3314 = vmatmul.mubr.bf16.gmra.mxu0 %v3198
      %v3315 = vpop.f32.mrf.mxu0
      %v3316 = vadd.f32 0.0, %v3315
      %v3317 = vpop.f32.mrf.mxu0
      %v3318 = vpop.f32.mrf.mxu0
      %v3319 = vadd.f32 0.0, %v3318
      %v3320 = vpop.f32.mrf.mxu0
      %3321 = vmatprep.mubr.bf16.mxu0 0
      %3322 = vmatmul.mubr.bf16.gmra.mxu0 %v3200
      %v3323 = vpop.f32.mrf.mxu0
      %v3324 = vadd.f32 0.0, %v3323
      %v3325 = vpop.f32.mrf.mxu0
      %v3326 = vpop.f32.mrf.mxu0
      %v3327 = vadd.f32 0.0, %v3326
      %v3328 = vpop.f32.mrf.mxu0
      %3329 = vmatprep.mubr.bf16.mxu0 0
      %3330 = vmatmul.mubr.bf16.gmra.mxu0 %v3202
      %v3331 = vpop.f32.mrf.mxu0
      %v3332 = vadd.f32 0.0, %v3331
      %v3333 = vpop.f32.mrf.mxu0
      %v3334 = vpop.f32.mrf.mxu0
      %v3335 = vadd.f32 0.0, %v3334
      %v3336 = vpop.f32.mrf.mxu0
      %3337 = vmatprep.mubr.bf16.mxu0 0
      %3338 = vmatmul.mubr.bf16.gmra.mxu0 %v3204
      %v3339 = vpop.f32.mrf.mxu0
      %v3340 = vadd.f32 0.0, %v3339
      %v3341 = vpop.f32.mrf.mxu0
      %v3342 = vpop.f32.mrf.mxu0
      %v3343 = vadd.f32 0.0, %v3342
      %v3344 = vpop.f32.mrf.mxu0
      %3345 = vmatprep.mubr.bf16.mxu0 0
      %3346 = vmatmul.mubr.bf16.gmra.mxu0 %v3206
      %v3347 = vpop.f32.mrf.mxu0
      %v3348 = vadd.f32 0.0, %v3347
      %v3349 = vpop.f32.mrf.mxu0
      %v3350 = vpop.f32.mrf.mxu0
      %v3351 = vadd.f32 0.0, %v3350
      %v3352 = vpop.f32.mrf.mxu0
      %3353 = vmatprep.mubr.bf16.mxu0 0
      %3354 = vmatmul.mubr.bf16.gmra.mxu0 %v3208
      %v3355 = vpop.f32.mrf.mxu0
      %v3356 = vadd.f32 0.0, %v3355
      %v3357 = vpop.f32.mrf.mxu0
      %v3358 = vpop.f32.mrf.mxu0
      %v3359 = vadd.f32 0.0, %v3358
      %v3360 = vpop.f32.mrf.mxu0
      %3361 = vmatprep.mubr.bf16.mxu0 0
      %3362 = vmatmul.mubr.bf16.gmra.mxu0 %v3210
      %v3363 = vpop.f32.mrf.mxu0
      %v3364 = vadd.f32 0.0, %v3363
      %v3365 = vpop.f32.mrf.mxu0
      %v3366 = vpop.f32.mrf.mxu0
      %v3367 = vadd.f32 0.0, %v3366
      %v3368 = vpop.f32.mrf.mxu0
      %3369 = vmatprep.mubr.bf16.mxu0 0
      %3370 = vmatmul.mubr.bf16.gmra.mxu0 %v3212
      %v3371 = vpop.f32.mrf.mxu0
      %v3372 = vadd.f32 0.0, %v3371
      %v3373 = vpop.f32.mrf.mxu0
      %v3374 = vpop.f32.mrf.mxu0
      %v3375 = vadd.f32 0.0, %v3374
      %v3376 = vpop.f32.mrf.mxu0
      %3377 = vdwg.mxu0
      %v3378 = vadd.f32 %v2503, %v3252
      %v3379 = vadd.f32 %v2506, %v3255
      %v3380 = vadd.f32 %v2511, %v3260
      %v3381 = vadd.f32 %v2514, %v3263
      %v3382 = vadd.f32 %v2519, %v3268
      %v3383 = vadd.f32 %v2522, %v3271
      %v3384 = vadd.f32 %v2527, %v3276
      %v3385 = vadd.f32 %v2530, %v3279
      %v3386 = vadd.f32 %v2535, %v3284
      %v3387 = vadd.f32 %v2538, %v3287
      %v3388 = vadd.f32 %v2543, %v3292
      %v3389 = vadd.f32 %v2546, %v3295
      %v3390 = vadd.f32 %v2551, %v3300
      %v3391 = vadd.f32 %v2554, %v3303
      %v3392 = vadd.f32 %v2559, %v3308
      %v3393 = vadd.f32 %v2562, %v3311
      %v3394 = vadd.f32 %v2567, %v3316
      %v3395 = vadd.f32 %v2570, %v3319
      %v3396 = vadd.f32 %v2575, %v3324
      %v3397 = vadd.f32 %v2578, %v3327
      %v3398 = vadd.f32 %v2583, %v3332
      %v3399 = vadd.f32 %v2586, %v3335
      %v3400 = vadd.f32 %v2591, %v3340
      %v3401 = vadd.f32 %v2594, %v3343
      %v3402 = vadd.f32 %v2599, %v3348
      %v3403 = vadd.f32 %v2602, %v3351
      %v3404 = vadd.f32 %v2607, %v3356
      %v3405 = vadd.f32 %v2610, %v3359
      %v3406 = vadd.f32 %v2615, %v3364
      %v3407 = vadd.f32 %v2618, %v3367
      %v3408 = vadd.f32 %v2623, %v3372
      %v3409 = vadd.f32 %v2626, %v3375
      %v3410 = vsel %vm1610, %v3378, 0.0
      %v3411 = vsel %vm1610, %v3379, 0.0
      %v3412 = vadd.f32 %v3410, %v3411
      %v3413 = vsel %vm1610, %v3380, 0.0
      %v3414 = vadd.f32 %v3412, %v3413
      %v3415 = vsel %vm1610, %v3381, 0.0
      %v3416 = vadd.f32 %v3414, %v3415
      %v3417 = vsel %vm1610, %v3382, 0.0
      %v3418 = vadd.f32 %v3416, %v3417
      %v3419 = vsel %vm1610, %v3383, 0.0
      %v3420 = vadd.f32 %v3418, %v3419
      %v3421 = vsel %vm1610, %v3384, 0.0
      %v3422 = vadd.f32 %v3420, %v3421
      %v3423 = vsel %vm1610, %v3385, 0.0
      %v3424 = vadd.f32 %v3422, %v3423
      %v3425 = vsel %vm1610, %v3386, 0.0
      %v3426 = vadd.f32 %v3424, %v3425
      %v3427 = vsel %vm1610, %v3387, 0.0
      %v3428 = vadd.f32 %v3426, %v3427
      %v3429 = vsel %vm1610, %v3388, 0.0
      %v3430 = vadd.f32 %v3428, %v3429
      %v3431 = vsel %vm1610, %v3389, 0.0
      %v3432 = vadd.f32 %v3430, %v3431
      %v3433 = vsel %vm1610, %v3390, 0.0
      %v3434 = vadd.f32 %v3432, %v3433
      %v3435 = vsel %vm1610, %v3391, 0.0
      %v3436 = vadd.f32 %v3434, %v3435
      %v3437 = vsel %vm1610, %v3392, 0.0
      %v3438 = vadd.f32 %v3436, %v3437
      %v3439 = vsel %vm1610, %v3393, 0.0
      %v3440 = vadd.f32 %v3438, %v3439
      %v3441 = vsel %vm1610, %v3394, 0.0
      %v3442 = vadd.f32 %v3440, %v3441
      %v3443 = vsel %vm1610, %v3395, 0.0
      %v3444 = vadd.f32 %v3442, %v3443
      %v3445 = vsel %vm1610, %v3396, 0.0
      %v3446 = vadd.f32 %v3444, %v3445
      %v3447 = vsel %vm1610, %v3397, 0.0
      %v3448 = vadd.f32 %v3446, %v3447
      %v3449 = vsel %vm1610, %v3398, 0.0
      %v3450 = vadd.f32 %v3448, %v3449
      %v3451 = vsel %vm1610, %v3399, 0.0
      %v3452 = vadd.f32 %v3450, %v3451
      %v3453 = vsel %vm1610, %v3400, 0.0
      %v3454 = vadd.f32 %v3452, %v3453
      %v3455 = vsel %vm1610, %v3401, 0.0
      %v3456 = vadd.f32 %v3454, %v3455
      %v3457 = vsel %vm1610, %v3402, 0.0
      %v3458 = vadd.f32 %v3456, %v3457
      %v3459 = vsel %vm1610, %v3403, 0.0
      %v3460 = vadd.f32 %v3458, %v3459
      %v3461 = vsel %vm1610, %v3404, 0.0
      %v3462 = vadd.f32 %v3460, %v3461
      %v3463 = vsel %vm1610, %v3405, 0.0
      %v3464 = vadd.f32 %v3462, %v3463
      %v3465 = vsel %vm1610, %v3406, 0.0
      %v3466 = vadd.f32 %v3464, %v3465
      %v3467 = vsel %vm1610, %v3407, 0.0
      %v3468 = vadd.f32 %v3466, %v3467
      %v3469 = vsel %vm1610, %v3408, 0.0
      %v3470 = vadd.f32 %v3468, %v3469
      %v3471 = vsel %vm1610, %v3409, 0.0
      %v3472 = vadd.f32 %v3470, %v3471
      %v3473 = vrot.slane %v3472, 4
      %v3474 = vadd.f32 %v3472, %v3473
      %v3475 = vrot.slane %v3474, 2
      %v3476 = vadd.f32 %v3474, %v3475
      %v3477 = vrot.slane %v3476, 1
      %v3478 = vadd.f32 %v3476, %v3477
      %v3479 = vmul.f32 %v3478, 0.00390625
      %v3480 = vsub.f32 %v3378, %v3479
      %v3481 = vsub.f32 %v3379, %v3479
      %v3482 = vsub.f32 %v3380, %v3479
      %v3483 = vsub.f32 %v3381, %v3479
      %v3484 = vsub.f32 %v3382, %v3479
      %v3485 = vsub.f32 %v3383, %v3479
      %v3486 = vsub.f32 %v3384, %v3479
      %v3487 = vsub.f32 %v3385, %v3479
      %v3488 = vsub.f32 %v3386, %v3479
      %v3489 = vsub.f32 %v3387, %v3479
      %v3490 = vsub.f32 %v3388, %v3479
      %v3491 = vsub.f32 %v3389, %v3479
      %v3492 = vsub.f32 %v3390, %v3479
      %v3493 = vsub.f32 %v3391, %v3479
      %v3494 = vsub.f32 %v3392, %v3479
      %v3495 = vsub.f32 %v3393, %v3479
      %v3496 = vsub.f32 %v3394, %v3479
      %v3497 = vsub.f32 %v3395, %v3479
      %v3498 = vsub.f32 %v3396, %v3479
      %v3499 = vsub.f32 %v3397, %v3479
      %v3500 = vsub.f32 %v3398, %v3479
      %v3501 = vsub.f32 %v3399, %v3479
      %v3502 = vsub.f32 %v3400, %v3479
      %v3503 = vsub.f32 %v3401, %v3479
      %v3504 = vsub.f32 %v3402, %v3479
      %v3505 = vsub.f32 %v3403, %v3479
      %v3506 = vsub.f32 %v3404, %v3479
      %v3507 = vsub.f32 %v3405, %v3479
      %v3508 = vsub.f32 %v3406, %v3479
      %v3509 = vsub.f32 %v3407, %v3479
      %v3510 = vsub.f32 %v3408, %v3479
      %v3511 = vsub.f32 %v3409, %v3479
      %v3512 = vmul.f32 %v3480, %v3480
      %v3513 = vmul.f32 %v3481, %v3481
      %v3514 = vmul.f32 %v3482, %v3482
      %v3515 = vmul.f32 %v3483, %v3483
      %v3516 = vmul.f32 %v3484, %v3484
      %v3517 = vmul.f32 %v3485, %v3485
      %v3518 = vmul.f32 %v3486, %v3486
      %v3519 = vmul.f32 %v3487, %v3487
      %v3520 = vmul.f32 %v3488, %v3488
      %v3521 = vmul.f32 %v3489, %v3489
      %v3522 = vmul.f32 %v3490, %v3490
      %v3523 = vmul.f32 %v3491, %v3491
      %v3524 = vmul.f32 %v3492, %v3492
      %v3525 = vmul.f32 %v3493, %v3493
      %v3526 = vmul.f32 %v3494, %v3494
      %v3527 = vmul.f32 %v3495, %v3495
      %v3528 = vmul.f32 %v3496, %v3496
      %v3529 = vmul.f32 %v3497, %v3497
      %v3530 = vmul.f32 %v3498, %v3498
      %v3531 = vmul.f32 %v3499, %v3499
      %v3532 = vmul.f32 %v3500, %v3500
      %v3533 = vmul.f32 %v3501, %v3501
      %v3534 = vmul.f32 %v3502, %v3502
      %v3535 = vmul.f32 %v3503, %v3503
      %v3536 = vmul.f32 %v3504, %v3504
      %v3537 = vmul.f32 %v3505, %v3505
      %v3538 = vmul.f32 %v3506, %v3506
      %v3539 = vmul.f32 %v3507, %v3507
      %v3540 = vmul.f32 %v3508, %v3508
      %v3541 = vmul.f32 %v3509, %v3509
      %v3542 = vmul.f32 %v3510, %v3510
      %v3543 = vmul.f32 %v3511, %v3511
      %v3544 = vsel %vm1610, %v3512, 0.0
      %v3545 = vsel %vm1610, %v3513, 0.0
      %v3546 = vadd.f32 %v3544, %v3545
      %v3547 = vsel %vm1610, %v3514, 0.0
      %v3548 = vadd.f32 %v3546, %v3547
      %v3549 = vsel %vm1610, %v3515, 0.0
      %v3550 = vadd.f32 %v3548, %v3549
      %v3551 = vsel %vm1610, %v3516, 0.0
      %v3552 = vadd.f32 %v3550, %v3551
      %v3553 = vsel %vm1610, %v3517, 0.0
      %v3554 = vadd.f32 %v3552, %v3553
      %v3555 = vsel %vm1610, %v3518, 0.0
      %v3556 = vadd.f32 %v3554, %v3555
      %v3557 = vsel %vm1610, %v3519, 0.0
      %v3558 = vadd.f32 %v3556, %v3557
      %v3559 = vsel %vm1610, %v3520, 0.0
      %v3560 = vadd.f32 %v3558, %v3559
      %v3561 = vsel %vm1610, %v3521, 0.0
      %v3562 = vadd.f32 %v3560, %v3561
      %v3563 = vsel %vm1610, %v3522, 0.0
      %v3564 = vadd.f32 %v3562, %v3563
      %v3565 = vsel %vm1610, %v3523, 0.0
      %v3566 = vadd.f32 %v3564, %v3565
      %v3567 = vsel %vm1610, %v3524, 0.0
      %v3568 = vadd.f32 %v3566, %v3567
      %v3569 = vsel %vm1610, %v3525, 0.0
      %v3570 = vadd.f32 %v3568, %v3569
      %v3571 = vsel %vm1610, %v3526, 0.0
      %v3572 = vadd.f32 %v3570, %v3571
      %v3573 = vsel %vm1610, %v3527, 0.0
      %v3574 = vadd.f32 %v3572, %v3573
      %v3575 = vsel %vm1610, %v3528, 0.0
      %v3576 = vadd.f32 %v3574, %v3575
      %v3577 = vsel %vm1610, %v3529, 0.0
      %v3578 = vadd.f32 %v3576, %v3577
      %v3579 = vsel %vm1610, %v3530, 0.0
      %v3580 = vadd.f32 %v3578, %v3579
      %v3581 = vsel %vm1610, %v3531, 0.0
      %v3582 = vadd.f32 %v3580, %v3581
      %v3583 = vsel %vm1610, %v3532, 0.0
      %v3584 = vadd.f32 %v3582, %v3583
      %v3585 = vsel %vm1610, %v3533, 0.0
      %v3586 = vadd.f32 %v3584, %v3585
      %v3587 = vsel %vm1610, %v3534, 0.0
      %v3588 = vadd.f32 %v3586, %v3587
      %v3589 = vsel %vm1610, %v3535, 0.0
      %v3590 = vadd.f32 %v3588, %v3589
      %v3591 = vsel %vm1610, %v3536, 0.0
      %v3592 = vadd.f32 %v3590, %v3591
      %v3593 = vsel %vm1610, %v3537, 0.0
      %v3594 = vadd.f32 %v3592, %v3593
      %v3595 = vsel %vm1610, %v3538, 0.0
      %v3596 = vadd.f32 %v3594, %v3595
      %v3597 = vsel %vm1610, %v3539, 0.0
      %v3598 = vadd.f32 %v3596, %v3597
      %v3599 = vsel %vm1610, %v3540, 0.0
      %v3600 = vadd.f32 %v3598, %v3599
      %v3601 = vsel %vm1610, %v3541, 0.0
      %v3602 = vadd.f32 %v3600, %v3601
      %v3603 = vsel %vm1610, %v3542, 0.0
      %v3604 = vadd.f32 %v3602, %v3603
      %v3605 = vsel %vm1610, %v3543, 0.0
      %v3606 = vadd.f32 %v3604, %v3605
      %v3607 = vrot.slane %v3606, 4
      %v3608 = vadd.f32 %v3606, %v3607
      %v3609 = vrot.slane %v3608, 2
      %v3610 = vadd.f32 %v3608, %v3609
      %v3611 = vrot.slane %v3610, 1
      %v3612 = vadd.f32 %v3610, %v3611
      %v3613 = vmul.f32 %v3612, 0.00390625
      %v3614 = vadd.f32 %v3613, 1e-05
      %v3615 = vrsqrt.pop %v3614
      %v3616 = vmul.f32 %v3480, %v3615
      %v3617 = vmul.f32 %v3481, %v3615
      %v3618 = vmul.f32 %v3482, %v3615
      %v3619 = vmul.f32 %v3483, %v3615
      %v3620 = vmul.f32 %v3484, %v3615
      %v3621 = vmul.f32 %v3485, %v3615
      %v3622 = vmul.f32 %v3486, %v3615
      %v3623 = vmul.f32 %v3487, %v3615
      %v3624 = vmul.f32 %v3488, %v3615
      %v3625 = vmul.f32 %v3489, %v3615
      %v3626 = vmul.f32 %v3490, %v3615
      %v3627 = vmul.f32 %v3491, %v3615
      %v3628 = vmul.f32 %v3492, %v3615
      %v3629 = vmul.f32 %v3493, %v3615
      %v3630 = vmul.f32 %v3494, %v3615
      %v3631 = vmul.f32 %v3495, %v3615
      %v3632 = vmul.f32 %v3496, %v3615
      %v3633 = vmul.f32 %v3497, %v3615
      %v3634 = vmul.f32 %v3498, %v3615
      %v3635 = vmul.f32 %v3499, %v3615
      %v3636 = vmul.f32 %v3500, %v3615
      %v3637 = vmul.f32 %v3501, %v3615
      %v3638 = vmul.f32 %v3502, %v3615
      %v3639 = vmul.f32 %v3503, %v3615
      %v3640 = vmul.f32 %v3504, %v3615
      %v3641 = vmul.f32 %v3505, %v3615
      %v3642 = vmul.f32 %v3506, %v3615
      %v3643 = vmul.f32 %v3507, %v3615
      %v3644 = vmul.f32 %v3508, %v3615
      %v3645 = vmul.f32 %v3509, %v3615
      %v3646 = vmul.f32 %v3510, %v3615
      %v3647 = vmul.f32 %v3511, %v3615
      %v3648 = vmax.f32 %v3616, 0.0
      %v3649 = vmax.f32 %v3617, 0.0
      %v3650 = vmax.f32 %v3618, 0.0
      %v3651 = vmax.f32 %v3619, 0.0
      %v3652 = vmax.f32 %v3620, 0.0
      %v3653 = vmax.f32 %v3621, 0.0
      %v3654 = vmax.f32 %v3622, 0.0
      %v3655 = vmax.f32 %v3623, 0.0
      %v3656 = vmax.f32 %v3624, 0.0
      %v3657 = vmax.f32 %v3625, 0.0
      %v3658 = vmax.f32 %v3626, 0.0
      %v3659 = vmax.f32 %v3627, 0.0
      %v3660 = vmax.f32 %v3628, 0.0
      %v3661 = vmax.f32 %v3629, 0.0
      %v3662 = vmax.f32 %v3630, 0.0
      %v3663 = vmax.f32 %v3631, 0.0
      %v3664 = vmax.f32 %v3632, 0.0
      %v3665 = vmax.f32 %v3633, 0.0
      %v3666 = vmax.f32 %v3634, 0.0
      %v3667 = vmax.f32 %v3635, 0.0
      %v3668 = vmax.f32 %v3636, 0.0
      %v3669 = vmax.f32 %v3637, 0.0
      %v3670 = vmax.f32 %v3638, 0.0
      %v3671 = vmax.f32 %v3639, 0.0
      %v3672 = vmax.f32 %v3640, 0.0
      %v3673 = vmax.f32 %v3641, 0.0
      %v3674 = vmax.f32 %v3642, 0.0
      %v3675 = vmax.f32 %v3643, 0.0
      %v3676 = vmax.f32 %v3644, 0.0
      %v3677 = vmax.f32 %v3645, 0.0
      %v3678 = vmax.f32 %v3646, 0.0
      %v3679 = vmax.f32 %v3647, 0.0
      %v3680 = vpack.c.bf16 %v3649, %v3648
      %v3681 = vpack.c.bf16 %v3651, %v3650
      %v3682 = vpack.c.bf16 %v3653, %v3652
      %v3683 = vpack.c.bf16 %v3655, %v3654
      %v3684 = vpack.c.bf16 %v3657, %v3656
      %v3685 = vpack.c.bf16 %v3659, %v3658
      %v3686 = vpack.c.bf16 %v3661, %v3660
      %v3687 = vpack.c.bf16 %v3663, %v3662
      %v3688 = vpack.c.bf16 %v3665, %v3664
      %v3689 = vpack.c.bf16 %v3667, %v3666
      %v3690 = vpack.c.bf16 %v3669, %v3668
      %v3691 = vpack.c.bf16 %v3671, %v3670
      %v3692 = vpack.c.bf16 %v3673, %v3672
      %v3693 = vpack.c.bf16 %v3675, %v3674
      %v3694 = vpack.c.bf16 %v3677, %v3676
      %v3695 = vpack.c.bf16 %v3679, %v3678
      %v3712 = vunpack.c.l.b16 %v3680
      %v3713 = vunpack.c.h.b16 %v3680
      %v3714 = vunpack.c.l.b16 %v3681
      %v3715 = vunpack.c.h.b16 %v3681
      %v3716 = vunpack.c.l.b16 %v3682
      %v3717 = vunpack.c.h.b16 %v3682
      %v3718 = vunpack.c.l.b16 %v3683
      %v3719 = vunpack.c.h.b16 %v3683
      %v3720 = vunpack.c.l.b16 %v3684
      %v3721 = vunpack.c.h.b16 %v3684
      %v3722 = vunpack.c.l.b16 %v3685
      %v3723 = vunpack.c.h.b16 %v3685
      %v3724 = vunpack.c.l.b16 %v3686
      %v3725 = vunpack.c.h.b16 %v3686
      %v3726 = vunpack.c.l.b16 %v3687
      %v3727 = vunpack.c.h.b16 %v3687
      %v3728 = vunpack.c.l.b16 %v3688
      %v3729 = vunpack.c.h.b16 %v3688
      %v3730 = vunpack.c.l.b16 %v3689
      %v3731 = vunpack.c.h.b16 %v3689
      %v3732 = vunpack.c.l.b16 %v3690
      %v3733 = vunpack.c.h.b16 %v3690
      %v3734 = vunpack.c.l.b16 %v3691
      %v3735 = vunpack.c.h.b16 %v3691
      %v3736 = vunpack.c.l.b16 %v3692
      %v3737 = vunpack.c.h.b16 %v3692
      %v3738 = vunpack.c.l.b16 %v3693
      %v3739 = vunpack.c.h.b16 %v3693
      %v3740 = vunpack.c.l.b16 %v3694
      %v3741 = vunpack.c.h.b16 %v3694
      %v3742 = vunpack.c.l.b16 %v3695
      %v3743 = vunpack.c.h.b16 %v3695
      %v3744 = vpack.c.b16 %v3712, %v3712
      %v3745 = vpack.c.b16 %v3713, %v3713
      %v3746 = vpack.c.b16 %v3714, %v3714
      %v3747 = vpack.c.b16 %v3715, %v3715
      %v3748 = vpack.c.b16 %v3716, %v3716
      %v3749 = vpack.c.b16 %v3717, %v3717
      %v3750 = vpack.c.b16 %v3718, %v3718
      %v3751 = vpack.c.b16 %v3719, %v3719
      %v3752 = vpack.c.b16 %v3720, %v3720
      %v3753 = vpack.c.b16 %v3721, %v3721
      %v3754 = vpack.c.b16 %v3722, %v3722
      %v3755 = vpack.c.b16 %v3723, %v3723
      %v3756 = vpack.c.b16 %v3724, %v3724
      %v3757 = vpack.c.b16 %v3725, %v3725
      %v3758 = vpack.c.b16 %v3726, %v3726
      %v3759 = vpack.c.b16 %v3727, %v3727
      %v3760 = vpack.c.b16 %v3728, %v3728
      %v3761 = vpack.c.b16 %v3729, %v3729
      %v3762 = vpack.c.b16 %v3730, %v3730
      %v3763 = vpack.c.b16 %v3731, %v3731
      %v3764 = vpack.c.b16 %v3732, %v3732
      %v3765 = vpack.c.b16 %v3733, %v3733
      %v3766 = vpack.c.b16 %v3734, %v3734
      %v3767 = vpack.c.b16 %v3735, %v3735
      %v3768 = vpack.c.b16 %v3736, %v3736
      %v3769 = vpack.c.b16 %v3737, %v3737
      %v3770 = vpack.c.b16 %v3738, %v3738
      %v3771 = vpack.c.b16 %v3739, %v3739
      %v3772 = vpack.c.b16 %v3740, %v3740
      %v3773 = vpack.c.b16 %v3741, %v3741
      %v3774 = vpack.c.b16 %v3742, %v3742
      %v3775 = vpack.c.b16 %v3743, %v3743
      %v3777 = vshrl.u32 %v3744, 16
      %v3779 = vrot.slane %v3777, 7
      %v3780 = vshll.u32 %v3744, 16
      %v3782 = vor.u32 %v3779, %v3780
      %v3783 = vrot.slane %v3779, 4
      %v3785 = vshrl.u32 %v3745, 16
      %v3787 = vrot.slane %v3785, 7
      %v3788 = vshll.u32 %v3745, 16
      %v3790 = vor.u32 %v3787, %v3788
      %v3791 = vsel %vm384, %v3783, %v3790
      %v3792 = vrot.slane %v3787, 4
      %v3794 = vshrl.u32 %v3746, 16
      %v3796 = vrot.slane %v3794, 7
      %v3797 = vshll.u32 %v3746, 16
      %v3799 = vor.u32 %v3796, %v3797
      %v3800 = vrot.slane %v3796, 4
      %v3802 = vshrl.u32 %v3747, 16
      %v3804 = vrot.slane %v3802, 7
      %v3805 = vshll.u32 %v3747, 16
      %v3807 = vor.u32 %v3804, %v3805
      %v3808 = vsel %vm384, %v3800, %v3807
      %v3809 = vrot.slane %v3804, 4
      %v3811 = vshrl.u32 %v3748, 16
      %v3813 = vrot.slane %v3811, 7
      %v3814 = vshll.u32 %v3748, 16
      %v3816 = vor.u32 %v3813, %v3814
      %v3817 = vrot.slane %v3813, 4
      %v3819 = vshrl.u32 %v3749, 16
      %v3821 = vrot.slane %v3819, 7
      %v3822 = vshll.u32 %v3749, 16
      %v3824 = vor.u32 %v3821, %v3822
      %v3825 = vsel %vm384, %v3817, %v3824
      %v3826 = vrot.slane %v3821, 4
      %v3828 = vshrl.u32 %v3750, 16
      %v3830 = vrot.slane %v3828, 7
      %v3831 = vshll.u32 %v3750, 16
      %v3833 = vor.u32 %v3830, %v3831
      %v3834 = vrot.slane %v3830, 4
      %v3836 = vshrl.u32 %v3751, 16
      %v3838 = vrot.slane %v3836, 7
      %v3839 = vshll.u32 %v3751, 16
      %v3841 = vor.u32 %v3838, %v3839
      %v3842 = vsel %vm384, %v3834, %v3841
      %v3843 = vrot.slane %v3838, 4
      %v3845 = vshrl.u32 %v3752, 16
      %v3847 = vrot.slane %v3845, 7
      %v3848 = vshll.u32 %v3752, 16
      %v3850 = vor.u32 %v3847, %v3848
      %v3851 = vrot.slane %v3847, 4
      %v3853 = vshrl.u32 %v3753, 16
      %v3855 = vrot.slane %v3853, 7
      %v3856 = vshll.u32 %v3753, 16
      %v3858 = vor.u32 %v3855, %v3856
      %v3859 = vsel %vm384, %v3851, %v3858
      %v3860 = vrot.slane %v3855, 4
      %v3862 = vshrl.u32 %v3754, 16
      %v3864 = vrot.slane %v3862, 7
      %v3865 = vshll.u32 %v3754, 16
      %v3867 = vor.u32 %v3864, %v3865
      %v3868 = vrot.slane %v3864, 4
      %v3870 = vshrl.u32 %v3755, 16
      %v3872 = vrot.slane %v3870, 7
      %v3873 = vshll.u32 %v3755, 16
      %v3875 = vor.u32 %v3872, %v3873
      %v3876 = vsel %vm384, %v3868, %v3875
      %v3877 = vrot.slane %v3872, 4
      %v3879 = vshrl.u32 %v3756, 16
      %v3881 = vrot.slane %v3879, 7
      %v3882 = vshll.u32 %v3756, 16
      %v3884 = vor.u32 %v3881, %v3882
      %v3885 = vrot.slane %v3881, 4
      %v3887 = vshrl.u32 %v3757, 16
      %v3889 = vrot.slane %v3887, 7
      %v3890 = vshll.u32 %v3757, 16
      %v3892 = vor.u32 %v3889, %v3890
      %v3893 = vsel %vm384, %v3885, %v3892
      %v3894 = vrot.slane %v3889, 4
      %v3896 = vshrl.u32 %v3758, 16
      %v3898 = vrot.slane %v3896, 7
      %v3899 = vshll.u32 %v3758, 16
      %v3901 = vor.u32 %v3898, %v3899
      %v3902 = vrot.slane %v3898, 4
      %v3904 = vshrl.u32 %v3759, 16
      %v3906 = vrot.slane %v3904, 7
      %v3907 = vshll.u32 %v3759, 16
      %v3909 = vor.u32 %v3906, %v3907
      %v3910 = vsel %vm384, %v3902, %v3909
      %v3911 = vrot.slane %v3906, 4
      %v3913 = vshrl.u32 %v3760, 16
      %v3915 = vrot.slane %v3913, 7
      %v3916 = vshll.u32 %v3760, 16
      %v3918 = vor.u32 %v3915, %v3916
      %v3919 = vrot.slane %v3915, 4
      %v3921 = vshrl.u32 %v3761, 16
      %v3923 = vrot.slane %v3921, 7
      %v3924 = vshll.u32 %v3761, 16
      %v3926 = vor.u32 %v3923, %v3924
      %v3927 = vsel %vm384, %v3919, %v3926
      %v3928 = vrot.slane %v3923, 4
      %v3930 = vshrl.u32 %v3762, 16
      %v3932 = vrot.slane %v3930, 7
      %v3933 = vshll.u32 %v3762, 16
      %v3935 = vor.u32 %v3932, %v3933
      %v3936 = vrot.slane %v3932, 4
      %v3938 = vshrl.u32 %v3763, 16
      %v3940 = vrot.slane %v3938, 7
      %v3941 = vshll.u32 %v3763, 16
      %v3943 = vor.u32 %v3940, %v3941
      %v3944 = vsel %vm384, %v3936, %v3943
      %v3945 = vrot.slane %v3940, 4
      %v3947 = vshrl.u32 %v3764, 16
      %v3949 = vrot.slane %v3947, 7
      %v3950 = vshll.u32 %v3764, 16
      %v3952 = vor.u32 %v3949, %v3950
      %v3953 = vrot.slane %v3949, 4
      %v3955 = vshrl.u32 %v3765, 16
      %v3957 = vrot.slane %v3955, 7
      %v3958 = vshll.u32 %v3765, 16
      %v3960 = vor.u32 %v3957, %v3958
      %v3961 = vsel %vm384, %v3953, %v3960
      %v3962 = vrot.slane %v3957, 4
      %v3964 = vshrl.u32 %v3766, 16
      %v3966 = vrot.slane %v3964, 7
      %v3967 = vshll.u32 %v3766, 16
      %v3969 = vor.u32 %v3966, %v3967
      %v3970 = vrot.slane %v3966, 4
      %v3972 = vshrl.u32 %v3767, 16
      %v3974 = vrot.slane %v3972, 7
      %v3975 = vshll.u32 %v3767, 16
      %v3977 = vor.u32 %v3974, %v3975
      %v3978 = vsel %vm384, %v3970, %v3977
      %v3979 = vrot.slane %v3974, 4
      %v3981 = vshrl.u32 %v3768, 16
      %v3983 = vrot.slane %v3981, 7
      %v3984 = vshll.u32 %v3768, 16
      %v3986 = vor.u32 %v3983, %v3984
      %v3987 = vrot.slane %v3983, 4
      %v3989 = vshrl.u32 %v3769, 16
      %v3991 = vrot.slane %v3989, 7
      %v3992 = vshll.u32 %v3769, 16
      %v3994 = vor.u32 %v3991, %v3992
      %v3995 = vsel %vm384, %v3987, %v3994
      %v3996 = vrot.slane %v3991, 4
      %v3998 = vshrl.u32 %v3770, 16
      %v4000 = vrot.slane %v3998, 7
      %v4001 = vshll.u32 %v3770, 16
      %v4003 = vor.u32 %v4000, %v4001
      %v4004 = vrot.slane %v4000, 4
      %v4006 = vshrl.u32 %v3771, 16
      %v4008 = vrot.slane %v4006, 7
      %v4009 = vshll.u32 %v3771, 16
      %v4011 = vor.u32 %v4008, %v4009
      %v4012 = vsel %vm384, %v4004, %v4011
      %v4013 = vrot.slane %v4008, 4
      %v4015 = vshrl.u32 %v3772, 16
      %v4017 = vrot.slane %v4015, 7
      %v4018 = vshll.u32 %v3772, 16
      %v4020 = vor.u32 %v4017, %v4018
      %v4021 = vrot.slane %v4017, 4
      %v4023 = vshrl.u32 %v3773, 16
      %v4025 = vrot.slane %v4023, 7
      %v4026 = vshll.u32 %v3773, 16
      %v4028 = vor.u32 %v4025, %v4026
      %v4029 = vsel %vm384, %v4021, %v4028
      %v4030 = vrot.slane %v4025, 4
      %v4032 = vshrl.u32 %v3774, 16
      %v4034 = vrot.slane %v4032, 7
      %v4035 = vshll.u32 %v3774, 16
      %v4037 = vor.u32 %v4034, %v4035
      %v4038 = vrot.slane %v4034, 4
      %v4040 = vshrl.u32 %v3775, 16
      %v4042 = vrot.slane %v4040, 7
      %v4043 = vshll.u32 %v3775, 16
      %v4045 = vor.u32 %v4042, %v4043
      %v4046 = vsel %vm384, %v4038, %v4045
      %v4047 = vrot.slane %v4042, 4
      %v4096 = vsel %vm708, %v3782, %v1678
      %4097 = vst [vmem:[%s705] sm:$0xf] %v4096
      %4098 = vst.msk [vmem:[%s705 + $0x4] sm:$0xf] %vm712, %v3791
      %v4099 = vld [vmem:[%s705 + $0x8] sm:$0x1]
      %v4100 = vsel %vm715, %v3792, %v4099
      %4101 = vst [vmem:[%s705 + $0x8] sm:$0x1] %v4100
      %v4102 = vld [vmem:[%s705 + $0xc] sm:$0xf]
      %v4103 = vsel %vm708, %v3799, %v4102
      %4104 = vst [vmem:[%s705 + $0xc] sm:$0xf] %v4103
      %4105 = vst.msk [vmem:[%s705 + $0x10] sm:$0xf] %vm712, %v3808
      %v4106 = vld [vmem:[%s705 + $0x14] sm:$0x1]
      %v4107 = vsel %vm715, %v3809, %v4106
      %4108 = vst [vmem:[%s705 + $0x14] sm:$0x1] %v4107
      %v4109 = vld [vmem:[%s705 + $0x18] sm:$0xf]
      %v4110 = vsel %vm708, %v3816, %v4109
      %4111 = vst [vmem:[%s705 + $0x18] sm:$0xf] %v4110
      %4112 = vst.msk [vmem:[%s705 + $0x1c] sm:$0xf] %vm712, %v3825
      %v4113 = vld [vmem:[%s705 + $0x20] sm:$0x1]
      %v4114 = vsel %vm715, %v3826, %v4113
      %4115 = vst [vmem:[%s705 + $0x20] sm:$0x1] %v4114
      %v4116 = vld [vmem:[%s705 + $0x24] sm:$0xf]
      %v4117 = vsel %vm708, %v3833, %v4116
      %4118 = vst [vmem:[%s705 + $0x24] sm:$0xf] %v4117
      %4119 = vst.msk [vmem:[%s705 + $0x28] sm:$0xf] %vm712, %v3842
      %v4120 = vld [vmem:[%s705 + $0x2c] sm:$0x1]
      %v4121 = vsel %vm715, %v3843, %v4120
      %4122 = vst [vmem:[%s705 + $0x2c] sm:$0x1] %v4121
      %v4123 = vld [vmem:[%s705 + $0x30] sm:$0xf]
      %v4124 = vsel %vm708, %v3850, %v4123
      %4125 = vst [vmem:[%s705 + $0x30] sm:$0xf] %v4124
      %4126 = vst.msk [vmem:[%s705 + $0x34] sm:$0xf] %vm712, %v3859
      %v4127 = vld [vmem:[%s705 + $0x38] sm:$0x1]
      %v4128 = vsel %vm715, %v3860, %v4127
      %4129 = vst [vmem:[%s705 + $0x38] sm:$0x1] %v4128
      %v4130 = vld [vmem:[%s705 + $0x3c] sm:$0xf]
      %v4131 = vsel %vm708, %v3867, %v4130
      %4132 = vst [vmem:[%s705 + $0x3c] sm:$0xf] %v4131
      %4133 = vst.msk [vmem:[%s705 + $0x40] sm:$0xf] %vm712, %v3876
      %v4134 = vld [vmem:[%s705 + $0x44] sm:$0x1]
      %v4135 = vsel %vm715, %v3877, %v4134
      %4136 = vst [vmem:[%s705 + $0x44] sm:$0x1] %v4135
      %v4137 = vld [vmem:[%s705 + $0x48] sm:$0xf]
      %v4138 = vsel %vm708, %v3884, %v4137
      %4139 = vst [vmem:[%s705 + $0x48] sm:$0xf] %v4138
      %4140 = vst.msk [vmem:[%s705 + $0x4c] sm:$0xf] %vm712, %v3893
      %v4141 = vld [vmem:[%s705 + $0x50] sm:$0x1]
      %v4142 = vsel %vm715, %v3894, %v4141
      %4143 = vst [vmem:[%s705 + $0x50] sm:$0x1] %v4142
      %v4144 = vld [vmem:[%s705 + $0x54] sm:$0xf]
      %v4145 = vsel %vm708, %v3901, %v4144
      %4146 = vst [vmem:[%s705 + $0x54] sm:$0xf] %v4145
      %4147 = vst.msk [vmem:[%s705 + $0x58] sm:$0xf] %vm712, %v3910
      %v4148 = vld [vmem:[%s705 + $0x5c] sm:$0x1]
      %v4149 = vsel %vm715, %v3911, %v4148
      %4150 = vst [vmem:[%s705 + $0x5c] sm:$0x1] %v4149
      %v4151 = vld [vmem:[%s705 + $0x60] sm:$0xf]
      %v4152 = vsel %vm708, %v3918, %v4151
      %4153 = vst [vmem:[%s705 + $0x60] sm:$0xf] %v4152
      %4154 = vst.msk [vmem:[%s705 + $0x64] sm:$0xf] %vm712, %v3927
      %v4155 = vld [vmem:[%s705 + $0x68] sm:$0x1]
      %v4156 = vsel %vm715, %v3928, %v4155
      %4157 = vst [vmem:[%s705 + $0x68] sm:$0x1] %v4156
      %v4158 = vld [vmem:[%s705 + $0x6c] sm:$0xf]
      %v4159 = vsel %vm708, %v3935, %v4158
      %4160 = vst [vmem:[%s705 + $0x6c] sm:$0xf] %v4159
      %4161 = vst.msk [vmem:[%s705 + $0x70] sm:$0xf] %vm712, %v3944
      %v4162 = vld [vmem:[%s705 + $0x74] sm:$0x1]
      %v4163 = vsel %vm715, %v3945, %v4162
      %4164 = vst [vmem:[%s705 + $0x74] sm:$0x1] %v4163
      %v4165 = vld [vmem:[%s705 + $0x78] sm:$0xf]
      %v4166 = vsel %vm708, %v3952, %v4165
      %4167 = vst [vmem:[%s705 + $0x78] sm:$0xf] %v4166
      %4168 = vst.msk [vmem:[%s705 + $0x7c] sm:$0xf] %vm712, %v3961
      %v4169 = vld [vmem:[%s705 + $0x80] sm:$0x1]
      %v4170 = vsel %vm715, %v3962, %v4169
      %4171 = vst [vmem:[%s705 + $0x80] sm:$0x1] %v4170
      %v4172 = vld [vmem:[%s705 + $0x84] sm:$0xf]
      %v4173 = vsel %vm708, %v3969, %v4172
      %4174 = vst [vmem:[%s705 + $0x84] sm:$0xf] %v4173
      %4175 = vst.msk [vmem:[%s705 + $0x88] sm:$0xf] %vm712, %v3978
      %v4176 = vld [vmem:[%s705 + $0x8c] sm:$0x1]
      %v4177 = vsel %vm715, %v3979, %v4176
      %4178 = vst [vmem:[%s705 + $0x8c] sm:$0x1] %v4177
      %v4179 = vld [vmem:[%s705 + $0x90] sm:$0xf]
      %v4180 = vsel %vm708, %v3986, %v4179
      %4181 = vst [vmem:[%s705 + $0x90] sm:$0xf] %v4180
      %4182 = vst.msk [vmem:[%s705 + $0x94] sm:$0xf] %vm712, %v3995
      %v4183 = vld [vmem:[%s705 + $0x98] sm:$0x1]
      %v4184 = vsel %vm715, %v3996, %v4183
      %4185 = vst [vmem:[%s705 + $0x98] sm:$0x1] %v4184
      %v4186 = vld [vmem:[%s705 + $0x9c] sm:$0xf]
      %v4187 = vsel %vm708, %v4003, %v4186
      %4188 = vst [vmem:[%s705 + $0x9c] sm:$0xf] %v4187
      %4189 = vst.msk [vmem:[%s705 + $0xa0] sm:$0xf] %vm712, %v4012
      %v4190 = vld [vmem:[%s705 + $0xa4] sm:$0x1]
      %v4191 = vsel %vm715, %v4013, %v4190
      %4192 = vst [vmem:[%s705 + $0xa4] sm:$0x1] %v4191
      %v4193 = vld [vmem:[%s705 + $0xa8] sm:$0xf]
      %v4194 = vsel %vm708, %v4020, %v4193
      %4195 = vst [vmem:[%s705 + $0xa8] sm:$0xf] %v4194
      %4196 = vst.msk [vmem:[%s705 + $0xac] sm:$0xf] %vm712, %v4029
      %v4197 = vld [vmem:[%s705 + $0xb0] sm:$0x1]
      %v4198 = vsel %vm715, %v4030, %v4197
      %4199 = vst [vmem:[%s705 + $0xb0] sm:$0x1] %v4198
      %v4200 = vld [vmem:[%s705 + $0xb4] sm:$0xf]
      %v4201 = vsel %vm708, %v4037, %v4200
      %4202 = vst [vmem:[%s705 + $0xb4] sm:$0xf] %v4201
      %4203 = vst.msk [vmem:[%s705 + $0xb8] sm:$0xf] %vm712, %v4046
      %v4204 = vld [vmem:[%s705 + $0xbc] sm:$0x1]
      %v4205 = vsel %vm715, %v4047, %v4204
      %4206 = vst [vmem:[%s705 + $0xbc] sm:$0x1] %v4205
      %v4207 = vld [vmem:[#allocation2] sm:$0xf]
      %v4208 = vsel %vm708, %v3799, %v4207
      %4209 = vst [vmem:[#allocation2] sm:$0xf] %v4208
      %4210 = vst.msk [vmem:[#allocation2 + $0x4] sm:$0xf] %vm712, %v3808
      %v4211 = vld [vmem:[#allocation2 + $0x8] sm:$0x1]
      %v4212 = vsel %vm715, %v3809, %v4211
      %4213 = vst [vmem:[#allocation2 + $0x8] sm:$0x1] %v4212
      %v4214 = vld [vmem:[%s831] sm:$0xf]
      %v4215 = vsel %vm708, %v4020, %v4214
      %4216 = vst [vmem:[%s831] sm:$0xf] %v4215
      %4217 = vst.msk [vmem:[%s831 + $0x4] sm:$0xf] %vm712, %v4029
      %v4218 = vld [vmem:[%s831 + $0x8] sm:$0x1]
      %v4219 = vsel %vm715, %v4030, %v4218
      %4220 = vst [vmem:[%s831 + $0x8] sm:$0x1] %v4219
      %v4221 = vld [vmem:[#allocation2] sm:$0x2]
      %v4222 = vld [vmem:[#allocation2 + $0xc] sm:$0x2]
      %v4223 = vld [vmem:[#allocation2 + $0x18] sm:$0x2]
      %v4224 = vld [vmem:[#allocation2 + $0x24] sm:$0x2]
      %v4225 = vld [vmem:[#allocation2 + $0x30] sm:$0x2]
      %v4226 = vld [vmem:[#allocation2 + $0x3c] sm:$0x2]
      %v4227 = vld [vmem:[#allocation2 + $0x48] sm:$0x2]
      %v4228 = vld [vmem:[#allocation2 + $0x54] sm:$0x2]
      %v4229 = vld [vmem:[#allocation2 + $0x60] sm:$0x2]
      %v4230 = vld [vmem:[#allocation2 + $0x6c] sm:$0x2]
      %v4231 = vld [vmem:[#allocation2 + $0x78] sm:$0x2]
      %v4232 = vld [vmem:[#allocation2 + $0x84] sm:$0x2]
      %v4233 = vld [vmem:[#allocation2 + $0x90] sm:$0x2]
      %v4234 = vld [vmem:[#allocation2 + $0x9c] sm:$0x2]
      %v4235 = vld [vmem:[#allocation2 + $0xa8] sm:$0x2]
      %v4236 = vld [vmem:[#allocation2 + $0xb4] sm:$0x2]
      %v4237 = vld [vmem:[#allocation2 + $0xc0] sm:$0x2]
      %v4238 = vld [vmem:[#allocation2 + $0xcc] sm:$0x2]
      %v4257 = vrot.slane %v4221, 5
      %v4258 = vrot.slane %v4257, 4
      %v4259 = vrot.slane %v4222, 5
      %v4260 = vrot.slane %v4259, 4
      %v4261 = vrot.slane %v4223, 5
      %v4262 = vrot.slane %v4261, 4
      %v4263 = vrot.slane %v4224, 5
      %v4264 = vrot.slane %v4263, 4
      %v4265 = vrot.slane %v4225, 5
      %v4266 = vrot.slane %v4265, 4
      %v4267 = vrot.slane %v4226, 5
      %v4268 = vrot.slane %v4267, 4
      %v4269 = vrot.slane %v4227, 5
      %v4270 = vrot.slane %v4269, 4
      %v4271 = vrot.slane %v4228, 5
      %v4272 = vrot.slane %v4271, 4
      %v4273 = vrot.slane %v4229, 5
      %v4274 = vrot.slane %v4273, 4
      %v4275 = vrot.slane %v4230, 5
      %v4276 = vrot.slane %v4275, 4
      %v4277 = vrot.slane %v4231, 5
      %v4278 = vrot.slane %v4277, 4
      %v4279 = vrot.slane %v4232, 5
      %v4280 = vrot.slane %v4279, 4
      %v4281 = vrot.slane %v4233, 5
      %v4282 = vrot.slane %v4281, 4
      %v4283 = vrot.slane %v4234, 5
      %v4284 = vrot.slane %v4283, 4
      %v4285 = vrot.slane %v4235, 5
      %v4286 = vrot.slane %v4285, 4
      %v4287 = vrot.slane %v4236, 5
      %v4288 = vrot.slane %v4287, 4
      %v4289 = vrot.slane %v4237, 5
      %v4290 = vrot.slane %v4289, 4
      %v4291 = vrot.slane %v4238, 5
      %v4292 = vrot.slane %v4291, 4
      %v4311 = vld [vmem:[#allocation2] sm:$0x1]
      %v4312 = vsel %vm715, %v4258, %v4311
      %4313 = vst [vmem:[#allocation2] sm:$0x1] %v4312
      %v4314 = vld [vmem:[#allocation2 + $0xc] sm:$0x1]
      %v4315 = vsel %vm715, %v4260, %v4314
      %4316 = vst [vmem:[#allocation2 + $0xc] sm:$0x1] %v4315
      %v4317 = vld [vmem:[#allocation2 + $0x18] sm:$0x1]
      %v4318 = vsel %vm715, %v4262, %v4317
      %4319 = vst [vmem:[#allocation2 + $0x18] sm:$0x1] %v4318
      %v4320 = vld [vmem:[#allocation2 + $0x24] sm:$0x1]
      %v4321 = vsel %vm715, %v4264, %v4320
      %4322 = vst [vmem:[#allocation2 + $0x24] sm:$0x1] %v4321
      %v4323 = vld [vmem:[#allocation2 + $0x30] sm:$0x1]
      %v4324 = vsel %vm715, %v4266, %v4323
      %4325 = vst [vmem:[#allocation2 + $0x30] sm:$0x1] %v4324
      %v4326 = vld [vmem:[#allocation2 + $0x3c] sm:$0x1]
      %v4327 = vsel %vm715, %v4268, %v4326
      %4328 = vst [vmem:[#allocation2 + $0x3c] sm:$0x1] %v4327
      %v4329 = vld [vmem:[#allocation2 + $0x48] sm:$0x1]
      %v4330 = vsel %vm715, %v4270, %v4329
      %4331 = vst [vmem:[#allocation2 + $0x48] sm:$0x1] %v4330
      %v4332 = vld [vmem:[#allocation2 + $0x54] sm:$0x1]
      %v4333 = vsel %vm715, %v4272, %v4332
      %4334 = vst [vmem:[#allocation2 + $0x54] sm:$0x1] %v4333
      %v4335 = vld [vmem:[#allocation2 + $0x60] sm:$0x1]
      %v4336 = vsel %vm715, %v4274, %v4335
      %4337 = vst [vmem:[#allocation2 + $0x60] sm:$0x1] %v4336
      %v4338 = vld [vmem:[#allocation2 + $0x6c] sm:$0x1]
      %v4339 = vsel %vm715, %v4276, %v4338
      %4340 = vst [vmem:[#allocation2 + $0x6c] sm:$0x1] %v4339
      %v4341 = vld [vmem:[#allocation2 + $0x78] sm:$0x1]
      %v4342 = vsel %vm715, %v4278, %v4341
      %4343 = vst [vmem:[#allocation2 + $0x78] sm:$0x1] %v4342
      %v4344 = vld [vmem:[#allocation2 + $0x84] sm:$0x1]
      %v4345 = vsel %vm715, %v4280, %v4344
      %4346 = vst [vmem:[#allocation2 + $0x84] sm:$0x1] %v4345
      %v4347 = vld [vmem:[#allocation2 + $0x90] sm:$0x1]
      %v4348 = vsel %vm715, %v4282, %v4347
      %4349 = vst [vmem:[#allocation2 + $0x90] sm:$0x1] %v4348
      %v4350 = vld [vmem:[#allocation2 + $0x9c] sm:$0x1]
      %v4351 = vsel %vm715, %v4284, %v4350
      %4352 = vst [vmem:[#allocation2 + $0x9c] sm:$0x1] %v4351
      %v4353 = vld [vmem:[#allocation2 + $0xa8] sm:$0x1]
      %v4354 = vsel %vm715, %v4286, %v4353
      %4355 = vst [vmem:[#allocation2 + $0xa8] sm:$0x1] %v4354
      %v4356 = vld [vmem:[#allocation2 + $0xb4] sm:$0x1]
      %v4357 = vsel %vm715, %v4288, %v4356
      %4358 = vst [vmem:[#allocation2 + $0xb4] sm:$0x1] %v4357
      %v4359 = vld [vmem:[#allocation2 + $0xc0] sm:$0x1]
      %v4360 = vsel %vm715, %v4290, %v4359
      %4361 = vst [vmem:[#allocation2 + $0xc0] sm:$0x1] %v4360
      %v4362 = vld [vmem:[#allocation2 + $0xcc] sm:$0x1]
      %v4363 = vsel %vm715, %v4292, %v4362
      %4364 = vst [vmem:[#allocation2 + $0xcc] sm:$0x1] %v4363
      %v4365 = vld [vmem:[#allocation2 + $0x4] sm:$0x8]
      %v4366 = vld [vmem:[#allocation2 + $0x10] sm:$0x8]
      %v4367 = vld [vmem:[#allocation2 + $0x1c] sm:$0x8]
      %v4368 = vld [vmem:[#allocation2 + $0x28] sm:$0x8]
      %v4369 = vld [vmem:[#allocation2 + $0x34] sm:$0x8]
      %v4370 = vld [vmem:[#allocation2 + $0x40] sm:$0x8]
      %v4371 = vld [vmem:[#allocation2 + $0x4c] sm:$0x8]
      %v4372 = vld [vmem:[#allocation2 + $0x58] sm:$0x8]
      %v4373 = vld [vmem:[#allocation2 + $0x64] sm:$0x8]
      %v4374 = vld [vmem:[#allocation2 + $0x70] sm:$0x8]
      %v4375 = vld [vmem:[#allocation2 + $0x7c] sm:$0x8]
      %v4376 = vld [vmem:[#allocation2 + $0x88] sm:$0x8]
      %v4377 = vld [vmem:[#allocation2 + $0x94] sm:$0x8]
      %v4378 = vld [vmem:[#allocation2 + $0xa0] sm:$0x8]
      %v4379 = vld [vmem:[#allocation2 + $0xac] sm:$0x8]
      %v4380 = vld [vmem:[#allocation2 + $0xb8] sm:$0x8]
      %v4381 = vld [vmem:[#allocation2 + $0xc4] sm:$0x8]
      %v4382 = vld [vmem:[#allocation2 + $0xd0] sm:$0x8]
      %v4401 = vrot.slane %v4365, 7
      %v4402 = vrot.slane %v4401, 4
      %v4403 = vrot.slane %v4366, 7
      %v4404 = vrot.slane %v4403, 4
      %v4405 = vrot.slane %v4367, 7
      %v4406 = vrot.slane %v4405, 4
      %v4407 = vrot.slane %v4368, 7
      %v4408 = vrot.slane %v4407, 4
      %v4409 = vrot.slane %v4369, 7
      %v4410 = vrot.slane %v4409, 4
      %v4411 = vrot.slane %v4370, 7
      %v4412 = vrot.slane %v4411, 4
      %v4413 = vrot.slane %v4371, 7
      %v4414 = vrot.slane %v4413, 4
      %v4415 = vrot.slane %v4372, 7
      %v4416 = vrot.slane %v4415, 4
      %v4417 = vrot.slane %v4373, 7
      %v4418 = vrot.slane %v4417, 4
      %v4419 = vrot.slane %v4374, 7
      %v4420 = vrot.slane %v4419, 4
      %v4421 = vrot.slane %v4375, 7
      %v4422 = vrot.slane %v4421, 4
      %v4423 = vrot.slane %v4376, 7
      %v4424 = vrot.slane %v4423, 4
      %v4425 = vrot.slane %v4377, 7
      %v4426 = vrot.slane %v4425, 4
      %v4427 = vrot.slane %v4378, 7
      %v4428 = vrot.slane %v4427, 4
      %v4429 = vrot.slane %v4379, 7
      %v4430 = vrot.slane %v4429, 4
      %v4431 = vrot.slane %v4380, 7
      %v4432 = vrot.slane %v4431, 4
      %v4433 = vrot.slane %v4381, 7
      %v4434 = vrot.slane %v4433, 4
      %v4435 = vrot.slane %v4382, 7
      %v4436 = vrot.slane %v4435, 4
      %v4455 = vld [vmem:[#allocation2 + $0x8] sm:$0x1]
      %v4456 = vsel %vm1073, %v4402, %v4455
      %4457 = vst [vmem:[#allocation2 + $0x8] sm:$0x1] %v4456
      %v4458 = vld [vmem:[#allocation2 + $0x14] sm:$0x1]
      %v4459 = vsel %vm1073, %v4404, %v4458
      %4460 = vst [vmem:[#allocation2 + $0x14] sm:$0x1] %v4459
      %v4461 = vld [vmem:[#allocation2 + $0x20] sm:$0x1]
      %v4462 = vsel %vm1073, %v4406, %v4461
      %4463 = vst [vmem:[#allocation2 + $0x20] sm:$0x1] %v4462
      %v4464 = vld [vmem:[#allocation2 + $0x2c] sm:$0x1]
      %v4465 = vsel %vm1073, %v4408, %v4464
      %4466 = vst [vmem:[#allocation2 + $0x2c] sm:$0x1] %v4465
      %v4467 = vld [vmem:[#allocation2 + $0x38] sm:$0x1]
      %v4468 = vsel %vm1073, %v4410, %v4467
      %4469 = vst [vmem:[#allocation2 + $0x38] sm:$0x1] %v4468
      %v4470 = vld [vmem:[#allocation2 + $0x44] sm:$0x1]
      %v4471 = vsel %vm1073, %v4412, %v4470
      %4472 = vst [vmem:[#allocation2 + $0x44] sm:$0x1] %v4471
      %v4473 = vld [vmem:[#allocation2 + $0x50] sm:$0x1]
      %v4474 = vsel %vm1073, %v4414, %v4473
      %4475 = vst [vmem:[#allocation2 + $0x50] sm:$0x1] %v4474
      %v4476 = vld [vmem:[#allocation2 + $0x5c] sm:$0x1]
      %v4477 = vsel %vm1073, %v4416, %v4476
      %4478 = vst [vmem:[#allocation2 + $0x5c] sm:$0x1] %v4477
      %v4479 = vld [vmem:[#allocation2 + $0x68] sm:$0x1]
      %v4480 = vsel %vm1073, %v4418, %v4479
      %4481 = vst [vmem:[#allocation2 + $0x68] sm:$0x1] %v4480
      %v4482 = vld [vmem:[#allocation2 + $0x74] sm:$0x1]
      %v4483 = vsel %vm1073, %v4420, %v4482
      %4484 = vst [vmem:[#allocation2 + $0x74] sm:$0x1] %v4483
      %v4485 = vld [vmem:[#allocation2 + $0x80] sm:$0x1]
      %v4486 = vsel %vm1073, %v4422, %v4485
      %4487 = vst [vmem:[#allocation2 + $0x80] sm:$0x1] %v4486
      %v4488 = vld [vmem:[#allocation2 + $0x8c] sm:$0x1]
      %v4489 = vsel %vm1073, %v4424, %v4488
      %4490 = vst [vmem:[#allocation2 + $0x8c] sm:$0x1] %v4489
      %v4491 = vld [vmem:[#allocation2 + $0x98] sm:$0x1]
      %v4492 = vsel %vm1073, %v4426, %v4491
      %4493 = vst [vmem:[#allocation2 + $0x98] sm:$0x1] %v4492
      %v4494 = vld [vmem:[#allocation2 + $0xa4] sm:$0x1]
      %v4495 = vsel %vm1073, %v4428, %v4494
      %4496 = vst [vmem:[#allocation2 + $0xa4] sm:$0x1] %v4495
      %v4497 = vld [vmem:[#allocation2 + $0xb0] sm:$0x1]
      %v4498 = vsel %vm1073, %v4430, %v4497
      %4499 = vst [vmem:[#allocation2 + $0xb0] sm:$0x1] %v4498
      %v4500 = vld [vmem:[#allocation2 + $0xbc] sm:$0x1]
      %v4501 = vsel %vm1073, %v4432, %v4500
      %4502 = vst [vmem:[#allocation2 + $0xbc] sm:$0x1] %v4501
      %v4503 = vld [vmem:[#allocation2 + $0xc8] sm:$0x1]
      %v4504 = vsel %vm1073, %v4434, %v4503
      %4505 = vst [vmem:[#allocation2 + $0xc8] sm:$0x1] %v4504
      %v4506 = vld [vmem:[#allocation2 + $0xd4] sm:$0x1]
      %v4507 = vsel %vm1073, %v4436, %v4506
      %4508 = vst [vmem:[#allocation2 + $0xd4] sm:$0x1] %v4507
      %v4509 = vld [vmem:[#allocation2] sm:$0xf]
      %v4510 = vld [vmem:[#allocation2 + $0x4] sm:$0xf]
      %v4511 = vld [vmem:[#allocation2 + $0x8] sm:$0x1]
      %v4512 = vld [vmem:[#allocation2 + $0xc] sm:$0xf]
      %v4513 = vld [vmem:[#allocation2 + $0x10] sm:$0xf]
      %v4514 = vld [vmem:[#allocation2 + $0x14] sm:$0x1]
      %v4515 = vld [vmem:[#allocation2 + $0x18] sm:$0xf]
      %v4516 = vld [vmem:[#allocation2 + $0x1c] sm:$0xf]
      %v4517 = vld [vmem:[#allocation2 + $0x20] sm:$0x1]
      %v4518 = vld [vmem:[#allocation2 + $0x24] sm:$0xf]
      %v4519 = vld [vmem:[#allocation2 + $0x28] sm:$0xf]
      %v4520 = vld [vmem:[#allocation2 + $0x2c] sm:$0x1]
      %v4521 = vld [vmem:[#allocation2 + $0x30] sm:$0xf]
      %v4522 = vld [vmem:[#allocation2 + $0x34] sm:$0xf]
      %v4523 = vld [vmem:[#allocation2 + $0x38] sm:$0x1]
      %v4524 = vld [vmem:[#allocation2 + $0x3c] sm:$0xf]
      %v4525 = vld [vmem:[#allocation2 + $0x40] sm:$0xf]
      %v4526 = vld [vmem:[#allocation2 + $0x44] sm:$0x1]
      %v4527 = vld [vmem:[#allocation2 + $0x48] sm:$0xf]
      %v4528 = vld [vmem:[#allocation2 + $0x4c] sm:$0xf]
      %v4529 = vld [vmem:[#allocation2 + $0x50] sm:$0x1]
      %v4530 = vld [vmem:[#allocation2 + $0x54] sm:$0xf]
      %v4531 = vld [vmem:[#allocation2 + $0x58] sm:$0xf]
      %v4532 = vld [vmem:[#allocation2 + $0x5c] sm:$0x1]
      %v4533 = vld [vmem:[#allocation2 + $0x60] sm:$0xf]
      %v4534 = vld [vmem:[#allocation2 + $0x64] sm:$0xf]
      %v4535 = vld [vmem:[#allocation2 + $0x68] sm:$0x1]
      %v4536 = vld [vmem:[#allocation2 + $0x6c] sm:$0xf]
      %v4537 = vld [vmem:[#allocation2 + $0x70] sm:$0xf]
      %v4538 = vld [vmem:[#allocation2 + $0x74] sm:$0x1]
      %v4539 = vld [vmem:[#allocation2 + $0x78] sm:$0xf]
      %v4540 = vld [vmem:[#allocation2 + $0x7c] sm:$0xf]
      %v4541 = vld [vmem:[#allocation2 + $0x80] sm:$0x1]
      %v4542 = vld [vmem:[#allocation2 + $0x84] sm:$0xf]
      %v4543 = vld [vmem:[#allocation2 + $0x88] sm:$0xf]
      %v4544 = vld [vmem:[#allocation2 + $0x8c] sm:$0x1]
      %v4545 = vld [vmem:[#allocation2 + $0x90] sm:$0xf]
      %v4546 = vld [vmem:[#allocation2 + $0x94] sm:$0xf]
      %v4547 = vld [vmem:[#allocation2 + $0x98] sm:$0x1]
      %v4548 = vld [vmem:[#allocation2 + $0x9c] sm:$0xf]
      %v4549 = vld [vmem:[#allocation2 + $0xa0] sm:$0xf]
      %v4550 = vld [vmem:[#allocation2 + $0xa4] sm:$0x1]
      %v4551 = vld [vmem:[#allocation2 + $0xa8] sm:$0xf]
      %v4552 = vld [vmem:[#allocation2 + $0xac] sm:$0xf]
      %v4553 = vld [vmem:[#allocation2 + $0xb0] sm:$0x1]
      %v4554 = vld [vmem:[#allocation2 + $0xb4] sm:$0xf]
      %v4555 = vld [vmem:[#allocation2 + $0xb8] sm:$0xf]
      %v4556 = vld [vmem:[#allocation2 + $0xbc] sm:$0x1]
      %v4589 = vunpack.c.l.b16 %v4509
      %v4590 = vunpack.c.l.b16 %v4510
      %v4591 = vunpack.c.l.b16 %v4512
      %v4592 = vunpack.c.l.b16 %v4513
      %v4593 = vunpack.c.l.b16 %v4515
      %v4594 = vunpack.c.l.b16 %v4516
      %v4595 = vunpack.c.l.b16 %v4518
      %v4596 = vunpack.c.l.b16 %v4519
      %v4597 = vunpack.c.l.b16 %v4521
      %v4598 = vunpack.c.l.b16 %v4522
      %v4599 = vunpack.c.l.b16 %v4524
      %v4600 = vunpack.c.l.b16 %v4525
      %v4601 = vunpack.c.l.b16 %v4527
      %v4602 = vunpack.c.l.b16 %v4528
      %v4603 = vunpack.c.l.b16 %v4530
      %v4604 = vunpack.c.l.b16 %v4531
      %v4605 = vunpack.c.l.b16 %v4533
      %v4606 = vunpack.c.l.b16 %v4534
      %v4607 = vunpack.c.l.b16 %v4536
      %v4608 = vunpack.c.l.b16 %v4537
      %v4609 = vunpack.c.l.b16 %v4539
      %v4610 = vunpack.c.l.b16 %v4540
      %v4611 = vunpack.c.l.b16 %v4542
      %v4612 = vunpack.c.l.b16 %v4543
      %v4613 = vunpack.c.l.b16 %v4545
      %v4614 = vunpack.c.l.b16 %v4546
      %v4615 = vunpack.c.l.b16 %v4548
      %v4616 = vunpack.c.l.b16 %v4549
      %v4617 = vunpack.c.l.b16 %v4551
      %v4618 = vunpack.c.l.b16 %v4552
      %v4619 = vunpack.c.l.b16 %v4554
      %v4620 = vunpack.c.l.b16 %v4555
      %v4621 = vpack.c.b16 %v4590, %v4589
      %v4622 = vpack.c.b16 %v4592, %v4591
      %v4623 = vpack.c.b16 %v4594, %v4593
      %v4624 = vpack.c.b16 %v4596, %v4595
      %v4625 = vpack.c.b16 %v4598, %v4597
      %v4626 = vpack.c.b16 %v4600, %v4599
      %v4627 = vpack.c.b16 %v4602, %v4601
      %v4628 = vpack.c.b16 %v4604, %v4603
      %v4629 = vpack.c.b16 %v4606, %v4605
      %v4630 = vpack.c.b16 %v4608, %v4607
      %v4631 = vpack.c.b16 %v4610, %v4609
      %v4632 = vpack.c.b16 %v4612, %v4611
      %v4633 = vpack.c.b16 %v4614, %v4613
      %v4634 = vpack.c.b16 %v4616, %v4615
      %v4635 = vpack.c.b16 %v4618, %v4617
      %v4636 = vpack.c.b16 %v4620, %v4619
      %v4653 = vunpack.c.l.b16 %v4511
      %v4654 = vunpack.c.l.b16 %v4514
      %v4655 = vunpack.c.l.b16 %v4517
      %v4656 = vunpack.c.l.b16 %v4520
      %v4657 = vunpack.c.l.b16 %v4523
      %v4658 = vunpack.c.l.b16 %v4526
      %v4659 = vunpack.c.l.b16 %v4529
      %v4660 = vunpack.c.l.b16 %v4532
      %v4661 = vunpack.c.l.b16 %v4535
      %v4662 = vunpack.c.l.b16 %v4538
      %v4663 = vunpack.c.l.b16 %v4541
      %v4664 = vunpack.c.l.b16 %v4544
      %v4665 = vunpack.c.l.b16 %v4547
      %v4666 = vunpack.c.l.b16 %v4550
      %v4667 = vunpack.c.l.b16 %v4553
      %v4668 = vunpack.c.l.b16 %v4556
      %v4669 = vpack.c.b16 %v4653, %v4653
      %v4670 = vpack.c.b16 %v4654, %v4654
      %v4671 = vpack.c.b16 %v4655, %v4655
      %v4672 = vpack.c.b16 %v4656, %v4656
      %v4673 = vpack.c.b16 %v4657, %v4657
      %v4674 = vpack.c.b16 %v4658, %v4658
      %v4675 = vpack.c.b16 %v4659, %v4659
      %v4676 = vpack.c.b16 %v4660, %v4660
      %v4677 = vpack.c.b16 %v4661, %v4661
      %v4678 = vpack.c.b16 %v4662, %v4662
      %v4679 = vpack.c.b16 %v4663, %v4663
      %v4680 = vpack.c.b16 %v4664, %v4664
      %v4681 = vpack.c.b16 %v4665, %v4665
      %v4682 = vpack.c.b16 %v4666, %v4666
      %v4683 = vpack.c.b16 %v4667, %v4667
      %v4684 = vpack.c.b16 %v4668, %v4668
      %v4686 = vshrl.u32 %v4621, 16
      %v4688 = vshll.u32 %v4621, 16
      %v4690 = vrot.slane %v4688, 1
      %v4691 = vor.u32 %v4686, %v4690
      %v4693 = vshll.u32 %v4669, 16
      %v4695 = vrot.slane %v4693, 1
      %v4696 = vsel %vm1304, %v4691, %v4695
      %v4698 = vshrl.u32 %v4622, 16
      %v4700 = vshll.u32 %v4622, 16
      %v4702 = vrot.slane %v4700, 1
      %v4703 = vor.u32 %v4698, %v4702
      %v4705 = vshll.u32 %v4670, 16
      %v4707 = vrot.slane %v4705, 1
      %v4708 = vsel %vm1304, %v4703, %v4707
      %v4710 = vshrl.u32 %v4623, 16
      %v4712 = vshll.u32 %v4623, 16
      %v4714 = vrot.slane %v4712, 1
      %v4715 = vor.u32 %v4710, %v4714
      %v4717 = vshll.u32 %v4671, 16
      %v4719 = vrot.slane %v4717, 1
      %v4720 = vsel %vm1304, %v4715, %v4719
      %v4722 = vshrl.u32 %v4624, 16
      %v4724 = vshll.u32 %v4624, 16
      %v4726 = vrot.slane %v4724, 1
      %v4727 = vor.u32 %v4722, %v4726
      %v4729 = vshll.u32 %v4672, 16
      %v4731 = vrot.slane %v4729, 1
      %v4732 = vsel %vm1304, %v4727, %v4731
      %v4734 = vshrl.u32 %v4625, 16
      %v4736 = vshll.u32 %v4625, 16
      %v4738 = vrot.slane %v4736, 1
      %v4739 = vor.u32 %v4734, %v4738
      %v4741 = vshll.u32 %v4673, 16
      %v4743 = vrot.slane %v4741, 1
      %v4744 = vsel %vm1304, %v4739, %v4743
      %v4746 = vshrl.u32 %v4626, 16
      %v4748 = vshll.u32 %v4626, 16
      %v4750 = vrot.slane %v4748, 1
      %v4751 = vor.u32 %v4746, %v4750
      %v4753 = vshll.u32 %v4674, 16
      %v4755 = vrot.slane %v4753, 1
      %v4756 = vsel %vm1304, %v4751, %v4755
      %v4758 = vshrl.u32 %v4627, 16
      %v4760 = vshll.u32 %v4627, 16
      %v4762 = vrot.slane %v4760, 1
      %v4763 = vor.u32 %v4758, %v4762
      %v4765 = vshll.u32 %v4675, 16
      %v4767 = vrot.slane %v4765, 1
      %v4768 = vsel %vm1304, %v4763, %v4767
      %v4770 = vshrl.u32 %v4628, 16
      %v4772 = vshll.u32 %v4628, 16
      %v4774 = vrot.slane %v4772, 1
      %v4775 = vor.u32 %v4770, %v4774
      %v4777 = vshll.u32 %v4676, 16
      %v4779 = vrot.slane %v4777, 1
      %v4780 = vsel %vm1304, %v4775, %v4779
      %v4782 = vshrl.u32 %v4629, 16
      %v4784 = vshll.u32 %v4629, 16
      %v4786 = vrot.slane %v4784, 1
      %v4787 = vor.u32 %v4782, %v4786
      %v4789 = vshll.u32 %v4677, 16
      %v4791 = vrot.slane %v4789, 1
      %v4792 = vsel %vm1304, %v4787, %v4791
      %v4794 = vshrl.u32 %v4630, 16
      %v4796 = vshll.u32 %v4630, 16
      %v4798 = vrot.slane %v4796, 1
      %v4799 = vor.u32 %v4794, %v4798
      %v4801 = vshll.u32 %v4678, 16
      %v4803 = vrot.slane %v4801, 1
      %v4804 = vsel %vm1304, %v4799, %v4803
      %v4806 = vshrl.u32 %v4631, 16
      %v4808 = vshll.u32 %v4631, 16
      %v4810 = vrot.slane %v4808, 1
      %v4811 = vor.u32 %v4806, %v4810
      %v4813 = vshll.u32 %v4679, 16
      %v4815 = vrot.slane %v4813, 1
      %v4816 = vsel %vm1304, %v4811, %v4815
      %v4818 = vshrl.u32 %v4632, 16
      %v4820 = vshll.u32 %v4632, 16
      %v4822 = vrot.slane %v4820, 1
      %v4823 = vor.u32 %v4818, %v4822
      %v4825 = vshll.u32 %v4680, 16
      %v4827 = vrot.slane %v4825, 1
      %v4828 = vsel %vm1304, %v4823, %v4827
      %v4830 = vshrl.u32 %v4633, 16
      %v4832 = vshll.u32 %v4633, 16
      %v4834 = vrot.slane %v4832, 1
      %v4835 = vor.u32 %v4830, %v4834
      %v4837 = vshll.u32 %v4681, 16
      %v4839 = vrot.slane %v4837, 1
      %v4840 = vsel %vm1304, %v4835, %v4839
      %v4842 = vshrl.u32 %v4634, 16
      %v4844 = vshll.u32 %v4634, 16
      %v4846 = vrot.slane %v4844, 1
      %v4847 = vor.u32 %v4842, %v4846
      %v4849 = vshll.u32 %v4682, 16
      %v4851 = vrot.slane %v4849, 1
      %v4852 = vsel %vm1304, %v4847, %v4851
      %v4854 = vshrl.u32 %v4635, 16
      %v4856 = vshll.u32 %v4635, 16
      %v4858 = vrot.slane %v4856, 1
      %v4859 = vor.u32 %v4854, %v4858
      %v4861 = vshll.u32 %v4683, 16
      %v4863 = vrot.slane %v4861, 1
      %v4864 = vsel %vm1304, %v4859, %v4863
      %v4866 = vshrl.u32 %v4636, 16
      %v4868 = vshll.u32 %v4636, 16
      %v4870 = vrot.slane %v4868, 1
      %v4871 = vor.u32 %v4866, %v4870
      %v4873 = vshll.u32 %v4684, 16
      %v4875 = vrot.slane %v4873, 1
      %v4876 = vsel %vm1304, %v4871, %v4875
      %4877 = vrot.lane.b32.xlu0 %v4696, 4
      %v4878 = vpop.permute.xlu0 %4877
      %4879 = vrot.lane.b32.xlu0 %v4708, 4
      %v4880 = vpop.permute.xlu0 %4879
      %4881 = vrot.lane.b32.xlu0 %v4720, 4
      %v4882 = vpop.permute.xlu0 %4881
      %4883 = vrot.lane.b32.xlu0 %v4732, 4
      %v4884 = vpop.permute.xlu0 %4883
      %4885 = vrot.lane.b32.xlu0 %v4744, 4
      %v4886 = vpop.permute.xlu0 %4885
      %4887 = vrot.lane.b32.xlu0 %v4756, 4
      %v4888 = vpop.permute.xlu0 %4887
      %4889 = vrot.lane.b32.xlu0 %v4768, 4
      %v4890 = vpop.permute.xlu0 %4889
      %4891 = vrot.lane.b32.xlu0 %v4780, 4
      %v4892 = vpop.permute.xlu0 %4891
      %4893 = vrot.lane.b32.xlu0 %v4792, 4
      %v4894 = vpop.permute.xlu0 %4893
      %4895 = vrot.lane.b32.xlu0 %v4804, 4
      %v4896 = vpop.permute.xlu0 %4895
      %4897 = vrot.lane.b32.xlu0 %v4816, 4
      %v4898 = vpop.permute.xlu0 %4897
      %4899 = vrot.lane.b32.xlu0 %v4828, 4
      %v4900 = vpop.permute.xlu0 %4899
      %4901 = vrot.lane.b32.xlu0 %v4840, 4
      %v4902 = vpop.permute.xlu0 %4901
      %4903 = vrot.lane.b32.xlu0 %v4852, 4
      %v4904 = vpop.permute.xlu0 %4903
      %4905 = vrot.lane.b32.xlu0 %v4864, 4
      %v4906 = vpop.permute.xlu0 %4905
      %4907 = vrot.lane.b32.xlu0 %v4876, 4
      %v4908 = vpop.permute.xlu0 %4907
      %v4909 = vrot.slane %v4621, 1
      %v4910 = vrot.slane %v4669, 1
      %v4911 = vsel %vm1529, %v4909, %v4910
      %v4912 = vrot.slane %v4622, 1
      %v4913 = vrot.slane %v4670, 1
      %v4914 = vsel %vm1529, %v4912, %v4913
      %v4915 = vrot.slane %v4623, 1
      %v4916 = vrot.slane %v4671, 1
      %v4917 = vsel %vm1529, %v4915, %v4916
      %v4918 = vrot.slane %v4624, 1
      %v4919 = vrot.slane %v4672, 1
      %v4920 = vsel %vm1529, %v4918, %v4919
      %v4921 = vrot.slane %v4625, 1
      %v4922 = vrot.slane %v4673, 1
      %v4923 = vsel %vm1529, %v4921, %v4922
      %v4924 = vrot.slane %v4626, 1
      %v4925 = vrot.slane %v4674, 1
      %v4926 = vsel %vm1529, %v4924, %v4925
      %v4927 = vrot.slane %v4627, 1
      %v4928 = vrot.slane %v4675, 1
      %v4929 = vsel %vm1529, %v4927, %v4928
      %v4930 = vrot.slane %v4628, 1
      %v4931 = vrot.slane %v4676, 1
      %v4932 = vsel %vm1529, %v4930, %v4931
      %v4933 = vrot.slane %v4629, 1
      %v4934 = vrot.slane %v4677, 1
      %v4935 = vsel %vm1529, %v4933, %v4934
      %v4936 = vrot.slane %v4630, 1
      %v4937 = vrot.slane %v4678, 1
      %v4938 = vsel %vm1529, %v4936, %v4937
      %v4939 = vrot.slane %v4631, 1
      %v4940 = vrot.slane %v4679, 1
      %v4941 = vsel %vm1529, %v4939, %v4940
      %v4942 = vrot.slane %v4632, 1
      %v4943 = vrot.slane %v4680, 1
      %v4944 = vsel %vm1529, %v4942, %v4943
      %v4945 = vrot.slane %v4633, 1
      %v4946 = vrot.slane %v4681, 1
      %v4947 = vsel %vm1529, %v4945, %v4946
      %v4948 = vrot.slane %v4634, 1
      %v4949 = vrot.slane %v4682, 1
      %v4950 = vsel %vm1529, %v4948, %v4949
      %v4951 = vrot.slane %v4635, 1
      %v4952 = vrot.slane %v4683, 1
      %v4953 = vsel %vm1529, %v4951, %v4952
      %v4954 = vrot.slane %v4636, 1
      %v4955 = vrot.slane %v4684, 1
      %v4956 = vsel %vm1529, %v4954, %v4955
      %4957 = vrot.lane.b32.xlu0 %v4911, 8
      %v4958 = vpop.permute.xlu0 %4957
      %4959 = vrot.lane.b32.xlu0 %v4914, 8
      %v4960 = vpop.permute.xlu0 %4959
      %4961 = vrot.lane.b32.xlu0 %v4917, 8
      %v4962 = vpop.permute.xlu0 %4961
      %4963 = vrot.lane.b32.xlu0 %v4920, 8
      %v4964 = vpop.permute.xlu0 %4963
      %4965 = vrot.lane.b32.xlu0 %v4923, 8
      %v4966 = vpop.permute.xlu0 %4965
      %4967 = vrot.lane.b32.xlu0 %v4926, 8
      %v4968 = vpop.permute.xlu0 %4967
      %4969 = vrot.lane.b32.xlu0 %v4929, 8
      %v4970 = vpop.permute.xlu0 %4969
      %4971 = vrot.lane.b32.xlu0 %v4932, 8
      %v4972 = vpop.permute.xlu0 %4971
      %4973 = vrot.lane.b32.xlu0 %v4935, 8
      %v4974 = vpop.permute.xlu0 %4973
      %4975 = vrot.lane.b32.xlu0 %v4938, 8
      %v4976 = vpop.permute.xlu0 %4975
      %4977 = vrot.lane.b32.xlu0 %v4941, 8
      %v4978 = vpop.permute.xlu0 %4977
      %4979 = vrot.lane.b32.xlu0 %v4944, 8
      %v4980 = vpop.permute.xlu0 %4979
      %4981 = vrot.lane.b32.xlu0 %v4947, 8
      %v4982 = vpop.permute.xlu0 %4981
      %4983 = vrot.lane.b32.xlu0 %v4950, 8
      %v4984 = vpop.permute.xlu0 %4983
      %4985 = vrot.lane.b32.xlu0 %v4953, 8
      %v4986 = vpop.permute.xlu0 %4985
      %4987 = vrot.lane.b32.xlu0 %v4956, 8
      %v4988 = vpop.permute.xlu0 %4987
      %v4990 = vsel %vm1610, %v4621, %v4878
      %v4992 = vsel %vm1610, %v4622, %v4880
      %v4994 = vsel %vm1610, %v4623, %v4882
      %v4996 = vsel %vm1610, %v4624, %v4884
      %v4998 = vsel %vm1610, %v4625, %v4886
      %v5000 = vsel %vm1610, %v4626, %v4888
      %v5002 = vsel %vm1610, %v4627, %v4890
      %v5004 = vsel %vm1610, %v4628, %v4892
      %v5006 = vsel %vm1610, %v4629, %v4894
      %v5008 = vsel %vm1610, %v4630, %v4896
      %v5010 = vsel %vm1610, %v4631, %v4898
      %v5012 = vsel %vm1610, %v4632, %v4900
      %v5014 = vsel %vm1610, %v4633, %v4902
      %v5016 = vsel %vm1610, %v4634, %v4904
      %v5018 = vsel %vm1610, %v4635, %v4906
      %v5020 = vsel %vm1610, %v4636, %v4908
      %v5022 = vsel %vm1643, %v4990, %v4958
      %v5024 = vsel %vm1643, %v4992, %v4960
      %v5026 = vsel %vm1643, %v4994, %v4962
      %v5028 = vsel %vm1643, %v4996, %v4964
      %v5030 = vsel %vm1643, %v4998, %v4966
      %v5032 = vsel %vm1643, %v5000, %v4968
      %v5034 = vsel %vm1643, %v5002, %v4970
      %v5036 = vsel %vm1643, %v5004, %v4972
      %v5038 = vsel %vm1643, %v5006, %v4974
      %v5040 = vsel %vm1643, %v5008, %v4976
      %v5042 = vsel %vm1643, %v5010, %v4978
      %v5044 = vsel %vm1643, %v5012, %v4980
      %v5046 = vsel %vm1643, %v5014, %v4982
      %v5048 = vsel %vm1643, %v5016, %v4984
      %v5050 = vsel %vm1643, %v5018, %v4986
      %v5052 = vsel %vm1643, %v5020, %v4988
      %v5053 = vld [vmem:[%s2] sm:$0xf]
      %v5054 = vld [vmem:[%s2 + $0x4] sm:$0x3]
      %v5055 = vld [vmem:[%s705] sm:$0xf]
      %v5056 = vld [vmem:[%s705 + $0x4] sm:$0xf]
      %v5057 = vld [vmem:[%s705 + $0x8] sm:$0x1]
      %v5058 = vld [vmem:[%s705 + $0xc] sm:$0xf]
      %v5059 = vld [vmem:[%s705 + $0x10] sm:$0xf]
      %v5060 = vld [vmem:[%s705 + $0x14] sm:$0x1]
      %v5061 = vld [vmem:[%s705 + $0x18] sm:$0xf]
      %v5062 = vld [vmem:[%s705 + $0x1c] sm:$0xf]
      %v5063 = vld [vmem:[%s705 + $0x20] sm:$0x1]
      %v5064 = vld [vmem:[%s705 + $0x24] sm:$0xf]
      %v5065 = vld [vmem:[%s705 + $0x28] sm:$0xf]
      %v5066 = vld [vmem:[%s705 + $0x2c] sm:$0x1]
      %v5067 = vld [vmem:[%s705 + $0x30] sm:$0xf]
      %v5068 = vld [vmem:[%s705 + $0x34] sm:$0xf]
      %v5069 = vld [vmem:[%s705 + $0x38] sm:$0x1]
      %v5070 = vld [vmem:[%s705 + $0x3c] sm:$0xf]
      %v5071 = vld [vmem:[%s705 + $0x40] sm:$0xf]
      %v5072 = vld [vmem:[%s705 + $0x44] sm:$0x1]
      %v5073 = vld [vmem:[%s705 + $0x48] sm:$0xf]
      %v5074 = vld [vmem:[%s705 + $0x4c] sm:$0xf]
      %v5075 = vld [vmem:[%s705 + $0x50] sm:$0x1]
      %v5076 = vld [vmem:[%s705 + $0x54] sm:$0xf]
      %v5077 = vld [vmem:[%s705 + $0x58] sm:$0xf]
      %v5078 = vld [vmem:[%s705 + $0x5c] sm:$0x1]
      %v5079 = vld [vmem:[%s705 + $0x60] sm:$0xf]
      %v5080 = vld [vmem:[%s705 + $0x64] sm:$0xf]
      %v5081 = vld [vmem:[%s705 + $0x68] sm:$0x1]
      %v5082 = vld [vmem:[%s705 + $0x6c] sm:$0xf]
      %v5083 = vld [vmem:[%s705 + $0x70] sm:$0xf]
      %v5084 = vld [vmem:[%s705 + $0x74] sm:$0x1]
      %v5085 = vld [vmem:[%s705 + $0x78] sm:$0xf]
      %v5086 = vld [vmem:[%s705 + $0x7c] sm:$0xf]
      %v5087 = vld [vmem:[%s705 + $0x80] sm:$0x1]
      %v5088 = vld [vmem:[%s705 + $0x84] sm:$0xf]
      %v5089 = vld [vmem:[%s705 + $0x88] sm:$0xf]
      %v5090 = vld [vmem:[%s705 + $0x8c] sm:$0x1]
      %v5091 = vld [vmem:[%s705 + $0x90] sm:$0xf]
      %v5092 = vld [vmem:[%s705 + $0x94] sm:$0xf]
      %v5093 = vld [vmem:[%s705 + $0x98] sm:$0x1]
      %v5094 = vld [vmem:[%s705 + $0x9c] sm:$0xf]
      %v5095 = vld [vmem:[%s705 + $0xa0] sm:$0xf]
      %v5096 = vld [vmem:[%s705 + $0xa4] sm:$0x1]
      %v5097 = vld [vmem:[%s705 + $0xa8] sm:$0xf]
      %v5098 = vld [vmem:[%s705 + $0xac] sm:$0xf]
      %v5099 = vld [vmem:[%s705 + $0xb0] sm:$0x1]
      %v5100 = vld [vmem:[%s705 + $0xb4] sm:$0xf]
      %v5101 = vld [vmem:[%s705 + $0xb8] sm:$0xf]
      %v5102 = vld [vmem:[%s705 + $0xbc] sm:$0x1]
      %v5135 = vunpack.c.l.b16 %v5055
      %v5136 = vunpack.c.l.b16 %v5056
      %v5137 = vunpack.c.l.b16 %v5058
      %v5138 = vunpack.c.l.b16 %v5059
      %v5139 = vunpack.c.l.b16 %v5061
      %v5140 = vunpack.c.l.b16 %v5062
      %v5141 = vunpack.c.l.b16 %v5064
      %v5142 = vunpack.c.l.b16 %v5065
      %v5143 = vunpack.c.l.b16 %v5067
      %v5144 = vunpack.c.l.b16 %v5068
      %v5145 = vunpack.c.l.b16 %v5070
      %v5146 = vunpack.c.l.b16 %v5071
      %v5147 = vunpack.c.l.b16 %v5073
      %v5148 = vunpack.c.l.b16 %v5074
      %v5149 = vunpack.c.l.b16 %v5076
      %v5150 = vunpack.c.l.b16 %v5077
      %v5151 = vunpack.c.l.b16 %v5079
      %v5152 = vunpack.c.l.b16 %v5080
      %v5153 = vunpack.c.l.b16 %v5082
      %v5154 = vunpack.c.l.b16 %v5083
      %v5155 = vunpack.c.l.b16 %v5085
      %v5156 = vunpack.c.l.b16 %v5086
      %v5157 = vunpack.c.l.b16 %v5088
      %v5158 = vunpack.c.l.b16 %v5089
      %v5159 = vunpack.c.l.b16 %v5091
      %v5160 = vunpack.c.l.b16 %v5092
      %v5161 = vunpack.c.l.b16 %v5094
      %v5162 = vunpack.c.l.b16 %v5095
      %v5163 = vunpack.c.l.b16 %v5097
      %v5164 = vunpack.c.l.b16 %v5098
      %v5165 = vunpack.c.l.b16 %v5100
      %v5166 = vunpack.c.l.b16 %v5101
      %v5167 = vpack.c.b16 %v5136, %v5135
      %v5168 = vpack.c.b16 %v5138, %v5137
      %v5169 = vpack.c.b16 %v5140, %v5139
      %v5170 = vpack.c.b16 %v5142, %v5141
      %v5171 = vpack.c.b16 %v5144, %v5143
      %v5172 = vpack.c.b16 %v5146, %v5145
      %v5173 = vpack.c.b16 %v5148, %v5147
      %v5174 = vpack.c.b16 %v5150, %v5149
      %v5175 = vpack.c.b16 %v5152, %v5151
      %v5176 = vpack.c.b16 %v5154, %v5153
      %v5177 = vpack.c.b16 %v5156, %v5155
      %v5178 = vpack.c.b16 %v5158, %v5157
      %v5179 = vpack.c.b16 %v5160, %v5159
      %v5180 = vpack.c.b16 %v5162, %v5161
      %v5181 = vpack.c.b16 %v5164, %v5163
      %v5182 = vpack.c.b16 %v5166, %v5165
      %v5199 = vunpack.c.l.b16 %v5057
      %v5200 = vunpack.c.l.b16 %v5060
      %v5201 = vunpack.c.l.b16 %v5063
      %v5202 = vunpack.c.l.b16 %v5066
      %v5203 = vunpack.c.l.b16 %v5069
      %v5204 = vunpack.c.l.b16 %v5072
      %v5205 = vunpack.c.l.b16 %v5075
      %v5206 = vunpack.c.l.b16 %v5078
      %v5207 = vunpack.c.l.b16 %v5081
      %v5208 = vunpack.c.l.b16 %v5084
      %v5209 = vunpack.c.l.b16 %v5087
      %v5210 = vunpack.c.l.b16 %v5090
      %v5211 = vunpack.c.l.b16 %v5093
      %v5212 = vunpack.c.l.b16 %v5096
      %v5213 = vunpack.c.l.b16 %v5099
      %v5214 = vunpack.c.l.b16 %v5102
      %v5215 = vpack.c.b16 %v5199, %v5199
      %v5216 = vpack.c.b16 %v5200, %v5200
      %v5217 = vpack.c.b16 %v5201, %v5201
      %v5218 = vpack.c.b16 %v5202, %v5202
      %v5219 = vpack.c.b16 %v5203, %v5203
      %v5220 = vpack.c.b16 %v5204, %v5204
      %v5221 = vpack.c.b16 %v5205, %v5205
      %v5222 = vpack.c.b16 %v5206, %v5206
      %v5223 = vpack.c.b16 %v5207, %v5207
      %v5224 = vpack.c.b16 %v5208, %v5208
      %v5225 = vpack.c.b16 %v5209, %v5209
      %v5226 = vpack.c.b16 %v5210, %v5210
      %v5227 = vpack.c.b16 %v5211, %v5211
      %v5228 = vpack.c.b16 %v5212, %v5212
      %v5229 = vpack.c.b16 %v5213, %v5213
      %v5230 = vpack.c.b16 %v5214, %v5214
      %v5232 = vshrl.u32 %v5167, 16
      %v5234 = vshll.u32 %v5167, 16
      %v5236 = vrot.slane %v5234, 1
      %v5237 = vor.u32 %v5232, %v5236
      %v5239 = vshll.u32 %v5215, 16
      %v5241 = vrot.slane %v5239, 1
      %v5242 = vsel %vm1304, %v5237, %v5241
      %v5244 = vshrl.u32 %v5168, 16
      %v5246 = vshll.u32 %v5168, 16
      %v5248 = vrot.slane %v5246, 1
      %v5249 = vor.u32 %v5244, %v5248
      %v5251 = vshll.u32 %v5216, 16
      %v5253 = vrot.slane %v5251, 1
      %v5254 = vsel %vm1304, %v5249, %v5253
      %v5256 = vshrl.u32 %v5169, 16
      %v5258 = vshll.u32 %v5169, 16
      %v5260 = vrot.slane %v5258, 1
      %v5261 = vor.u32 %v5256, %v5260
      %v5263 = vshll.u32 %v5217, 16
      %v5265 = vrot.slane %v5263, 1
      %v5266 = vsel %vm1304, %v5261, %v5265
      %v5268 = vshrl.u32 %v5170, 16
      %v5270 = vshll.u32 %v5170, 16
      %v5272 = vrot.slane %v5270, 1
      %v5273 = vor.u32 %v5268, %v5272
      %v5275 = vshll.u32 %v5218, 16
      %v5277 = vrot.slane %v5275, 1
      %v5278 = vsel %vm1304, %v5273, %v5277
      %v5280 = vshrl.u32 %v5171, 16
      %v5282 = vshll.u32 %v5171, 16
      %v5284 = vrot.slane %v5282, 1
      %v5285 = vor.u32 %v5280, %v5284
      %v5287 = vshll.u32 %v5219, 16
      %v5289 = vrot.slane %v5287, 1
      %v5290 = vsel %vm1304, %v5285, %v5289
      %v5292 = vshrl.u32 %v5172, 16
      %v5294 = vshll.u32 %v5172, 16
      %v5296 = vrot.slane %v5294, 1
      %v5297 = vor.u32 %v5292, %v5296
      %v5299 = vshll.u32 %v5220, 16
      %v5301 = vrot.slane %v5299, 1
      %v5302 = vsel %vm1304, %v5297, %v5301
      %v5304 = vshrl.u32 %v5173, 16
      %v5306 = vshll.u32 %v5173, 16
      %v5308 = vrot.slane %v5306, 1
      %v5309 = vor.u32 %v5304, %v5308
      %v5311 = vshll.u32 %v5221, 16
      %v5313 = vrot.slane %v5311, 1
      %v5314 = vsel %vm1304, %v5309, %v5313
      %v5316 = vshrl.u32 %v5174, 16
      %v5318 = vshll.u32 %v5174, 16
      %v5320 = vrot.slane %v5318, 1
      %v5321 = vor.u32 %v5316, %v5320
      %v5323 = vshll.u32 %v5222, 16
      %v5325 = vrot.slane %v5323, 1
      %v5326 = vsel %vm1304, %v5321, %v5325
      %v5328 = vshrl.u32 %v5175, 16
      %v5330 = vshll.u32 %v5175, 16
      %v5332 = vrot.slane %v5330, 1
      %v5333 = vor.u32 %v5328, %v5332
      %v5335 = vshll.u32 %v5223, 16
      %v5337 = vrot.slane %v5335, 1
      %v5338 = vsel %vm1304, %v5333, %v5337
      %v5340 = vshrl.u32 %v5176, 16
      %v5342 = vshll.u32 %v5176, 16
      %v5344 = vrot.slane %v5342, 1
      %v5345 = vor.u32 %v5340, %v5344
      %v5347 = vshll.u32 %v5224, 16
      %v5349 = vrot.slane %v5347, 1
      %v5350 = vsel %vm1304, %v5345, %v5349
      %v5352 = vshrl.u32 %v5177, 16
      %v5354 = vshll.u32 %v5177, 16
      %v5356 = vrot.slane %v5354, 1
      %v5357 = vor.u32 %v5352, %v5356
      %v5359 = vshll.u32 %v5225, 16
      %v5361 = vrot.slane %v5359, 1
      %v5362 = vsel %vm1304, %v5357, %v5361
      %v5364 = vshrl.u32 %v5178, 16
      %v5366 = vshll.u32 %v5178, 16
      %v5368 = vrot.slane %v5366, 1
      %v5369 = vor.u32 %v5364, %v5368
      %v5371 = vshll.u32 %v5226, 16
      %v5373 = vrot.slane %v5371, 1
      %v5374 = vsel %vm1304, %v5369, %v5373
      %v5376 = vshrl.u32 %v5179, 16
      %v5378 = vshll.u32 %v5179, 16
      %v5380 = vrot.slane %v5378, 1
      %v5381 = vor.u32 %v5376, %v5380
      %v5383 = vshll.u32 %v5227, 16
      %v5385 = vrot.slane %v5383, 1
      %v5386 = vsel %vm1304, %v5381, %v5385
      %v5388 = vshrl.u32 %v5180, 16
      %v5390 = vshll.u32 %v5180, 16
      %v5392 = vrot.slane %v5390, 1
      %v5393 = vor.u32 %v5388, %v5392
      %v5395 = vshll.u32 %v5228, 16
      %v5397 = vrot.slane %v5395, 1
      %v5398 = vsel %vm1304, %v5393, %v5397
      %v5400 = vshrl.u32 %v5181, 16
      %v5402 = vshll.u32 %v5181, 16
      %v5404 = vrot.slane %v5402, 1
      %v5405 = vor.u32 %v5400, %v5404
      %v5407 = vshll.u32 %v5229, 16
      %v5409 = vrot.slane %v5407, 1
      %v5410 = vsel %vm1304, %v5405, %v5409
      %v5412 = vshrl.u32 %v5182, 16
      %v5414 = vshll.u32 %v5182, 16
      %v5416 = vrot.slane %v5414, 1
      %v5417 = vor.u32 %v5412, %v5416
      %v5419 = vshll.u32 %v5230, 16
      %v5421 = vrot.slane %v5419, 1
      %v5422 = vsel %vm1304, %v5417, %v5421
      %5423 = vrot.lane.b32.xlu0 %v5242, 4
      %v5424 = vpop.permute.xlu0 %5423
      %5425 = vrot.lane.b32.xlu0 %v5254, 4
      %v5426 = vpop.permute.xlu0 %5425
      %5427 = vrot.lane.b32.xlu0 %v5266, 4
      %v5428 = vpop.permute.xlu0 %5427
      %5429 = vrot.lane.b32.xlu0 %v5278, 4
      %v5430 = vpop.permute.xlu0 %5429
      %5431 = vrot.lane.b32.xlu0 %v5290, 4
      %v5432 = vpop.permute.xlu0 %5431
      %5433 = vrot.lane.b32.xlu0 %v5302, 4
      %v5434 = vpop.permute.xlu0 %5433
      %5435 = vrot.lane.b32.xlu0 %v5314, 4
      %v5436 = vpop.permute.xlu0 %5435
      %5437 = vrot.lane.b32.xlu0 %v5326, 4
      %v5438 = vpop.permute.xlu0 %5437
      %5439 = vrot.lane.b32.xlu0 %v5338, 4
      %v5440 = vpop.permute.xlu0 %5439
      %5441 = vrot.lane.b32.xlu0 %v5350, 4
      %v5442 = vpop.permute.xlu0 %5441
      %5443 = vrot.lane.b32.xlu0 %v5362, 4
      %v5444 = vpop.permute.xlu0 %5443
      %5445 = vrot.lane.b32.xlu0 %v5374, 4
      %v5446 = vpop.permute.xlu0 %5445
      %5447 = vrot.lane.b32.xlu0 %v5386, 4
      %v5448 = vpop.permute.xlu0 %5447
      %5449 = vrot.lane.b32.xlu0 %v5398, 4
      %v5450 = vpop.permute.xlu0 %5449
      %5451 = vrot.lane.b32.xlu0 %v5410, 4
      %v5452 = vpop.permute.xlu0 %5451
      %5453 = vrot.lane.b32.xlu0 %v5422, 4
      %v5454 = vpop.permute.xlu0 %5453
      %v5455 = vrot.slane %v5167, 1
      %v5456 = vrot.slane %v5215, 1
      %v5457 = vsel %vm1529, %v5455, %v5456
      %v5458 = vrot.slane %v5168, 1
      %v5459 = vrot.slane %v5216, 1
      %v5460 = vsel %vm1529, %v5458, %v5459
      %v5461 = vrot.slane %v5169, 1
      %v5462 = vrot.slane %v5217, 1
      %v5463 = vsel %vm1529, %v5461, %v5462
      %v5464 = vrot.slane %v5170, 1
      %v5465 = vrot.slane %v5218, 1
      %v5466 = vsel %vm1529, %v5464, %v5465
      %v5467 = vrot.slane %v5171, 1
      %v5468 = vrot.slane %v5219, 1
      %v5469 = vsel %vm1529, %v5467, %v5468
      %v5470 = vrot.slane %v5172, 1
      %v5471 = vrot.slane %v5220, 1
      %v5472 = vsel %vm1529, %v5470, %v5471
      %v5473 = vrot.slane %v5173, 1
      %v5474 = vrot.slane %v5221, 1
      %v5475 = vsel %vm1529, %v5473, %v5474
      %v5476 = vrot.slane %v5174, 1
      %v5477 = vrot.slane %v5222, 1
      %v5478 = vsel %vm1529, %v5476, %v5477
      %v5479 = vrot.slane %v5175, 1
      %v5480 = vrot.slane %v5223, 1
      %v5481 = vsel %vm1529, %v5479, %v5480
      %v5482 = vrot.slane %v5176, 1
      %v5483 = vrot.slane %v5224, 1
      %v5484 = vsel %vm1529, %v5482, %v5483
      %v5485 = vrot.slane %v5177, 1
      %v5486 = vrot.slane %v5225, 1
      %v5487 = vsel %vm1529, %v5485, %v5486
      %v5488 = vrot.slane %v5178, 1
      %v5489 = vrot.slane %v5226, 1
      %v5490 = vsel %vm1529, %v5488, %v5489
      %v5491 = vrot.slane %v5179, 1
      %v5492 = vrot.slane %v5227, 1
      %v5493 = vsel %vm1529, %v5491, %v5492
      %v5494 = vrot.slane %v5180, 1
      %v5495 = vrot.slane %v5228, 1
      %v5496 = vsel %vm1529, %v5494, %v5495
      %v5497 = vrot.slane %v5181, 1
      %v5498 = vrot.slane %v5229, 1
      %v5499 = vsel %vm1529, %v5497, %v5498
      %v5500 = vrot.slane %v5182, 1
      %v5501 = vrot.slane %v5230, 1
      %v5502 = vsel %vm1529, %v5500, %v5501
      %5503 = vrot.lane.b32.xlu0 %v5457, 8
      %v5504 = vpop.permute.xlu0 %5503
      %5505 = vrot.lane.b32.xlu0 %v5460, 8
      %v5506 = vpop.permute.xlu0 %5505
      %5507 = vrot.lane.b32.xlu0 %v5463, 8
      %v5508 = vpop.permute.xlu0 %5507
      %5509 = vrot.lane.b32.xlu0 %v5466, 8
      %v5510 = vpop.permute.xlu0 %5509
      %5511 = vrot.lane.b32.xlu0 %v5469, 8
      %v5512 = vpop.permute.xlu0 %5511
      %5513 = vrot.lane.b32.xlu0 %v5472, 8
      %v5514 = vpop.permute.xlu0 %5513
      %5515 = vrot.lane.b32.xlu0 %v5475, 8
      %v5516 = vpop.permute.xlu0 %5515
      %5517 = vrot.lane.b32.xlu0 %v5478, 8
      %v5518 = vpop.permute.xlu0 %5517
      %5519 = vrot.lane.b32.xlu0 %v5481, 8
      %v5520 = vpop.permute.xlu0 %5519
      %5521 = vrot.lane.b32.xlu0 %v5484, 8
      %v5522 = vpop.permute.xlu0 %5521
      %5523 = vrot.lane.b32.xlu0 %v5487, 8
      %v5524 = vpop.permute.xlu0 %5523
      %5525 = vrot.lane.b32.xlu0 %v5490, 8
      %v5526 = vpop.permute.xlu0 %5525
      %5527 = vrot.lane.b32.xlu0 %v5493, 8
      %v5528 = vpop.permute.xlu0 %5527
      %5529 = vrot.lane.b32.xlu0 %v5496, 8
      %v5530 = vpop.permute.xlu0 %5529
      %5531 = vrot.lane.b32.xlu0 %v5499, 8
      %v5532 = vpop.permute.xlu0 %5531
      %5533 = vrot.lane.b32.xlu0 %v5502, 8
      %v5534 = vpop.permute.xlu0 %5533
      %v5536 = vsel %vm1610, %v5167, %v5424
      %v5538 = vsel %vm1610, %v5168, %v5426
      %v5540 = vsel %vm1610, %v5169, %v5428
      %v5542 = vsel %vm1610, %v5170, %v5430
      %v5544 = vsel %vm1610, %v5171, %v5432
      %v5546 = vsel %vm1610, %v5172, %v5434
      %v5548 = vsel %vm1610, %v5173, %v5436
      %v5550 = vsel %vm1610, %v5174, %v5438
      %v5552 = vsel %vm1610, %v5175, %v5440
      %v5554 = vsel %vm1610, %v5176, %v5442
      %v5556 = vsel %vm1610, %v5177, %v5444
      %v5558 = vsel %vm1610, %v5178, %v5446
      %v5560 = vsel %vm1610, %v5179, %v5448
      %v5562 = vsel %vm1610, %v5180, %v5450
      %v5564 = vsel %vm1610, %v5181, %v5452
      %v5566 = vsel %vm1610, %v5182, %v5454
      %v5568 = vsel %vm1643, %v5536, %v5504
      %v5570 = vsel %vm1643, %v5538, %v5506
      %v5572 = vsel %vm1643, %v5540, %v5508
      %v5574 = vsel %vm1643, %v5542, %v5510
      %v5576 = vsel %vm1643, %v5544, %v5512
      %v5578 = vsel %vm1643, %v5546, %v5514
      %v5580 = vsel %vm1643, %v5548, %v5516
      %v5582 = vsel %vm1643, %v5550, %v5518
      %v5584 = vsel %vm1643, %v5552, %v5520
      %v5586 = vsel %vm1643, %v5554, %v5522
      %v5588 = vsel %vm1643, %v5556, %v5524
      %v5590 = vsel %vm1643, %v5558, %v5526
      %v5592 = vsel %vm1643, %v5560, %v5528
      %v5594 = vsel %vm1643, %v5562, %v5530
      %v5596 = vsel %vm1643, %v5564, %v5532
      %v5598 = vsel %vm1643, %v5566, %v5534
      %s5599 = scalar_lea.vmem %s2, 8
      %v5600 = vld [vmem:[%s5599] sm:$0xf]
      %v5601 = vld [vmem:[%s5599 + $0x4] sm:$0x3]
      %v5604 = vunpack.c.l.b16 %v5600
      %v5605 = vunpack.c.l.b16 %v5601
      %v5606 = vpack.c.b16 %v5605, %v5604
      %v5607 = vsel %vm2230, %v5568, 0
      %v5609 = vsel %vm2230, %v5570, 0
      %v5611 = vsel %vm2230, %v5572, 0
      %v5613 = vsel %vm2230, %v5574, 0
      %v5615 = vsel %vm2230, %v5576, 0
      %v5617 = vsel %vm2230, %v5578, 0
      %v5619 = vsel %vm2230, %v5580, 0
      %v5621 = vsel %vm2230, %v5582, 0
      %v5623 = vsel %vm2230, %v5584, 0
      %v5625 = vsel %vm2230, %v5586, 0
      %v5627 = vsel %vm2230, %v5588, 0
      %v5629 = vsel %vm2230, %v5590, 0
      %v5631 = vsel %vm2230, %v5592, 0
      %v5633 = vsel %vm2230, %v5594, 0
      %v5635 = vsel %vm2230, %v5596, 0
      %v5637 = vsel %vm2230, %v5598, 0
      %v5640 = vsel %vm2263, %v5606, 0
      %5642 = vmatprep.subr.bf16.mxu0 0
      %5643 = vmatpush1.bf16.msra.mxu0 0
      %5644 = vmatprep.subr.bf16.mxu0 0
      %5645 = vmatpush1.bf16.msra.mxu0 0
      %5646 = vmatprep.subr.bf16.mxu0 0
      %5647 = vmatpush1.bf16.msra.mxu0 0
      %5648 = vmatprep.subr.bf16.mxu0 0
      %5649 = vmatpush1.bf16.msra.mxu0 0
      %5650 = vmatprep.subr.bf16.mxu0 0
      %5651 = vmatpush1.bf16.msra.mxu0 0
      %5652 = vmatprep.subr.bf16.mxu0 0
      %5653 = vmatpush1.bf16.msra.mxu0 0
      %5654 = vmatprep.subr.bf16.mxu0 0
      %5655 = vmatpush1.bf16.msra.mxu0 0
      %5656 = vmatprep.subr.bf16.mxu0 0
      %5657 = vmatpush1.bf16.msra.mxu0 %v5640
      %5658 = vmatprep.subr.bf16.mxu0 0
      %5659 = vmatpush2.bf16.msra.mxu0 0
      %5660 = vmatprep.subr.bf16.mxu0 0
      %5661 = vmatpush2.bf16.msra.mxu0 0
      %5662 = vmatprep.subr.bf16.mxu0 0
      %5663 = vmatpush2.bf16.msra.mxu0 0
      %5664 = vmatprep.subr.bf16.mxu0 0
      %5665 = vmatpush2.bf16.msra.mxu0 0
      %5666 = vmatprep.subr.bf16.mxu0 0
      %5667 = vmatpush2.bf16.msra.mxu0 0
      %5668 = vmatprep.subr.bf16.mxu0 0
      %5669 = vmatpush2.bf16.msra.mxu0 0
      %5670 = vmatprep.subr.bf16.mxu0 0
      %5671 = vmatpush2.bf16.msra.mxu0 0
      %5672 = vmatprep.subr.bf16.mxu0 0
      %5673 = vmatpush2.bf16.msra.mxu0 0
      %5674 = vmatprep.mubr.bf16.mxu0 0
      %5675 = vmatmul.mubr.bf16.gmra.mxu0 %v5607
      %v5676 = vpop.f32.mrf.mxu0
      %v5677 = vadd.f32 0.0, %v5676
      %v5678 = vpop.f32.mrf.mxu0
      %v5679 = vpop.f32.mrf.mxu0
      %v5680 = vadd.f32 0.0, %v5679
      %v5681 = vpop.f32.mrf.mxu0
      %5682 = vmatprep.mubr.bf16.mxu0 0
      %5683 = vmatmul.mubr.bf16.gmra.mxu0 %v5609
      %v5684 = vpop.f32.mrf.mxu0
      %v5685 = vadd.f32 0.0, %v5684
      %v5686 = vpop.f32.mrf.mxu0
      %v5687 = vpop.f32.mrf.mxu0
      %v5688 = vadd.f32 0.0, %v5687
      %v5689 = vpop.f32.mrf.mxu0
      %5690 = vmatprep.mubr.bf16.mxu0 0
      %5691 = vmatmul.mubr.bf16.gmra.mxu0 %v5611
      %v5692 = vpop.f32.mrf.mxu0
      %v5693 = vadd.f32 0.0, %v5692
      %v5694 = vpop.f32.mrf.mxu0
      %v5695 = vpop.f32.mrf.mxu0
      %v5696 = vadd.f32 0.0, %v5695
      %v5697 = vpop.f32.mrf.mxu0
      %5698 = vmatprep.mubr.bf16.mxu0 0
      %5699 = vmatmul.mubr.bf16.gmra.mxu0 %v5613
      %v5700 = vpop.f32.mrf.mxu0
      %v5701 = vadd.f32 0.0, %v5700
      %v5702 = vpop.f32.mrf.mxu0
      %v5703 = vpop.f32.mrf.mxu0
      %v5704 = vadd.f32 0.0, %v5703
      %v5705 = vpop.f32.mrf.mxu0
      %5706 = vmatprep.mubr.bf16.mxu0 0
      %5707 = vmatmul.mubr.bf16.gmra.mxu0 %v5615
      %v5708 = vpop.f32.mrf.mxu0
      %v5709 = vadd.f32 0.0, %v5708
      %v5710 = vpop.f32.mrf.mxu0
      %v5711 = vpop.f32.mrf.mxu0
      %v5712 = vadd.f32 0.0, %v5711
      %v5713 = vpop.f32.mrf.mxu0
      %5714 = vmatprep.mubr.bf16.mxu0 0
      %5715 = vmatmul.mubr.bf16.gmra.mxu0 %v5617
      %v5716 = vpop.f32.mrf.mxu0
      %v5717 = vadd.f32 0.0, %v5716
      %v5718 = vpop.f32.mrf.mxu0
      %v5719 = vpop.f32.mrf.mxu0
      %v5720 = vadd.f32 0.0, %v5719
      %v5721 = vpop.f32.mrf.mxu0
      %5722 = vmatprep.mubr.bf16.mxu0 0
      %5723 = vmatmul.mubr.bf16.gmra.mxu0 %v5619
      %v5724 = vpop.f32.mrf.mxu0
      %v5725 = vadd.f32 0.0, %v5724
      %v5726 = vpop.f32.mrf.mxu0
      %v5727 = vpop.f32.mrf.mxu0
      %v5728 = vadd.f32 0.0, %v5727
      %v5729 = vpop.f32.mrf.mxu0
      %5730 = vmatprep.mubr.bf16.mxu0 0
      %5731 = vmatmul.mubr.bf16.gmra.mxu0 %v5621
      %v5732 = vpop.f32.mrf.mxu0
      %v5733 = vadd.f32 0.0, %v5732
      %v5734 = vpop.f32.mrf.mxu0
      %v5735 = vpop.f32.mrf.mxu0
      %v5736 = vadd.f32 0.0, %v5735
      %v5737 = vpop.f32.mrf.mxu0
      %5738 = vmatprep.mubr.bf16.mxu0 0
      %5739 = vmatmul.mubr.bf16.gmra.mxu0 %v5623
      %v5740 = vpop.f32.mrf.mxu0
      %v5741 = vadd.f32 0.0, %v5740
      %v5742 = vpop.f32.mrf.mxu0
      %v5743 = vpop.f32.mrf.mxu0
      %v5744 = vadd.f32 0.0, %v5743
      %v5745 = vpop.f32.mrf.mxu0
      %5746 = vmatprep.mubr.bf16.mxu0 0
      %5747 = vmatmul.mubr.bf16.gmra.mxu0 %v5625
      %v5748 = vpop.f32.mrf.mxu0
      %v5749 = vadd.f32 0.0, %v5748
      %v5750 = vpop.f32.mrf.mxu0
      %v5751 = vpop.f32.mrf.mxu0
      %v5752 = vadd.f32 0.0, %v5751
      %v5753 = vpop.f32.mrf.mxu0
      %5754 = vmatprep.mubr.bf16.mxu0 0
      %5755 = vmatmul.mubr.bf16.gmra.mxu0 %v5627
      %v5756 = vpop.f32.mrf.mxu0
      %v5757 = vadd.f32 0.0, %v5756
      %v5758 = vpop.f32.mrf.mxu0
      %v5759 = vpop.f32.mrf.mxu0
      %v5760 = vadd.f32 0.0, %v5759
      %v5761 = vpop.f32.mrf.mxu0
      %5762 = vmatprep.mubr.bf16.mxu0 0
      %5763 = vmatmul.mubr.bf16.gmra.mxu0 %v5629
      %v5764 = vpop.f32.mrf.mxu0
      %v5765 = vadd.f32 0.0, %v5764
      %v5766 = vpop.f32.mrf.mxu0
      %v5767 = vpop.f32.mrf.mxu0
      %v5768 = vadd.f32 0.0, %v5767
      %v5769 = vpop.f32.mrf.mxu0
      %5770 = vmatprep.mubr.bf16.mxu0 0
      %5771 = vmatmul.mubr.bf16.gmra.mxu0 %v5631
      %v5772 = vpop.f32.mrf.mxu0
      %v5773 = vadd.f32 0.0, %v5772
      %v5774 = vpop.f32.mrf.mxu0
      %v5775 = vpop.f32.mrf.mxu0
      %v5776 = vadd.f32 0.0, %v5775
      %v5777 = vpop.f32.mrf.mxu0
      %5778 = vmatprep.mubr.bf16.mxu0 0
      %5779 = vmatmul.mubr.bf16.gmra.mxu0 %v5633
      %v5780 = vpop.f32.mrf.mxu0
      %v5781 = vadd.f32 0.0, %v5780
      %v5782 = vpop.f32.mrf.mxu0
      %v5783 = vpop.f32.mrf.mxu0
      %v5784 = vadd.f32 0.0, %v5783
      %v5785 = vpop.f32.mrf.mxu0
      %5786 = vmatprep.mubr.bf16.mxu0 0
      %5787 = vmatmul.mubr.bf16.gmra.mxu0 %v5635
      %v5788 = vpop.f32.mrf.mxu0
      %v5789 = vadd.f32 0.0, %v5788
      %v5790 = vpop.f32.mrf.mxu0
      %v5791 = vpop.f32.mrf.mxu0
      %v5792 = vadd.f32 0.0, %v5791
      %v5793 = vpop.f32.mrf.mxu0
      %5794 = vmatprep.mubr.bf16.mxu0 0
      %5795 = vmatmul.mubr.bf16.gmra.mxu0 %v5637
      %v5796 = vpop.f32.mrf.mxu0
      %v5797 = vadd.f32 0.0, %v5796
      %v5798 = vpop.f32.mrf.mxu0
      %v5799 = vpop.f32.mrf.mxu0
      %v5800 = vadd.f32 0.0, %v5799
      %v5801 = vpop.f32.mrf.mxu0
      %5802 = vdwg.mxu0
      %v5805 = vunpack.c.l.b16 %v5053
      %v5806 = vunpack.c.l.b16 %v5054
      %v5807 = vpack.c.b16 %v5806, %v5805
      %v5808 = vsel %vm2230, %v5022, 0
      %v5810 = vsel %vm2230, %v5024, 0
      %v5812 = vsel %vm2230, %v5026, 0
      %v5814 = vsel %vm2230, %v5028, 0
      %v5816 = vsel %vm2230, %v5030, 0
      %v5818 = vsel %vm2230, %v5032, 0
      %v5820 = vsel %vm2230, %v5034, 0
      %v5822 = vsel %vm2230, %v5036, 0
      %v5824 = vsel %vm2230, %v5038, 0
      %v5826 = vsel %vm2230, %v5040, 0
      %v5828 = vsel %vm2230, %v5042, 0
      %v5830 = vsel %vm2230, %v5044, 0
      %v5832 = vsel %vm2230, %v5046, 0
      %v5834 = vsel %vm2230, %v5048, 0
      %v5836 = vsel %vm2230, %v5050, 0
      %v5838 = vsel %vm2230, %v5052, 0
      %v5841 = vsel %vm2263, %v5807, 0
      %5843 = vmatprep.subr.bf16.mxu0 0
      %5844 = vmatpush1.bf16.msra.mxu0 0
      %5845 = vmatprep.subr.bf16.mxu0 0
      %5846 = vmatpush1.bf16.msra.mxu0 0
      %5847 = vmatprep.subr.bf16.mxu0 0
      %5848 = vmatpush1.bf16.msra.mxu0 0
      %5849 = vmatprep.subr.bf16.mxu0 0
      %5850 = vmatpush1.bf16.msra.mxu0 0
      %5851 = vmatprep.subr.bf16.mxu0 0
      %5852 = vmatpush1.bf16.msra.mxu0 0
      %5853 = vmatprep.subr.bf16.mxu0 0
      %5854 = vmatpush1.bf16.msra.mxu0 0
      %5855 = vmatprep.subr.bf16.mxu0 0
      %5856 = vmatpush1.bf16.msra.mxu0 0
      %5857 = vmatprep.subr.bf16.mxu0 0
      %5858 = vmatpush1.bf16.msra.mxu0 %v5841
      %5859 = vmatprep.subr.bf16.mxu0 0
      %5860 = vmatpush2.bf16.msra.mxu0 0
      %5861 = vmatprep.subr.bf16.mxu0 0
      %5862 = vmatpush2.bf16.msra.mxu0 0
      %5863 = vmatprep.subr.bf16.mxu0 0
      %5864 = vmatpush2.bf16.msra.mxu0 0
      %5865 = vmatprep.subr.bf16.mxu0 0
      %5866 = vmatpush2.bf16.msra.mxu0 0
      %5867 = vmatprep.subr.bf16.mxu0 0
      %5868 = vmatpush2.bf16.msra.mxu0 0
      %5869 = vmatprep.subr.bf16.mxu0 0
      %5870 = vmatpush2.bf16.msra.mxu0 0
      %5871 = vmatprep.subr.bf16.mxu0 0
      %5872 = vmatpush2.bf16.msra.mxu0 0
      %5873 = vmatprep.subr.bf16.mxu0 0
      %5874 = vmatpush2.bf16.msra.mxu0 0
      %5875 = vmatprep.mubr.bf16.mxu0 0
      %5876 = vmatmul.mubr.bf16.gmra.mxu0 %v5808
      %v5877 = vpop.f32.mrf.mxu0
      %v5878 = vadd.f32 %v5677, %v5877
      %v5879 = vpop.f32.mrf.mxu0
      %v5880 = vpop.f32.mrf.mxu0
      %v5881 = vadd.f32 %v5680, %v5880
      %v5882 = vpop.f32.mrf.mxu0
      %5883 = vmatprep.mubr.bf16.mxu0 0
      %5884 = vmatmul.mubr.bf16.gmra.mxu0 %v5810
      %v5885 = vpop.f32.mrf.mxu0
      %v5886 = vadd.f32 %v5685, %v5885
      %v5887 = vpop.f32.mrf.mxu0
      %v5888 = vpop.f32.mrf.mxu0
      %v5889 = vadd.f32 %v5688, %v5888
      %v5890 = vpop.f32.mrf.mxu0
      %5891 = vmatprep.mubr.bf16.mxu0 0
      %5892 = vmatmul.mubr.bf16.gmra.mxu0 %v5812
      %v5893 = vpop.f32.mrf.mxu0
      %v5894 = vadd.f32 %v5693, %v5893
      %v5895 = vpop.f32.mrf.mxu0
      %v5896 = vpop.f32.mrf.mxu0
      %v5897 = vadd.f32 %v5696, %v5896
      %v5898 = vpop.f32.mrf.mxu0
      %5899 = vmatprep.mubr.bf16.mxu0 0
      %5900 = vmatmul.mubr.bf16.gmra.mxu0 %v5814
      %v5901 = vpop.f32.mrf.mxu0
      %v5902 = vadd.f32 %v5701, %v5901
      %v5903 = vpop.f32.mrf.mxu0
      %v5904 = vpop.f32.mrf.mxu0
      %v5905 = vadd.f32 %v5704, %v5904
      %v5906 = vpop.f32.mrf.mxu0
      %5907 = vmatprep.mubr.bf16.mxu0 0
      %5908 = vmatmul.mubr.bf16.gmra.mxu0 %v5816
      %v5909 = vpop.f32.mrf.mxu0
      %v5910 = vadd.f32 %v5709, %v5909
      %v5911 = vpop.f32.mrf.mxu0
      %v5912 = vpop.f32.mrf.mxu0
      %v5913 = vadd.f32 %v5712, %v5912
      %v5914 = vpop.f32.mrf.mxu0
      %5915 = vmatprep.mubr.bf16.mxu0 0
      %5916 = vmatmul.mubr.bf16.gmra.mxu0 %v5818
      %v5917 = vpop.f32.mrf.mxu0
      %v5918 = vadd.f32 %v5717, %v5917
      %v5919 = vpop.f32.mrf.mxu0
      %v5920 = vpop.f32.mrf.mxu0
      %v5921 = vadd.f32 %v5720, %v5920
      %v5922 = vpop.f32.mrf.mxu0
      %5923 = vmatprep.mubr.bf16.mxu0 0
      %5924 = vmatmul.mubr.bf16.gmra.mxu0 %v5820
      %v5925 = vpop.f32.mrf.mxu0
      %v5926 = vadd.f32 %v5725, %v5925
      %v5927 = vpop.f32.mrf.mxu0
      %v5928 = vpop.f32.mrf.mxu0
      %v5929 = vadd.f32 %v5728, %v5928
      %v5930 = vpop.f32.mrf.mxu0
      %5931 = vmatprep.mubr.bf16.mxu0 0
      %5932 = vmatmul.mubr.bf16.gmra.mxu0 %v5822
      %v5933 = vpop.f32.mrf.mxu0
      %v5934 = vadd.f32 %v5733, %v5933
      %v5935 = vpop.f32.mrf.mxu0
      %v5936 = vpop.f32.mrf.mxu0
      %v5937 = vadd.f32 %v5736, %v5936
      %v5938 = vpop.f32.mrf.mxu0
      %5939 = vmatprep.mubr.bf16.mxu0 0
      %5940 = vmatmul.mubr.bf16.gmra.mxu0 %v5824
      %v5941 = vpop.f32.mrf.mxu0
      %v5942 = vadd.f32 %v5741, %v5941
      %v5943 = vpop.f32.mrf.mxu0
      %v5944 = vpop.f32.mrf.mxu0
      %v5945 = vadd.f32 %v5744, %v5944
      %v5946 = vpop.f32.mrf.mxu0
      %5947 = vmatprep.mubr.bf16.mxu0 0
      %5948 = vmatmul.mubr.bf16.gmra.mxu0 %v5826
      %v5949 = vpop.f32.mrf.mxu0
      %v5950 = vadd.f32 %v5749, %v5949
      %v5951 = vpop.f32.mrf.mxu0
      %v5952 = vpop.f32.mrf.mxu0
      %v5953 = vadd.f32 %v5752, %v5952
      %v5954 = vpop.f32.mrf.mxu0
      %5955 = vmatprep.mubr.bf16.mxu0 0
      %5956 = vmatmul.mubr.bf16.gmra.mxu0 %v5828
      %v5957 = vpop.f32.mrf.mxu0
      %v5958 = vadd.f32 %v5757, %v5957
      %v5959 = vpop.f32.mrf.mxu0
      %v5960 = vpop.f32.mrf.mxu0
      %v5961 = vadd.f32 %v5760, %v5960
      %v5962 = vpop.f32.mrf.mxu0
      %5963 = vmatprep.mubr.bf16.mxu0 0
      %5964 = vmatmul.mubr.bf16.gmra.mxu0 %v5830
      %v5965 = vpop.f32.mrf.mxu0
      %v5966 = vadd.f32 %v5765, %v5965
      %v5967 = vpop.f32.mrf.mxu0
      %v5968 = vpop.f32.mrf.mxu0
      %v5969 = vadd.f32 %v5768, %v5968
      %v5970 = vpop.f32.mrf.mxu0
      %5971 = vmatprep.mubr.bf16.mxu0 0
      %5972 = vmatmul.mubr.bf16.gmra.mxu0 %v5832
      %v5973 = vpop.f32.mrf.mxu0
      %v5974 = vadd.f32 %v5773, %v5973
      %v5975 = vpop.f32.mrf.mxu0
      %v5976 = vpop.f32.mrf.mxu0
      %v5977 = vadd.f32 %v5776, %v5976
      %v5978 = vpop.f32.mrf.mxu0
      %5979 = vmatprep.mubr.bf16.mxu0 0
      %5980 = vmatmul.mubr.bf16.gmra.mxu0 %v5834
      %v5981 = vpop.f32.mrf.mxu0
      %v5982 = vadd.f32 %v5781, %v5981
      %v5983 = vpop.f32.mrf.mxu0
      %v5984 = vpop.f32.mrf.mxu0
      %v5985 = vadd.f32 %v5784, %v5984
      %v5986 = vpop.f32.mrf.mxu0
      %5987 = vmatprep.mubr.bf16.mxu0 0
      %5988 = vmatmul.mubr.bf16.gmra.mxu0 %v5836
      %v5989 = vpop.f32.mrf.mxu0
      %v5990 = vadd.f32 %v5789, %v5989
      %v5991 = vpop.f32.mrf.mxu0
      %v5992 = vpop.f32.mrf.mxu0
      %v5993 = vadd.f32 %v5792, %v5992
      %v5994 = vpop.f32.mrf.mxu0
      %5995 = vmatprep.mubr.bf16.mxu0 0
      %5996 = vmatmul.mubr.bf16.gmra.mxu0 %v5838
      %v5997 = vpop.f32.mrf.mxu0
      %v5998 = vadd.f32 %v5797, %v5997
      %v5999 = vpop.f32.mrf.mxu0
      %v6000 = vpop.f32.mrf.mxu0
      %v6001 = vadd.f32 %v5800, %v6000
      %v6002 = vpop.f32.mrf.mxu0
      %6003 = vdwg.mxu0
      %v6004 = vld [vmem:[%s2629] sm:$0xf]
      %v6005 = vld [vmem:[%s2629 + $0x4] sm:$0xf]
      %v6006 = vld [vmem:[%s2629 + $0x8] sm:$0x1]
      %v6007 = vld [vmem:[%s2629 + $0xc] sm:$0xf]
      %v6008 = vld [vmem:[%s2629 + $0x10] sm:$0xf]
      %v6009 = vld [vmem:[%s2629 + $0x14] sm:$0x1]
      %v6010 = vld [vmem:[%s2629 + $0x18] sm:$0xf]
      %v6011 = vld [vmem:[%s2629 + $0x1c] sm:$0xf]
      %v6012 = vld [vmem:[%s2629 + $0x20] sm:$0x1]
      %v6013 = vld [vmem:[%s2629 + $0x24] sm:$0xf]
      %v6014 = vld [vmem:[%s2629 + $0x28] sm:$0xf]
      %v6015 = vld [vmem:[%s2629 + $0x2c] sm:$0x1]
      %v6016 = vld [vmem:[%s2629 + $0x30] sm:$0xf]
      %v6017 = vld [vmem:[%s2629 + $0x34] sm:$0xf]
      %v6018 = vld [vmem:[%s2629 + $0x38] sm:$0x1]
      %v6019 = vld [vmem:[%s2629 + $0x3c] sm:$0xf]
      %v6020 = vld [vmem:[%s2629 + $0x40] sm:$0xf]
      %v6021 = vld [vmem:[%s2629 + $0x44] sm:$0x1]
      %v6022 = vld [vmem:[%s2629 + $0x48] sm:$0xf]
      %v6023 = vld [vmem:[%s2629 + $0x4c] sm:$0xf]
      %v6024 = vld [vmem:[%s2629 + $0x50] sm:$0x1]
      %v6025 = vld [vmem:[%s2629 + $0x54] sm:$0xf]
      %v6026 = vld [vmem:[%s2629 + $0x58] sm:$0xf]
      %v6027 = vld [vmem:[%s2629 + $0x5c] sm:$0x1]
      %v6028 = vld [vmem:[%s2629 + $0x60] sm:$0xf]
      %v6029 = vld [vmem:[%s2629 + $0x64] sm:$0xf]
      %v6030 = vld [vmem:[%s2629 + $0x68] sm:$0x1]
      %v6031 = vld [vmem:[%s2629 + $0x6c] sm:$0xf]
      %v6032 = vld [vmem:[%s2629 + $0x70] sm:$0xf]
      %v6033 = vld [vmem:[%s2629 + $0x74] sm:$0x1]
      %v6034 = vld [vmem:[%s2629 + $0x78] sm:$0xf]
      %v6035 = vld [vmem:[%s2629 + $0x7c] sm:$0xf]
      %v6036 = vld [vmem:[%s2629 + $0x80] sm:$0x1]
      %v6037 = vld [vmem:[%s2629 + $0x84] sm:$0xf]
      %v6038 = vld [vmem:[%s2629 + $0x88] sm:$0xf]
      %v6039 = vld [vmem:[%s2629 + $0x8c] sm:$0x1]
      %v6040 = vld [vmem:[%s2629 + $0x90] sm:$0xf]
      %v6041 = vld [vmem:[%s2629 + $0x94] sm:$0xf]
      %v6042 = vld [vmem:[%s2629 + $0x98] sm:$0x1]
      %v6043 = vld [vmem:[%s2629 + $0x9c] sm:$0xf]
      %v6044 = vld [vmem:[%s2629 + $0xa0] sm:$0xf]
      %v6045 = vld [vmem:[%s2629 + $0xa4] sm:$0x1]
      %v6046 = vld [vmem:[%s2629 + $0xa8] sm:$0xf]
      %v6047 = vld [vmem:[%s2629 + $0xac] sm:$0xf]
      %v6048 = vld [vmem:[%s2629 + $0xb0] sm:$0x1]
      %v6049 = vld [vmem:[%s2629 + $0xb4] sm:$0xf]
      %v6050 = vld [vmem:[%s2629 + $0xb8] sm:$0xf]
      %v6051 = vld [vmem:[%s2629 + $0xbc] sm:$0x1]
      %v6084 = vunpack.c.l.b16 %v6004
      %v6085 = vunpack.c.l.b16 %v6005
      %v6086 = vunpack.c.l.b16 %v6007
      %v6087 = vunpack.c.l.b16 %v6008
      %v6088 = vunpack.c.l.b16 %v6010
      %v6089 = vunpack.c.l.b16 %v6011
      %v6090 = vunpack.c.l.b16 %v6013
      %v6091 = vunpack.c.l.b16 %v6014
      %v6092 = vunpack.c.l.b16 %v6016
      %v6093 = vunpack.c.l.b16 %v6017
      %v6094 = vunpack.c.l.b16 %v6019
      %v6095 = vunpack.c.l.b16 %v6020
      %v6096 = vunpack.c.l.b16 %v6022
      %v6097 = vunpack.c.l.b16 %v6023
      %v6098 = vunpack.c.l.b16 %v6025
      %v6099 = vunpack.c.l.b16 %v6026
      %v6100 = vunpack.c.l.b16 %v6028
      %v6101 = vunpack.c.l.b16 %v6029
      %v6102 = vunpack.c.l.b16 %v6031
      %v6103 = vunpack.c.l.b16 %v6032
      %v6104 = vunpack.c.l.b16 %v6034
      %v6105 = vunpack.c.l.b16 %v6035
      %v6106 = vunpack.c.l.b16 %v6037
      %v6107 = vunpack.c.l.b16 %v6038
      %v6108 = vunpack.c.l.b16 %v6040
      %v6109 = vunpack.c.l.b16 %v6041
      %v6110 = vunpack.c.l.b16 %v6043
      %v6111 = vunpack.c.l.b16 %v6044
      %v6112 = vunpack.c.l.b16 %v6046
      %v6113 = vunpack.c.l.b16 %v6047
      %v6114 = vunpack.c.l.b16 %v6049
      %v6115 = vunpack.c.l.b16 %v6050
      %v6116 = vpack.c.b16 %v6085, %v6084
      %v6117 = vpack.c.b16 %v6087, %v6086
      %v6118 = vpack.c.b16 %v6089, %v6088
      %v6119 = vpack.c.b16 %v6091, %v6090
      %v6120 = vpack.c.b16 %v6093, %v6092
      %v6121 = vpack.c.b16 %v6095, %v6094
      %v6122 = vpack.c.b16 %v6097, %v6096
      %v6123 = vpack.c.b16 %v6099, %v6098
      %v6124 = vpack.c.b16 %v6101, %v6100
      %v6125 = vpack.c.b16 %v6103, %v6102
      %v6126 = vpack.c.b16 %v6105, %v6104
      %v6127 = vpack.c.b16 %v6107, %v6106
      %v6128 = vpack.c.b16 %v6109, %v6108
      %v6129 = vpack.c.b16 %v6111, %v6110
      %v6130 = vpack.c.b16 %v6113, %v6112
      %v6131 = vpack.c.b16 %v6115, %v6114
      %v6148 = vunpack.c.l.b16 %v6006
      %v6149 = vunpack.c.l.b16 %v6009
      %v6150 = vunpack.c.l.b16 %v6012
      %v6151 = vunpack.c.l.b16 %v6015
      %v6152 = vunpack.c.l.b16 %v6018
      %v6153 = vunpack.c.l.b16 %v6021
      %v6154 = vunpack.c.l.b16 %v6024
      %v6155 = vunpack.c.l.b16 %v6027
      %v6156 = vunpack.c.l.b16 %v6030
      %v6157 = vunpack.c.l.b16 %v6033
      %v6158 = vunpack.c.l.b16 %v6036
      %v6159 = vunpack.c.l.b16 %v6039
      %v6160 = vunpack.c.l.b16 %v6042
      %v6161 = vunpack.c.l.b16 %v6045
      %v6162 = vunpack.c.l.b16 %v6048
      %v6163 = vunpack.c.l.b16 %v6051
      %v6164 = vpack.c.b16 %v6148, %v6148
      %v6165 = vpack.c.b16 %v6149, %v6149
      %v6166 = vpack.c.b16 %v6150, %v6150
      %v6167 = vpack.c.b16 %v6151, %v6151
      %v6168 = vpack.c.b16 %v6152, %v6152
      %v6169 = vpack.c.b16 %v6153, %v6153
      %v6170 = vpack.c.b16 %v6154, %v6154
      %v6171 = vpack.c.b16 %v6155, %v6155
      %v6172 = vpack.c.b16 %v6156, %v6156
      %v6173 = vpack.c.b16 %v6157, %v6157
      %v6174 = vpack.c.b16 %v6158, %v6158
      %v6175 = vpack.c.b16 %v6159, %v6159
      %v6176 = vpack.c.b16 %v6160, %v6160
      %v6177 = vpack.c.b16 %v6161, %v6161
      %v6178 = vpack.c.b16 %v6162, %v6162
      %v6179 = vpack.c.b16 %v6163, %v6163
      %v6181 = vshrl.u32 %v6116, 16
      %v6183 = vshll.u32 %v6116, 16
      %v6185 = vrot.slane %v6183, 1
      %v6186 = vor.u32 %v6181, %v6185
      %v6188 = vshll.u32 %v6164, 16
      %v6190 = vrot.slane %v6188, 1
      %v6191 = vsel %vm1304, %v6186, %v6190
      %v6193 = vshrl.u32 %v6117, 16
      %v6195 = vshll.u32 %v6117, 16
      %v6197 = vrot.slane %v6195, 1
      %v6198 = vor.u32 %v6193, %v6197
      %v6200 = vshll.u32 %v6165, 16
      %v6202 = vrot.slane %v6200, 1
      %v6203 = vsel %vm1304, %v6198, %v6202
      %v6205 = vshrl.u32 %v6118, 16
      %v6207 = vshll.u32 %v6118, 16
      %v6209 = vrot.slane %v6207, 1
      %v6210 = vor.u32 %v6205, %v6209
      %v6212 = vshll.u32 %v6166, 16
      %v6214 = vrot.slane %v6212, 1
      %v6215 = vsel %vm1304, %v6210, %v6214
      %v6217 = vshrl.u32 %v6119, 16
      %v6219 = vshll.u32 %v6119, 16
      %v6221 = vrot.slane %v6219, 1
      %v6222 = vor.u32 %v6217, %v6221
      %v6224 = vshll.u32 %v6167, 16
      %v6226 = vrot.slane %v6224, 1
      %v6227 = vsel %vm1304, %v6222, %v6226
      %v6229 = vshrl.u32 %v6120, 16
      %v6231 = vshll.u32 %v6120, 16
      %v6233 = vrot.slane %v6231, 1
      %v6234 = vor.u32 %v6229, %v6233
      %v6236 = vshll.u32 %v6168, 16
      %v6238 = vrot.slane %v6236, 1
      %v6239 = vsel %vm1304, %v6234, %v6238
      %v6241 = vshrl.u32 %v6121, 16
      %v6243 = vshll.u32 %v6121, 16
      %v6245 = vrot.slane %v6243, 1
      %v6246 = vor.u32 %v6241, %v6245
      %v6248 = vshll.u32 %v6169, 16
      %v6250 = vrot.slane %v6248, 1
      %v6251 = vsel %vm1304, %v6246, %v6250
      %v6253 = vshrl.u32 %v6122, 16
      %v6255 = vshll.u32 %v6122, 16
      %v6257 = vrot.slane %v6255, 1
      %v6258 = vor.u32 %v6253, %v6257
      %v6260 = vshll.u32 %v6170, 16
      %v6262 = vrot.slane %v6260, 1
      %v6263 = vsel %vm1304, %v6258, %v6262
      %v6265 = vshrl.u32 %v6123, 16
      %v6267 = vshll.u32 %v6123, 16
      %v6269 = vrot.slane %v6267, 1
      %v6270 = vor.u32 %v6265, %v6269
      %v6272 = vshll.u32 %v6171, 16
      %v6274 = vrot.slane %v6272, 1
      %v6275 = vsel %vm1304, %v6270, %v6274
      %v6277 = vshrl.u32 %v6124, 16
      %v6279 = vshll.u32 %v6124, 16
      %v6281 = vrot.slane %v6279, 1
      %v6282 = vor.u32 %v6277, %v6281
      %v6284 = vshll.u32 %v6172, 16
      %v6286 = vrot.slane %v6284, 1
      %v6287 = vsel %vm1304, %v6282, %v6286
      %v6289 = vshrl.u32 %v6125, 16
      %v6291 = vshll.u32 %v6125, 16
      %v6293 = vrot.slane %v6291, 1
      %v6294 = vor.u32 %v6289, %v6293
      %v6296 = vshll.u32 %v6173, 16
      %v6298 = vrot.slane %v6296, 1
      %v6299 = vsel %vm1304, %v6294, %v6298
      %v6301 = vshrl.u32 %v6126, 16
      %v6303 = vshll.u32 %v6126, 16
      %v6305 = vrot.slane %v6303, 1
      %v6306 = vor.u32 %v6301, %v6305
      %v6308 = vshll.u32 %v6174, 16
      %v6310 = vrot.slane %v6308, 1
      %v6311 = vsel %vm1304, %v6306, %v6310
      %v6313 = vshrl.u32 %v6127, 16
      %v6315 = vshll.u32 %v6127, 16
      %v6317 = vrot.slane %v6315, 1
      %v6318 = vor.u32 %v6313, %v6317
      %v6320 = vshll.u32 %v6175, 16
      %v6322 = vrot.slane %v6320, 1
      %v6323 = vsel %vm1304, %v6318, %v6322
      %v6325 = vshrl.u32 %v6128, 16
      %v6327 = vshll.u32 %v6128, 16
      %v6329 = vrot.slane %v6327, 1
      %v6330 = vor.u32 %v6325, %v6329
      %v6332 = vshll.u32 %v6176, 16
      %v6334 = vrot.slane %v6332, 1
      %v6335 = vsel %vm1304, %v6330, %v6334
      %v6337 = vshrl.u32 %v6129, 16
      %v6339 = vshll.u32 %v6129, 16
      %v6341 = vrot.slane %v6339, 1
      %v6342 = vor.u32 %v6337, %v6341
      %v6344 = vshll.u32 %v6177, 16
      %v6346 = vrot.slane %v6344, 1
      %v6347 = vsel %vm1304, %v6342, %v6346
      %v6349 = vshrl.u32 %v6130, 16
      %v6351 = vshll.u32 %v6130, 16
      %v6353 = vrot.slane %v6351, 1
      %v6354 = vor.u32 %v6349, %v6353
      %v6356 = vshll.u32 %v6178, 16
      %v6358 = vrot.slane %v6356, 1
      %v6359 = vsel %vm1304, %v6354, %v6358
      %v6361 = vshrl.u32 %v6131, 16
      %v6363 = vshll.u32 %v6131, 16
      %v6365 = vrot.slane %v6363, 1
      %v6366 = vor.u32 %v6361, %v6365
      %v6368 = vshll.u32 %v6179, 16
      %v6370 = vrot.slane %v6368, 1
      %v6371 = vsel %vm1304, %v6366, %v6370
      %6372 = vrot.lane.b32.xlu0 %v6191, 4
      %v6373 = vpop.permute.xlu0 %6372
      %6374 = vrot.lane.b32.xlu0 %v6203, 4
      %v6375 = vpop.permute.xlu0 %6374
      %6376 = vrot.lane.b32.xlu0 %v6215, 4
      %v6377 = vpop.permute.xlu0 %6376
      %6378 = vrot.lane.b32.xlu0 %v6227, 4
      %v6379 = vpop.permute.xlu0 %6378
      %6380 = vrot.lane.b32.xlu0 %v6239, 4
      %v6381 = vpop.permute.xlu0 %6380
      %6382 = vrot.lane.b32.xlu0 %v6251, 4
      %v6383 = vpop.permute.xlu0 %6382
      %6384 = vrot.lane.b32.xlu0 %v6263, 4
      %v6385 = vpop.permute.xlu0 %6384
      %6386 = vrot.lane.b32.xlu0 %v6275, 4
      %v6387 = vpop.permute.xlu0 %6386
      %6388 = vrot.lane.b32.xlu0 %v6287, 4
      %v6389 = vpop.permute.xlu0 %6388
      %6390 = vrot.lane.b32.xlu0 %v6299, 4
      %v6391 = vpop.permute.xlu0 %6390
      %6392 = vrot.lane.b32.xlu0 %v6311, 4
      %v6393 = vpop.permute.xlu0 %6392
      %6394 = vrot.lane.b32.xlu0 %v6323, 4
      %v6395 = vpop.permute.xlu0 %6394
      %6396 = vrot.lane.b32.xlu0 %v6335, 4
      %v6397 = vpop.permute.xlu0 %6396
      %6398 = vrot.lane.b32.xlu0 %v6347, 4
      %v6399 = vpop.permute.xlu0 %6398
      %6400 = vrot.lane.b32.xlu0 %v6359, 4
      %v6401 = vpop.permute.xlu0 %6400
      %6402 = vrot.lane.b32.xlu0 %v6371, 4
      %v6403 = vpop.permute.xlu0 %6402
      %v6404 = vrot.slane %v6116, 1
      %v6405 = vrot.slane %v6164, 1
      %v6406 = vsel %vm1529, %v6404, %v6405
      %v6407 = vrot.slane %v6117, 1
      %v6408 = vrot.slane %v6165, 1
      %v6409 = vsel %vm1529, %v6407, %v6408
      %v6410 = vrot.slane %v6118, 1
      %v6411 = vrot.slane %v6166, 1
      %v6412 = vsel %vm1529, %v6410, %v6411
      %v6413 = vrot.slane %v6119, 1
      %v6414 = vrot.slane %v6167, 1
      %v6415 = vsel %vm1529, %v6413, %v6414
      %v6416 = vrot.slane %v6120, 1
      %v6417 = vrot.slane %v6168, 1
      %v6418 = vsel %vm1529, %v6416, %v6417
      %v6419 = vrot.slane %v6121, 1
      %v6420 = vrot.slane %v6169, 1
      %v6421 = vsel %vm1529, %v6419, %v6420
      %v6422 = vrot.slane %v6122, 1
      %v6423 = vrot.slane %v6170, 1
      %v6424 = vsel %vm1529, %v6422, %v6423
      %v6425 = vrot.slane %v6123, 1
      %v6426 = vrot.slane %v6171, 1
      %v6427 = vsel %vm1529, %v6425, %v6426
      %v6428 = vrot.slane %v6124, 1
      %v6429 = vrot.slane %v6172, 1
      %v6430 = vsel %vm1529, %v6428, %v6429
      %v6431 = vrot.slane %v6125, 1
      %v6432 = vrot.slane %v6173, 1
      %v6433 = vsel %vm1529, %v6431, %v6432
      %v6434 = vrot.slane %v6126, 1
      %v6435 = vrot.slane %v6174, 1
      %v6436 = vsel %vm1529, %v6434, %v6435
      %v6437 = vrot.slane %v6127, 1
      %v6438 = vrot.slane %v6175, 1
      %v6439 = vsel %vm1529, %v6437, %v6438
      %v6440 = vrot.slane %v6128, 1
      %v6441 = vrot.slane %v6176, 1
      %v6442 = vsel %vm1529, %v6440, %v6441
      %v6443 = vrot.slane %v6129, 1
      %v6444 = vrot.slane %v6177, 1
      %v6445 = vsel %vm1529, %v6443, %v6444
      %v6446 = vrot.slane %v6130, 1
      %v6447 = vrot.slane %v6178, 1
      %v6448 = vsel %vm1529, %v6446, %v6447
      %v6449 = vrot.slane %v6131, 1
      %v6450 = vrot.slane %v6179, 1
      %v6451 = vsel %vm1529, %v6449, %v6450
      %6452 = vrot.lane.b32.xlu0 %v6406, 8
      %v6453 = vpop.permute.xlu0 %6452
      %6454 = vrot.lane.b32.xlu0 %v6409, 8
      %v6455 = vpop.permute.xlu0 %6454
      %6456 = vrot.lane.b32.xlu0 %v6412, 8
      %v6457 = vpop.permute.xlu0 %6456
      %6458 = vrot.lane.b32.xlu0 %v6415, 8
      %v6459 = vpop.permute.xlu0 %6458
      %6460 = vrot.lane.b32.xlu0 %v6418, 8
      %v6461 = vpop.permute.xlu0 %6460
      %6462 = vrot.lane.b32.xlu0 %v6421, 8
      %v6463 = vpop.permute.xlu0 %6462
      %6464 = vrot.lane.b32.xlu0 %v6424, 8
      %v6465 = vpop.permute.xlu0 %6464
      %6466 = vrot.lane.b32.xlu0 %v6427, 8
      %v6467 = vpop.permute.xlu0 %6466
      %6468 = vrot.lane.b32.xlu0 %v6430, 8
      %v6469 = vpop.permute.xlu0 %6468
      %6470 = vrot.lane.b32.xlu0 %v6433, 8
      %v6471 = vpop.permute.xlu0 %6470
      %6472 = vrot.lane.b32.xlu0 %v6436, 8
      %v6473 = vpop.permute.xlu0 %6472
      %6474 = vrot.lane.b32.xlu0 %v6439, 8
      %v6475 = vpop.permute.xlu0 %6474
      %6476 = vrot.lane.b32.xlu0 %v6442, 8
      %v6477 = vpop.permute.xlu0 %6476
      %6478 = vrot.lane.b32.xlu0 %v6445, 8
      %v6479 = vpop.permute.xlu0 %6478
      %6480 = vrot.lane.b32.xlu0 %v6448, 8
      %v6481 = vpop.permute.xlu0 %6480
      %6482 = vrot.lane.b32.xlu0 %v6451, 8
      %v6483 = vpop.permute.xlu0 %6482
      %v6485 = vsel %vm1610, %v6116, %v6373
      %v6487 = vsel %vm1610, %v6117, %v6375
      %v6489 = vsel %vm1610, %v6118, %v6377
      %v6491 = vsel %vm1610, %v6119, %v6379
      %v6493 = vsel %vm1610, %v6120, %v6381
      %v6495 = vsel %vm1610, %v6121, %v6383
      %v6497 = vsel %vm1610, %v6122, %v6385
      %v6499 = vsel %vm1610, %v6123, %v6387
      %v6501 = vsel %vm1610, %v6124, %v6389
      %v6503 = vsel %vm1610, %v6125, %v6391
      %v6505 = vsel %vm1610, %v6126, %v6393
      %v6507 = vsel %vm1610, %v6127, %v6395
      %v6509 = vsel %vm1610, %v6128, %v6397
      %v6511 = vsel %vm1610, %v6129, %v6399
      %v6513 = vsel %vm1610, %v6130, %v6401
      %v6515 = vsel %vm1610, %v6131, %v6403
      %v6517 = vsel %vm1643, %v6485, %v6453
      %v6519 = vsel %vm1643, %v6487, %v6455
      %v6521 = vsel %vm1643, %v6489, %v6457
      %v6523 = vsel %vm1643, %v6491, %v6459
      %v6525 = vsel %vm1643, %v6493, %v6461
      %v6527 = vsel %vm1643, %v6495, %v6463
      %v6529 = vsel %vm1643, %v6497, %v6465
      %v6531 = vsel %vm1643, %v6499, %v6467
      %v6533 = vsel %vm1643, %v6501, %v6469
      %v6535 = vsel %vm1643, %v6503, %v6471
      %v6537 = vsel %vm1643, %v6505, %v6473
      %v6539 = vsel %vm1643, %v6507, %v6475
      %v6541 = vsel %vm1643, %v6509, %v6477
      %v6543 = vsel %vm1643, %v6511, %v6479
      %v6545 = vsel %vm1643, %v6513, %v6481
      %v6547 = vsel %vm1643, %v6515, %v6483
      %s6548 = scalar_lea.vmem %s2, 16
      %v6549 = vld [vmem:[%s6548] sm:$0xf]
      %v6550 = vld [vmem:[%s6548 + $0x4] sm:$0x3]
      %v6553 = vunpack.c.l.b16 %v6549
      %v6554 = vunpack.c.l.b16 %v6550
      %v6555 = vpack.c.b16 %v6554, %v6553
      %v6556 = vsel %vm2230, %v6517, 0
      %v6558 = vsel %vm2230, %v6519, 0
      %v6560 = vsel %vm2230, %v6521, 0
      %v6562 = vsel %vm2230, %v6523, 0
      %v6564 = vsel %vm2230, %v6525, 0
      %v6566 = vsel %vm2230, %v6527, 0
      %v6568 = vsel %vm2230, %v6529, 0
      %v6570 = vsel %vm2230, %v6531, 0
      %v6572 = vsel %vm2230, %v6533, 0
      %v6574 = vsel %vm2230, %v6535, 0
      %v6576 = vsel %vm2230, %v6537, 0
      %v6578 = vsel %vm2230, %v6539, 0
      %v6580 = vsel %vm2230, %v6541, 0
      %v6582 = vsel %vm2230, %v6543, 0
      %v6584 = vsel %vm2230, %v6545, 0
      %v6586 = vsel %vm2230, %v6547, 0
      %v6589 = vsel %vm2263, %v6555, 0
      %6591 = vmatprep.subr.bf16.mxu0 0
      %6592 = vmatpush1.bf16.msra.mxu0 0
      %6593 = vmatprep.subr.bf16.mxu0 0
      %6594 = vmatpush1.bf16.msra.mxu0 0
      %6595 = vmatprep.subr.bf16.mxu0 0
      %6596 = vmatpush1.bf16.msra.mxu0 0
      %6597 = vmatprep.subr.bf16.mxu0 0
      %6598 = vmatpush1.bf16.msra.mxu0 0
      %6599 = vmatprep.subr.bf16.mxu0 0
      %6600 = vmatpush1.bf16.msra.mxu0 0
      %6601 = vmatprep.subr.bf16.mxu0 0
      %6602 = vmatpush1.bf16.msra.mxu0 0
      %6603 = vmatprep.subr.bf16.mxu0 0
      %6604 = vmatpush1.bf16.msra.mxu0 0
      %6605 = vmatprep.subr.bf16.mxu0 0
      %6606 = vmatpush1.bf16.msra.mxu0 %v6589
      %6607 = vmatprep.subr.bf16.mxu0 0
      %6608 = vmatpush2.bf16.msra.mxu0 0
      %6609 = vmatprep.subr.bf16.mxu0 0
      %6610 = vmatpush2.bf16.msra.mxu0 0
      %6611 = vmatprep.subr.bf16.mxu0 0
      %6612 = vmatpush2.bf16.msra.mxu0 0
      %6613 = vmatprep.subr.bf16.mxu0 0
      %6614 = vmatpush2.bf16.msra.mxu0 0
      %6615 = vmatprep.subr.bf16.mxu0 0
      %6616 = vmatpush2.bf16.msra.mxu0 0
      %6617 = vmatprep.subr.bf16.mxu0 0
      %6618 = vmatpush2.bf16.msra.mxu0 0
      %6619 = vmatprep.subr.bf16.mxu0 0
      %6620 = vmatpush2.bf16.msra.mxu0 0
      %6621 = vmatprep.subr.bf16.mxu0 0
      %6622 = vmatpush2.bf16.msra.mxu0 0
      %6623 = vmatprep.mubr.bf16.mxu0 0
      %6624 = vmatmul.mubr.bf16.gmra.mxu0 %v6556
      %v6625 = vpop.f32.mrf.mxu0
      %v6626 = vadd.f32 0.0, %v6625
      %v6627 = vpop.f32.mrf.mxu0
      %v6628 = vpop.f32.mrf.mxu0
      %v6629 = vadd.f32 0.0, %v6628
      %v6630 = vpop.f32.mrf.mxu0
      %6631 = vmatprep.mubr.bf16.mxu0 0
      %6632 = vmatmul.mubr.bf16.gmra.mxu0 %v6558
      %v6633 = vpop.f32.mrf.mxu0
      %v6634 = vadd.f32 0.0, %v6633
      %v6635 = vpop.f32.mrf.mxu0
      %v6636 = vpop.f32.mrf.mxu0
      %v6637 = vadd.f32 0.0, %v6636
      %v6638 = vpop.f32.mrf.mxu0
      %6639 = vmatprep.mubr.bf16.mxu0 0
      %6640 = vmatmul.mubr.bf16.gmra.mxu0 %v6560
      %v6641 = vpop.f32.mrf.mxu0
      %v6642 = vadd.f32 0.0, %v6641
      %v6643 = vpop.f32.mrf.mxu0
      %v6644 = vpop.f32.mrf.mxu0
      %v6645 = vadd.f32 0.0, %v6644
      %v6646 = vpop.f32.mrf.mxu0
      %6647 = vmatprep.mubr.bf16.mxu0 0
      %6648 = vmatmul.mubr.bf16.gmra.mxu0 %v6562
      %v6649 = vpop.f32.mrf.mxu0
      %v6650 = vadd.f32 0.0, %v6649
      %v6651 = vpop.f32.mrf.mxu0
      %v6652 = vpop.f32.mrf.mxu0
      %v6653 = vadd.f32 0.0, %v6652
      %v6654 = vpop.f32.mrf.mxu0
      %6655 = vmatprep.mubr.bf16.mxu0 0
      %6656 = vmatmul.mubr.bf16.gmra.mxu0 %v6564
      %v6657 = vpop.f32.mrf.mxu0
      %v6658 = vadd.f32 0.0, %v6657
      %v6659 = vpop.f32.mrf.mxu0
      %v6660 = vpop.f32.mrf.mxu0
      %v6661 = vadd.f32 0.0, %v6660
      %v6662 = vpop.f32.mrf.mxu0
      %6663 = vmatprep.mubr.bf16.mxu0 0
      %6664 = vmatmul.mubr.bf16.gmra.mxu0 %v6566
      %v6665 = vpop.f32.mrf.mxu0
      %v6666 = vadd.f32 0.0, %v6665
      %v6667 = vpop.f32.mrf.mxu0
      %v6668 = vpop.f32.mrf.mxu0
      %v6669 = vadd.f32 0.0, %v6668
      %v6670 = vpop.f32.mrf.mxu0
      %6671 = vmatprep.mubr.bf16.mxu0 0
      %6672 = vmatmul.mubr.bf16.gmra.mxu0 %v6568
      %v6673 = vpop.f32.mrf.mxu0
      %v6674 = vadd.f32 0.0, %v6673
      %v6675 = vpop.f32.mrf.mxu0
      %v6676 = vpop.f32.mrf.mxu0
      %v6677 = vadd.f32 0.0, %v6676
      %v6678 = vpop.f32.mrf.mxu0
      %6679 = vmatprep.mubr.bf16.mxu0 0
      %6680 = vmatmul.mubr.bf16.gmra.mxu0 %v6570
      %v6681 = vpop.f32.mrf.mxu0
      %v6682 = vadd.f32 0.0, %v6681
      %v6683 = vpop.f32.mrf.mxu0
      %v6684 = vpop.f32.mrf.mxu0
      %v6685 = vadd.f32 0.0, %v6684
      %v6686 = vpop.f32.mrf.mxu0
      %6687 = vmatprep.mubr.bf16.mxu0 0
      %6688 = vmatmul.mubr.bf16.gmra.mxu0 %v6572
      %v6689 = vpop.f32.mrf.mxu0
      %v6690 = vadd.f32 0.0, %v6689
      %v6691 = vpop.f32.mrf.mxu0
      %v6692 = vpop.f32.mrf.mxu0
      %v6693 = vadd.f32 0.0, %v6692
      %v6694 = vpop.f32.mrf.mxu0
      %6695 = vmatprep.mubr.bf16.mxu0 0
      %6696 = vmatmul.mubr.bf16.gmra.mxu0 %v6574
      %v6697 = vpop.f32.mrf.mxu0
      %v6698 = vadd.f32 0.0, %v6697
      %v6699 = vpop.f32.mrf.mxu0
      %v6700 = vpop.f32.mrf.mxu0
      %v6701 = vadd.f32 0.0, %v6700
      %v6702 = vpop.f32.mrf.mxu0
      %6703 = vmatprep.mubr.bf16.mxu0 0
      %6704 = vmatmul.mubr.bf16.gmra.mxu0 %v6576
      %v6705 = vpop.f32.mrf.mxu0
      %v6706 = vadd.f32 0.0, %v6705
      %v6707 = vpop.f32.mrf.mxu0
      %v6708 = vpop.f32.mrf.mxu0
      %v6709 = vadd.f32 0.0, %v6708
      %v6710 = vpop.f32.mrf.mxu0
      %6711 = vmatprep.mubr.bf16.mxu0 0
      %6712 = vmatmul.mubr.bf16.gmra.mxu0 %v6578
      %v6713 = vpop.f32.mrf.mxu0
      %v6714 = vadd.f32 0.0, %v6713
      %v6715 = vpop.f32.mrf.mxu0
      %v6716 = vpop.f32.mrf.mxu0
      %v6717 = vadd.f32 0.0, %v6716
      %v6718 = vpop.f32.mrf.mxu0
      %6719 = vmatprep.mubr.bf16.mxu0 0
      %6720 = vmatmul.mubr.bf16.gmra.mxu0 %v6580
      %v6721 = vpop.f32.mrf.mxu0
      %v6722 = vadd.f32 0.0, %v6721
      %v6723 = vpop.f32.mrf.mxu0
      %v6724 = vpop.f32.mrf.mxu0
      %v6725 = vadd.f32 0.0, %v6724
      %v6726 = vpop.f32.mrf.mxu0
      %6727 = vmatprep.mubr.bf16.mxu0 0
      %6728 = vmatmul.mubr.bf16.gmra.mxu0 %v6582
      %v6729 = vpop.f32.mrf.mxu0
      %v6730 = vadd.f32 0.0, %v6729
      %v6731 = vpop.f32.mrf.mxu0
      %v6732 = vpop.f32.mrf.mxu0
      %v6733 = vadd.f32 0.0, %v6732
      %v6734 = vpop.f32.mrf.mxu0
      %6735 = vmatprep.mubr.bf16.mxu0 0
      %6736 = vmatmul.mubr.bf16.gmra.mxu0 %v6584
      %v6737 = vpop.f32.mrf.mxu0
      %v6738 = vadd.f32 0.0, %v6737
      %v6739 = vpop.f32.mrf.mxu0
      %v6740 = vpop.f32.mrf.mxu0
      %v6741 = vadd.f32 0.0, %v6740
      %v6742 = vpop.f32.mrf.mxu0
      %6743 = vmatprep.mubr.bf16.mxu0 0
      %6744 = vmatmul.mubr.bf16.gmra.mxu0 %v6586
      %v6745 = vpop.f32.mrf.mxu0
      %v6746 = vadd.f32 0.0, %v6745
      %v6747 = vpop.f32.mrf.mxu0
      %v6748 = vpop.f32.mrf.mxu0
      %v6749 = vadd.f32 0.0, %v6748
      %v6750 = vpop.f32.mrf.mxu0
      %6751 = vdwg.mxu0
      %v6752 = vadd.f32 %v5878, %v6626
      %v6753 = vadd.f32 %v5881, %v6629
      %v6754 = vadd.f32 %v5886, %v6634
      %v6755 = vadd.f32 %v5889, %v6637
      %v6756 = vadd.f32 %v5894, %v6642
      %v6757 = vadd.f32 %v5897, %v6645
      %v6758 = vadd.f32 %v5902, %v6650
      %v6759 = vadd.f32 %v5905, %v6653
      %v6760 = vadd.f32 %v5910, %v6658
      %v6761 = vadd.f32 %v5913, %v6661
      %v6762 = vadd.f32 %v5918, %v6666
      %v6763 = vadd.f32 %v5921, %v6669
      %v6764 = vadd.f32 %v5926, %v6674
      %v6765 = vadd.f32 %v5929, %v6677
      %v6766 = vadd.f32 %v5934, %v6682
      %v6767 = vadd.f32 %v5937, %v6685
      %v6768 = vadd.f32 %v5942, %v6690
      %v6769 = vadd.f32 %v5945, %v6693
      %v6770 = vadd.f32 %v5950, %v6698
      %v6771 = vadd.f32 %v5953, %v6701
      %v6772 = vadd.f32 %v5958, %v6706
      %v6773 = vadd.f32 %v5961, %v6709
      %v6774 = vadd.f32 %v5966, %v6714
      %v6775 = vadd.f32 %v5969, %v6717
      %v6776 = vadd.f32 %v5974, %v6722
      %v6777 = vadd.f32 %v5977, %v6725
      %v6778 = vadd.f32 %v5982, %v6730
      %v6779 = vadd.f32 %v5985, %v6733
      %v6780 = vadd.f32 %v5990, %v6738
      %v6781 = vadd.f32 %v5993, %v6741
      %v6782 = vadd.f32 %v5998, %v6746
      %v6783 = vadd.f32 %v6001, %v6749
      %v6784 = vsel %vm1610, %v6752, 0.0
      %v6785 = vsel %vm1610, %v6753, 0.0
      %v6786 = vadd.f32 %v6784, %v6785
      %v6787 = vsel %vm1610, %v6754, 0.0
      %v6788 = vadd.f32 %v6786, %v6787
      %v6789 = vsel %vm1610, %v6755, 0.0
      %v6790 = vadd.f32 %v6788, %v6789
      %v6791 = vsel %vm1610, %v6756, 0.0
      %v6792 = vadd.f32 %v6790, %v6791
      %v6793 = vsel %vm1610, %v6757, 0.0
      %v6794 = vadd.f32 %v6792, %v6793
      %v6795 = vsel %vm1610, %v6758, 0.0
      %v6796 = vadd.f32 %v6794, %v6795
      %v6797 = vsel %vm1610, %v6759, 0.0
      %v6798 = vadd.f32 %v6796, %v6797
      %v6799 = vsel %vm1610, %v6760, 0.0
      %v6800 = vadd.f32 %v6798, %v6799
      %v6801 = vsel %vm1610, %v6761, 0.0
      %v6802 = vadd.f32 %v6800, %v6801
      %v6803 = vsel %vm1610, %v6762, 0.0
      %v6804 = vadd.f32 %v6802, %v6803
      %v6805 = vsel %vm1610, %v6763, 0.0
      %v6806 = vadd.f32 %v6804, %v6805
      %v6807 = vsel %vm1610, %v6764, 0.0
      %v6808 = vadd.f32 %v6806, %v6807
      %v6809 = vsel %vm1610, %v6765, 0.0
      %v6810 = vadd.f32 %v6808, %v6809
      %v6811 = vsel %vm1610, %v6766, 0.0
      %v6812 = vadd.f32 %v6810, %v6811
      %v6813 = vsel %vm1610, %v6767, 0.0
      %v6814 = vadd.f32 %v6812, %v6813
      %v6815 = vsel %vm1610, %v6768, 0.0
      %v6816 = vadd.f32 %v6814, %v6815
      %v6817 = vsel %vm1610, %v6769, 0.0
      %v6818 = vadd.f32 %v6816, %v6817
      %v6819 = vsel %vm1610, %v6770, 0.0
      %v6820 = vadd.f32 %v6818, %v6819
      %v6821 = vsel %vm1610, %v6771, 0.0
      %v6822 = vadd.f32 %v6820, %v6821
      %v6823 = vsel %vm1610, %v6772, 0.0
      %v6824 = vadd.f32 %v6822, %v6823
      %v6825 = vsel %vm1610, %v6773, 0.0
      %v6826 = vadd.f32 %v6824, %v6825
      %v6827 = vsel %vm1610, %v6774, 0.0
      %v6828 = vadd.f32 %v6826, %v6827
      %v6829 = vsel %vm1610, %v6775, 0.0
      %v6830 = vadd.f32 %v6828, %v6829
      %v6831 = vsel %vm1610, %v6776, 0.0
      %v6832 = vadd.f32 %v6830, %v6831
      %v6833 = vsel %vm1610, %v6777, 0.0
      %v6834 = vadd.f32 %v6832, %v6833
      %v6835 = vsel %vm1610, %v6778, 0.0
      %v6836 = vadd.f32 %v6834, %v6835
      %v6837 = vsel %vm1610, %v6779, 0.0
      %v6838 = vadd.f32 %v6836, %v6837
      %v6839 = vsel %vm1610, %v6780, 0.0
      %v6840 = vadd.f32 %v6838, %v6839
      %v6841 = vsel %vm1610, %v6781, 0.0
      %v6842 = vadd.f32 %v6840, %v6841
      %v6843 = vsel %vm1610, %v6782, 0.0
      %v6844 = vadd.f32 %v6842, %v6843
      %v6845 = vsel %vm1610, %v6783, 0.0
      %v6846 = vadd.f32 %v6844, %v6845
      %v6847 = vrot.slane %v6846, 4
      %v6848 = vadd.f32 %v6846, %v6847
      %v6849 = vrot.slane %v6848, 2
      %v6850 = vadd.f32 %v6848, %v6849
      %v6851 = vrot.slane %v6850, 1
      %v6852 = vadd.f32 %v6850, %v6851
      %v6853 = vmul.f32 %v6852, 0.00390625
      %v6854 = vsub.f32 %v6752, %v6853
      %v6855 = vsub.f32 %v6753, %v6853
      %v6856 = vsub.f32 %v6754, %v6853
      %v6857 = vsub.f32 %v6755, %v6853
      %v6858 = vsub.f32 %v6756, %v6853
      %v6859 = vsub.f32 %v6757, %v6853
      %v6860 = vsub.f32 %v6758, %v6853
      %v6861 = vsub.f32 %v6759, %v6853
      %v6862 = vsub.f32 %v6760, %v6853
      %v6863 = vsub.f32 %v6761, %v6853
      %v6864 = vsub.f32 %v6762, %v6853
      %v6865 = vsub.f32 %v6763, %v6853
      %v6866 = vsub.f32 %v6764, %v6853
      %v6867 = vsub.f32 %v6765, %v6853
      %v6868 = vsub.f32 %v6766, %v6853
      %v6869 = vsub.f32 %v6767, %v6853
      %v6870 = vsub.f32 %v6768, %v6853
      %v6871 = vsub.f32 %v6769, %v6853
      %v6872 = vsub.f32 %v6770, %v6853
      %v6873 = vsub.f32 %v6771, %v6853
      %v6874 = vsub.f32 %v6772, %v6853
      %v6875 = vsub.f32 %v6773, %v6853
      %v6876 = vsub.f32 %v6774, %v6853
      %v6877 = vsub.f32 %v6775, %v6853
      %v6878 = vsub.f32 %v6776, %v6853
      %v6879 = vsub.f32 %v6777, %v6853
      %v6880 = vsub.f32 %v6778, %v6853
      %v6881 = vsub.f32 %v6779, %v6853
      %v6882 = vsub.f32 %v6780, %v6853
      %v6883 = vsub.f32 %v6781, %v6853
      %v6884 = vsub.f32 %v6782, %v6853
      %v6885 = vsub.f32 %v6783, %v6853
      %v6886 = vmul.f32 %v6854, %v6854
      %v6887 = vmul.f32 %v6855, %v6855
      %v6888 = vmul.f32 %v6856, %v6856
      %v6889 = vmul.f32 %v6857, %v6857
      %v6890 = vmul.f32 %v6858, %v6858
      %v6891 = vmul.f32 %v6859, %v6859
      %v6892 = vmul.f32 %v6860, %v6860
      %v6893 = vmul.f32 %v6861, %v6861
      %v6894 = vmul.f32 %v6862, %v6862
      %v6895 = vmul.f32 %v6863, %v6863
      %v6896 = vmul.f32 %v6864, %v6864
      %v6897 = vmul.f32 %v6865, %v6865
      %v6898 = vmul.f32 %v6866, %v6866
      %v6899 = vmul.f32 %v6867, %v6867
      %v6900 = vmul.f32 %v6868, %v6868
      %v6901 = vmul.f32 %v6869, %v6869
      %v6902 = vmul.f32 %v6870, %v6870
      %v6903 = vmul.f32 %v6871, %v6871
      %v6904 = vmul.f32 %v6872, %v6872
      %v6905 = vmul.f32 %v6873, %v6873
      %v6906 = vmul.f32 %v6874, %v6874
      %v6907 = vmul.f32 %v6875, %v6875
      %v6908 = vmul.f32 %v6876, %v6876
      %v6909 = vmul.f32 %v6877, %v6877
      %v6910 = vmul.f32 %v6878, %v6878
      %v6911 = vmul.f32 %v6879, %v6879
      %v6912 = vmul.f32 %v6880, %v6880
      %v6913 = vmul.f32 %v6881, %v6881
      %v6914 = vmul.f32 %v6882, %v6882
      %v6915 = vmul.f32 %v6883, %v6883
      %v6916 = vmul.f32 %v6884, %v6884
      %v6917 = vmul.f32 %v6885, %v6885
      %v6918 = vsel %vm1610, %v6886, 0.0
      %v6919 = vsel %vm1610, %v6887, 0.0
      %v6920 = vadd.f32 %v6918, %v6919
      %v6921 = vsel %vm1610, %v6888, 0.0
      %v6922 = vadd.f32 %v6920, %v6921
      %v6923 = vsel %vm1610, %v6889, 0.0
      %v6924 = vadd.f32 %v6922, %v6923
      %v6925 = vsel %vm1610, %v6890, 0.0
      %v6926 = vadd.f32 %v6924, %v6925
      %v6927 = vsel %vm1610, %v6891, 0.0
      %v6928 = vadd.f32 %v6926, %v6927
      %v6929 = vsel %vm1610, %v6892, 0.0
      %v6930 = vadd.f32 %v6928, %v6929
      %v6931 = vsel %vm1610, %v6893, 0.0
      %v6932 = vadd.f32 %v6930, %v6931
      %v6933 = vsel %vm1610, %v6894, 0.0
      %v6934 = vadd.f32 %v6932, %v6933
      %v6935 = vsel %vm1610, %v6895, 0.0
      %v6936 = vadd.f32 %v6934, %v6935
      %v6937 = vsel %vm1610, %v6896, 0.0
      %v6938 = vadd.f32 %v6936, %v6937
      %v6939 = vsel %vm1610, %v6897, 0.0
      %v6940 = vadd.f32 %v6938, %v6939
      %v6941 = vsel %vm1610, %v6898, 0.0
      %v6942 = vadd.f32 %v6940, %v6941
      %v6943 = vsel %vm1610, %v6899, 0.0
      %v6944 = vadd.f32 %v6942, %v6943
      %v6945 = vsel %vm1610, %v6900, 0.0
      %v6946 = vadd.f32 %v6944, %v6945
      %v6947 = vsel %vm1610, %v6901, 0.0
      %v6948 = vadd.f32 %v6946, %v6947
      %v6949 = vsel %vm1610, %v6902, 0.0
      %v6950 = vadd.f32 %v6948, %v6949
      %v6951 = vsel %vm1610, %v6903, 0.0
      %v6952 = vadd.f32 %v6950, %v6951
      %v6953 = vsel %vm1610, %v6904, 0.0
      %v6954 = vadd.f32 %v6952, %v6953
      %v6955 = vsel %vm1610, %v6905, 0.0
      %v6956 = vadd.f32 %v6954, %v6955
      %v6957 = vsel %vm1610, %v6906, 0.0
      %v6958 = vadd.f32 %v6956, %v6957
      %v6959 = vsel %vm1610, %v6907, 0.0
      %v6960 = vadd.f32 %v6958, %v6959
      %v6961 = vsel %vm1610, %v6908, 0.0
      %v6962 = vadd.f32 %v6960, %v6961
      %v6963 = vsel %vm1610, %v6909, 0.0
      %v6964 = vadd.f32 %v6962, %v6963
      %v6965 = vsel %vm1610, %v6910, 0.0
      %v6966 = vadd.f32 %v6964, %v6965
      %v6967 = vsel %vm1610, %v6911, 0.0
      %v6968 = vadd.f32 %v6966, %v6967
      %v6969 = vsel %vm1610, %v6912, 0.0
      %v6970 = vadd.f32 %v6968, %v6969
      %v6971 = vsel %vm1610, %v6913, 0.0
      %v6972 = vadd.f32 %v6970, %v6971
      %v6973 = vsel %vm1610, %v6914, 0.0
      %v6974 = vadd.f32 %v6972, %v6973
      %v6975 = vsel %vm1610, %v6915, 0.0
      %v6976 = vadd.f32 %v6974, %v6975
      %v6977 = vsel %vm1610, %v6916, 0.0
      %v6978 = vadd.f32 %v6976, %v6977
      %v6979 = vsel %vm1610, %v6917, 0.0
      %v6980 = vadd.f32 %v6978, %v6979
      %v6981 = vrot.slane %v6980, 4
      %v6982 = vadd.f32 %v6980, %v6981
      %v6983 = vrot.slane %v6982, 2
      %v6984 = vadd.f32 %v6982, %v6983
      %v6985 = vrot.slane %v6984, 1
      %v6986 = vadd.f32 %v6984, %v6985
      %v6987 = vmul.f32 %v6986, 0.00390625
      %v6988 = vadd.f32 %v6987, 1e-05
      %v6989 = vrsqrt.pop %v6988
      %v6990 = vmul.f32 %v6854, %v6989
      %v6991 = vmul.f32 %v6855, %v6989
      %v6992 = vmul.f32 %v6856, %v6989
      %v6993 = vmul.f32 %v6857, %v6989
      %v6994 = vmul.f32 %v6858, %v6989
      %v6995 = vmul.f32 %v6859, %v6989
      %v6996 = vmul.f32 %v6860, %v6989
      %v6997 = vmul.f32 %v6861, %v6989
      %v6998 = vmul.f32 %v6862, %v6989
      %v6999 = vmul.f32 %v6863, %v6989
      %v7000 = vmul.f32 %v6864, %v6989
      %v7001 = vmul.f32 %v6865, %v6989
      %v7002 = vmul.f32 %v6866, %v6989
      %v7003 = vmul.f32 %v6867, %v6989
      %v7004 = vmul.f32 %v6868, %v6989
      %v7005 = vmul.f32 %v6869, %v6989
      %v7006 = vmul.f32 %v6870, %v6989
      %v7007 = vmul.f32 %v6871, %v6989
      %v7008 = vmul.f32 %v6872, %v6989
      %v7009 = vmul.f32 %v6873, %v6989
      %v7010 = vmul.f32 %v6874, %v6989
      %v7011 = vmul.f32 %v6875, %v6989
      %v7012 = vmul.f32 %v6876, %v6989
      %v7013 = vmul.f32 %v6877, %v6989
      %v7014 = vmul.f32 %v6878, %v6989
      %v7015 = vmul.f32 %v6879, %v6989
      %v7016 = vmul.f32 %v6880, %v6989
      %v7017 = vmul.f32 %v6881, %v6989
      %v7018 = vmul.f32 %v6882, %v6989
      %v7019 = vmul.f32 %v6883, %v6989
      %v7020 = vmul.f32 %v6884, %v6989
      %v7021 = vmul.f32 %v6885, %v6989
      %v7022 = vadd.f32 %v254, %v6990
      %v7023 = vadd.f32 %v255, %v6991
      %v7024 = vadd.f32 %v256, %v6992
      %v7025 = vadd.f32 %v257, %v6993
      %v7026 = vadd.f32 %v258, %v6994
      %v7027 = vadd.f32 %v259, %v6995
      %v7028 = vadd.f32 %v260, %v6996
      %v7029 = vadd.f32 %v261, %v6997
      %v7030 = vadd.f32 %v262, %v6998
      %v7031 = vadd.f32 %v263, %v6999
      %v7032 = vadd.f32 %v264, %v7000
      %v7033 = vadd.f32 %v265, %v7001
      %v7034 = vadd.f32 %v266, %v7002
      %v7035 = vadd.f32 %v267, %v7003
      %v7036 = vadd.f32 %v268, %v7004
      %v7037 = vadd.f32 %v269, %v7005
      %v7038 = vadd.f32 %v270, %v7006
      %v7039 = vadd.f32 %v271, %v7007
      %v7040 = vadd.f32 %v272, %v7008
      %v7041 = vadd.f32 %v273, %v7009
      %v7042 = vadd.f32 %v274, %v7010
      %v7043 = vadd.f32 %v275, %v7011
      %v7044 = vadd.f32 %v276, %v7012
      %v7045 = vadd.f32 %v277, %v7013
      %v7046 = vadd.f32 %v278, %v7014
      %v7047 = vadd.f32 %v279, %v7015
      %v7048 = vadd.f32 %v280, %v7016
      %v7049 = vadd.f32 %v281, %v7017
      %v7050 = vadd.f32 %v282, %v7018
      %v7051 = vadd.f32 %v283, %v7019
      %v7052 = vadd.f32 %v284, %v7020
      %v7053 = vadd.f32 %v285, %v7021
      %v7054 = vld [vmem:[%s244] sm:$0x1]
      %v7056 = vlaneseq
      %v7057 = vshrl.u32 %v7056, 7
      %v7058 = vsub.s32 0, %v7057
      %v7059 = vrot.slane %v7054, %v7058
      %v7061 = vmul.f32 %v7022, %v7059
      %v7062 = vmul.f32 %v7023, %v7059
      %v7063 = vmul.f32 %v7024, %v7059
      %v7064 = vmul.f32 %v7025, %v7059
      %v7065 = vmul.f32 %v7026, %v7059
      %v7066 = vmul.f32 %v7027, %v7059
      %v7067 = vmul.f32 %v7028, %v7059
      %v7068 = vmul.f32 %v7029, %v7059
      %v7069 = vmul.f32 %v7030, %v7059
      %v7070 = vmul.f32 %v7031, %v7059
      %v7071 = vmul.f32 %v7032, %v7059
      %v7072 = vmul.f32 %v7033, %v7059
      %v7073 = vmul.f32 %v7034, %v7059
      %v7074 = vmul.f32 %v7035, %v7059
      %v7075 = vmul.f32 %v7036, %v7059
      %v7076 = vmul.f32 %v7037, %v7059
      %v7077 = vmul.f32 %v7038, %v7059
      %v7078 = vmul.f32 %v7039, %v7059
      %v7079 = vmul.f32 %v7040, %v7059
      %v7080 = vmul.f32 %v7041, %v7059
      %v7081 = vmul.f32 %v7042, %v7059
      %v7082 = vmul.f32 %v7043, %v7059
      %v7083 = vmul.f32 %v7044, %v7059
      %v7084 = vmul.f32 %v7045, %v7059
      %v7085 = vmul.f32 %v7046, %v7059
      %v7086 = vmul.f32 %v7047, %v7059
      %v7087 = vmul.f32 %v7048, %v7059
      %v7088 = vmul.f32 %v7049, %v7059
      %v7089 = vmul.f32 %v7050, %v7059
      %v7090 = vmul.f32 %v7051, %v7059
      %v7091 = vmul.f32 %v7052, %v7059
      %v7092 = vmul.f32 %v7053, %v7059
      %v7093 = vld [vmem:[%s247] sm:$0x1]
      %v7095 = vlaneseq
      %v7096 = vshrl.u32 %v7095, 7
      %v7097 = vsub.s32 0, %v7096
      %v7098 = vrot.slane %v7093, %v7097
      %v7100 = vadd.f32 %v7061, %v7098
      %v7101 = vadd.f32 %v7062, %v7098
      %v7102 = vadd.f32 %v7063, %v7098
      %v7103 = vadd.f32 %v7064, %v7098
      %v7104 = vadd.f32 %v7065, %v7098
      %v7105 = vadd.f32 %v7066, %v7098
      %v7106 = vadd.f32 %v7067, %v7098
      %v7107 = vadd.f32 %v7068, %v7098
      %v7108 = vadd.f32 %v7069, %v7098
      %v7109 = vadd.f32 %v7070, %v7098
      %v7110 = vadd.f32 %v7071, %v7098
      %v7111 = vadd.f32 %v7072, %v7098
      %v7112 = vadd.f32 %v7073, %v7098
      %v7113 = vadd.f32 %v7074, %v7098
      %v7114 = vadd.f32 %v7075, %v7098
      %v7115 = vadd.f32 %v7076, %v7098
      %v7116 = vadd.f32 %v7077, %v7098
      %v7117 = vadd.f32 %v7078, %v7098
      %v7118 = vadd.f32 %v7079, %v7098
      %v7119 = vadd.f32 %v7080, %v7098
      %v7120 = vadd.f32 %v7081, %v7098
      %v7121 = vadd.f32 %v7082, %v7098
      %v7122 = vadd.f32 %v7083, %v7098
      %v7123 = vadd.f32 %v7084, %v7098
      %v7124 = vadd.f32 %v7085, %v7098
      %v7125 = vadd.f32 %v7086, %v7098
      %v7126 = vadd.f32 %v7087, %v7098
      %v7127 = vadd.f32 %v7088, %v7098
      %v7128 = vadd.f32 %v7089, %v7098
      %v7129 = vadd.f32 %v7090, %v7098
      %v7130 = vadd.f32 %v7091, %v7098
      %v7131 = vadd.f32 %v7092, %v7098
      %7132 = vst.msk [vmem:[%s252] sm:$0xff] %vm1610, %v7100
      %7133 = vst.msk [vmem:[%s252 + $0x8] sm:$0xff] %vm1610, %v7101
      %7134 = vst.msk [vmem:[%s252 + $0x10] sm:$0xff] %vm1610, %v7102
      %7135 = vst.msk [vmem:[%s252 + $0x18] sm:$0xff] %vm1610, %v7103
      %7136 = vst.msk [vmem:[%s252 + $0x20] sm:$0xff] %vm1610, %v7104
      %7137 = vst.msk [vmem:[%s252 + $0x28] sm:$0xff] %vm1610, %v7105
      %7138 = vst.msk [vmem:[%s252 + $0x30] sm:$0xff] %vm1610, %v7106
      %7139 = vst.msk [vmem:[%s252 + $0x38] sm:$0xff] %vm1610, %v7107
      %7140 = vst.msk [vmem:[%s252 + $0x40] sm:$0xff] %vm1610, %v7108
      %7141 = vst.msk [vmem:[%s252 + $0x48] sm:$0xff] %vm1610, %v7109
      %7142 = vst.msk [vmem:[%s252 + $0x50] sm:$0xff] %vm1610, %v7110
      %7143 = vst.msk [vmem:[%s252 + $0x58] sm:$0xff] %vm1610, %v7111
      %7144 = vst.msk [vmem:[%s252 + $0x60] sm:$0xff] %vm1610, %v7112
      %7145 = vst.msk [vmem:[%s252 + $0x68] sm:$0xff] %vm1610, %v7113
      %7146 = vst.msk [vmem:[%s252 + $0x70] sm:$0xff] %vm1610, %v7114
      %7147 = vst.msk [vmem:[%s252 + $0x78] sm:$0xff] %vm1610, %v7115
      %7148 = vst.msk [vmem:[%s252 + $0x80] sm:$0xff] %vm1610, %v7116
      %7149 = vst.msk [vmem:[%s252 + $0x88] sm:$0xff] %vm1610, %v7117
      %7150 = vst.msk [vmem:[%s252 + $0x90] sm:$0xff] %vm1610, %v7118
      %7151 = vst.msk [vmem:[%s252 + $0x98] sm:$0xff] %vm1610, %v7119
      %7152 = vst.msk [vmem:[%s252 + $0xa0] sm:$0xff] %vm1610, %v7120
      %7153 = vst.msk [vmem:[%s252 + $0xa8] sm:$0xff] %vm1610, %v7121
      %7154 = vst.msk [vmem:[%s252 + $0xb0] sm:$0xff] %vm1610, %v7122
      %7155 = vst.msk [vmem:[%s252 + $0xb8] sm:$0xff] %vm1610, %v7123
      %7156 = vst.msk [vmem:[%s252 + $0xc0] sm:$0xff] %vm1610, %v7124
      %7157 = vst.msk [vmem:[%s252 + $0xc8] sm:$0xff] %vm1610, %v7125
      %7158 = vst.msk [vmem:[%s252 + $0xd0] sm:$0xff] %vm1610, %v7126
      %7159 = vst.msk [vmem:[%s252 + $0xd8] sm:$0xff] %vm1610, %v7127
      %7160 = vst.msk [vmem:[%s252 + $0xe0] sm:$0xff] %vm1610, %v7128
      %7161 = vst.msk [vmem:[%s252 + $0xe8] sm:$0xff] %vm1610, %v7129
      %7162 = vst.msk [vmem:[%s252 + $0xf0] sm:$0xff] %vm1610, %v7130
      %7163 = vst.msk [vmem:[%s252 + $0xf8] sm:$0xff] %vm1610, %v7131
      %p7164 = scmp.lt.s32.totalorder %s16, 1
      %s7165 = scalar_select %p7164, %s16, 1
      %s7166 = smul.addr %s7165, 32
      %s7167 = smul.addr %s7166, 8
      %s7168 = scalar_lea.vmem %s5, %s7167
      // Predicated region
      $region41: #{tpu_custom_call.1} parent=39 // pred_check
        %p7169 = pneg %p154
      $region42: #{tpu_custom_call.1} parent=39 // pred_check_branch
        %7171 = sbr.rel (%p7169) target = $region44
      $region43: #{tpu_custom_call.1} parent=39 // pred_region
        _
      $region44: #{tpu_custom_call.1} parent=39 // pred_fallthru
        _
    $region40: #{tpu_custom_call.1} parent=5 // pred_fallthru
      _
    %p7172 = scmp.le.s32.totalorder 2, %s11
    // Predicated region
    $region45: #{tpu_custom_call.1} parent=5 // pred_check
      %p7173 = pneg %p7172
    $region46: #{tpu_custom_call.1} parent=5 // pred_check_branch
      %7175 = sbr.rel (%p7173) target = $region48
    $region47: #{tpu_custom_call.1} parent=5 // pred_region
      %s7176 = ssub.s32 %s11, 2
      // Predicated region
      $region49: #{tpu_custom_call.1} parent=47 // pred_check
        %p7177 = pneg %p160
      $region50: #{tpu_custom_call.1} parent=47 // pred_check_branch
        %7179 = sbr.rel (%p7177) target = $region52
      $region51: #{tpu_custom_call.1} parent=47 // pred_region
        %p7180 = scmp.lt.s32.totalorder %s17, 1
        %s7181 = scalar_select %p7180, %s17, 1
        %s7182 = smul.addr %s7181, 32
        %s7183 = smul.addr %s7182, 8
        %s7184 = scalar_lea.vmem %s5, %s7183
      $region52: #{tpu_custom_call.1} parent=47 // pred_fallthru
        _
    $region48: #{tpu_custom_call.1} parent=5 // pred_fallthru
      _
  $region6: #{tpu_custom_call.1} parent=0 // loop_footer
    %s15 = sadd.s32 1, %s11
  $region7: #{tpu_custom_call.1} parent=0 // loop_footer_branch
    %10 = sbr.rel target = $region3
  $region8: #{tpu_custom_call.1} parent=0 // loop_exit
    _

</llo_original>
